<compile_context>
chip_gen: v7x
topology: tpu7x:2x2x1
jax: 0.10.0
libtpu: 0.0.40
codegen_flags: <defaults>
</compile_context>

<pallas_src>
import functools

import jax
import jax.numpy as jnp
from jax.experimental import pallas as pl
from jax.experimental.pallas import tpu as pltpu


_BN_EPS = 1e-5
_LANE = 128


def _round_up(x, m):
    return ((x + m - 1) // m) * m


def _cpad(c):
    return max(_LANE, _round_up(c, _LANE))


@functools.lru_cache(maxsize=None)
def _vmem_limit():
    """Generation-aware scoped-VMEM limit (~75% of physical per-core VMEM)."""
    try:
        cap = int(pltpu.get_tpu_info().vmem_capacity_bytes)
    except Exception:
        cap = 64 * 1024 * 1024  # safe on every generation (v7x has 64 MiB physical)
    return int(cap * 3 // 4)


def _choose_bk(k):
    if k <= 2048:
        return k
    for bk in (2048, 1024, 512, 256, 128):
        if k % bk == 0:
            return bk
    return k


def _choose_bn(n):
    if n <= 256:
        return n
    for bn in (256, 128):
        if n % bn == 0:
            return bn
    return n


def _choose_hw_tile(hw, cpad, ad_p, vmem_limit):
    # rough per-spatial-row VMEM budget: double-buffered bf16 in/out tiles
    # + f32 hidden activations / gated features while the kernel is in flight
    per_row = 2 * (4 * cpad * 2) + (2 * ad_p + 4 * cpad) * 4
    cap = max(8, (vmem_limit // 2) // per_row)
    for t in (2048, 1024, 512, 256, 128, 64, 32, 16, 8):
        if t <= cap and hw % t == 0:
            return t
    return hw


# ----------------------------------------------------------------------------
# Matmul kernel: out = act((x @ w) + shift [+ residual])   (BN scale folded into w)
# grid = (M tiles, N tiles, K tiles); f32 VMEM accumulator only when K has >1 step.
# ----------------------------------------------------------------------------

def _make_matmul_kernel(act, fuse_res, single_k):
    def kernel(*refs):
        if fuse_res:
            x_ref, w_ref, shift_ref, res_ref = refs[:4]
            rest = refs[4:]
        else:
            x_ref, w_ref, shift_ref = refs[:3]
            res_ref = None
            rest = refs[3:]
        o_ref = rest[0]

        def epilogue(acc):
            y = acc + shift_ref[...]
            if res_ref is not None:
                y = y + res_ref[...].astype(jnp.float32)   # fused residual add
            if act == "relu":
                y = jnp.maximum(y, 0.0)
            o_ref[...] = y.astype(o_ref.dtype)

        if single_k:
            # no accumulator scratch: dot result goes straight through the epilogue
            epilogue(jnp.dot(x_ref[...], w_ref[...],
                             preferred_element_type=jnp.float32))
        else:
            acc_ref = rest[1]
            kk = pl.program_id(2)

            @pl.when(kk == 0)
            def _():
                acc_ref[...] = jnp.zeros_like(acc_ref)

            acc_ref[...] += jnp.dot(x_ref[...], w_ref[...],
                                    preferred_element_type=jnp.float32)

            @pl.when(kk == pl.num_programs(2) - 1)
            def _():
                epilogue(acc_ref[...])
    return kernel


def matmul_shift_act(x, w, shift, act="none", residual=None, bm=512):
    """x: (M,K) bf16, w: (K,N) bf16, shift: (1,N) f32, residual: (M,N) bf16 -> (M,N) bf16."""
    M, K = x.shape
    N = w.shape[1]
    bm = min(bm, _round_up(M, 8))
    m_pad = _round_up(M, bm)
    if m_pad != M:
        x = jnp.pad(x, ((0, m_pad - M), (0, 0)))
        if residual is not None:
            residual = jnp.pad(residual, ((0, m_pad - M), (0, 0)))
    bk = _choose_bk(K)
    bn = _choose_bn(N)
    nk = K // bk
    single_k = nk == 1
    grid = (m_pad // bm, N // bn, nk)

    in_specs = [
        pl.BlockSpec((bm, bk), lambda i, j, kk: (i, kk)),
        pl.BlockSpec((bk, bn), lambda i, j, kk: (kk, j)),
        pl.BlockSpec((1, bn), lambda i, j, kk: (0, j)),
    ]
    args = [x, w, shift]
    if residual is not None:
        in_specs.append(pl.BlockSpec((bm, bn), lambda i, j, kk: (i, j)))
        args.append(residual)

    cost = pl.CostEstimate(
        flops=2 * m_pad * K * N,
        transcendentals=0,
        bytes_accessed=(m_pad * K * 2 + K * N * 2 + N * 4
                        + m_pad * N * 2 * (2 if residual is not None else 1)))

    out = pl.pallas_call(
        _make_matmul_kernel(act, residual is not None, single_k),
        out_shape=jax.ShapeDtypeStruct((m_pad, N), jnp.bfloat16),
        grid=grid,
        in_specs=in_specs,
        out_specs=pl.BlockSpec((bm, bn), lambda i, j, kk: (i, j)),
        scratch_shapes=[] if single_k else [pltpu.VMEM((bm, bn), jnp.float32)],
        compiler_params=pltpu.CompilerParams(
            dimension_semantics=("parallel", "parallel", "arbitrary"),
            vmem_limit_bytes=_vmem_limit()),
        cost_estimate=cost,
    )(*args)
    return out[:M] if m_pad != M else out


# ----------------------------------------------------------------------------
# Conv (1x1 / 3x3 pad=1) + folded eval-mode BN + activation [+ fused residual].
# Compact tap packing for 3x3; matmul runs in Pallas; activations are bf16.
# ----------------------------------------------------------------------------

def conv_bn_act(x_nhwc, weight_oihw, bias, bn, stride, act, residual=None):
    B, H, W, CstoreP = x_nhwc.shape            # stored, lane-padded channel width
    Cout, Cin, k, _ = weight_oihw.shape
    CoutP = _cpad(Cout)

    if bn is not None:
        gamma, beta, mean, var = bn
        scale = gamma * jax.lax.rsqrt(var + _BN_EPS)
        shift = beta - mean * scale
    else:
        scale = jnp.ones((Cout,), jnp.float32)
        shift = jnp.zeros((Cout,), jnp.float32)
    if bias is not None:
        shift = shift + bias * scale
    shift_p = jnp.pad(shift, (0, CoutP - Cout)).reshape(1, CoutP).astype(jnp.float32)

    # (kH, kW, Cin, Cout) with BN scale folded in; Cout padded lane-dense
    whwio = (jnp.transpose(weight_oihw, (2, 3, 1, 0)).astype(jnp.float32)
             * scale[None, None, None, :])
    whwio = jnp.pad(whwio, ((0, 0), (0, 0), (0, 0), (0, CoutP - Cout)))

    xb = x_nhwc.astype(jnp.bfloat16)
    if k == 1:
        # stored padded lanes are zero; pad weight rows to the stored width and reuse directly
        w2 = jnp.pad(whwio, ((0, 0), (0, 0), (0, CstoreP - Cin), (0, 0))
                     ).reshape(CstoreP, CoutP).astype(jnp.bfloat16)
        xs = xb[:, ::stride, ::stride, :]
        Ho, Wo = xs.shape[1], xs.shape[2]
        patches = xs.reshape(B * Ho * Wo, CstoreP)
    else:
        # compact tap packing: K = k*k*Cin padded to a lane multiple (not k*k*CinP)
        Kc = k * k * Cin
        KP = _round_up(max(Kc, _LANE), _LANE)
        w2 = jnp.pad(whwio.reshape(Kc, CoutP), ((0, KP - Kc), (0, 0))).astype(jnp.bfloat16)
        pad = 1
        xr = xb[..., :Cin]                      # real channels only (bf16)
        xp = jnp.pad(xr, ((0, 0), (pad, pad), (pad, pad), (0, 0)))
        Ho = (H + 2 * pad - k) // stride + 1
        Wo = (W + 2 * pad - k) // stride + 1
        cols = []
        for dy in range(k):
            for dx in range(k):
                cols.append(xp[:, dy:dy + (Ho - 1) * stride + 1:stride,
                               dx:dx + (Wo - 1) * stride + 1:stride, :])
        # TODO(synk): build the taps inside the kernel from a halo tile instead of
        # materialising the im2col expansion in HBM (kept compact + bf16 here).
        patches = jnp.concatenate(cols, axis=-1).reshape(B * Ho * Wo, Kc)
        patches = jnp.pad(patches, ((0, 0), (0, KP - Kc)))

    M = B * Ho * Wo
    res2 = residual.reshape(M, CoutP) if residual is not None else None
    y = matmul_shift_act(patches, w2, shift_p, act=act, residual=res2)
    return y.reshape(B, Ho, Wo, CoutP)


def residual_block(x_nhwc, p):
    stride = p["stride"]
    if p["shortcut"] is not None:
        sc = conv_bn_act(x_nhwc, p["shortcut"]["w"], None, p["shortcut"]["bn"],
                         stride, "none")
    else:
        sc = x_nhwc
    out = conv_bn_act(x_nhwc, p["conv1_w"], None, p["bn1"], stride, "relu")
    # second conv: BN + residual add + ReLU fused into the matmul epilogue
    out = conv_bn_act(out, p["conv2_w"], None, p["bn2"], 1, "relu", residual=sc)
    return out


# ----------------------------------------------------------------------------
# Cross-modal attention (spatial maps fused in, never stored to HBM).
# Pass A: per-(batch, hw-tile) compute maps + gating, reduce to channel descriptors.
# Pass B: tiny (B, B) softmax done in-kernel -> lane-dense (B, CPAD) channel weights.
# Pass C: recompute maps + gating per tile and rescale by the channel weights.
# ----------------------------------------------------------------------------

def _stable_sigmoid(z):
    ez = jnp.exp(-jnp.abs(z))                  # exp of a non-positive argument only
    return jnp.where(z >= 0, 1.0, ez) * pl.reciprocal(1.0 + ez, approx=True)


def _spatial_maps(c, br, w1c, s1c, w2c, b2c, w1b, s1b, w2b, b2b):
    # color map comes from brightness; brightness map comes from color (cross-modal)
    hc = jnp.maximum(jnp.dot(br, w1c, preferred_element_type=jnp.float32) + s1c, 0.0)
    zc = jnp.sum(hc * w2c, axis=-1, keepdims=True) + b2c
    cmap = _stable_sigmoid(zc)
    hb = jnp.maximum(jnp.dot(c, w1b, preferred_element_type=jnp.float32) + s1b, 0.0)
    zb = jnp.sum(hb * w2b, axis=-1, keepdims=True) + b2b
    bmap = _stable_sigmoid(zb)
    return cmap, bmap


def _make_desc_kernel(b2c, b2b):
    def kernel(color_ref, bright_ref, w1c_ref, s1c_ref, w2c_ref,
               w1b_ref, s1b_ref, w2b_ref, cd_ref, bd_ref):
        j = pl.program_id(1)
        c = color_ref[0]
        br = bright_ref[0]
        cmap, bmap = _spatial_maps(c, br,
                                   w1c_ref[...], s1c_ref[...], w2c_ref[...], b2c,
                                   w1b_ref[...], s1b_ref[...], w2b_ref[...], b2b)
        csa = c.astype(jnp.float32) * cmap
        bsa = br.astype(jnp.float32) * bmap

        @pl.when(j == 0)
        def _():
            cd_ref[...] = jnp.zeros_like(cd_ref)
            bd_ref[...] = jnp.zeros_like(bd_ref)

        cd_ref[...] += jnp.sum(csa, axis=0, keepdims=True)[None]
        bd_ref[...] += jnp.sum(bsa, axis=0, keepdims=True)[None]
    return kernel


def _make_chan_attn_kernel(inv_scale):
    def kernel(cd_ref, bd_ref, ca_ref, ba_ref):
        cd = cd_ref[...]                               # (B, CPAD) f32, padded lanes are 0
        bd = bd_ref[...]
        b, cpad = ca_ref.shape
        # "expansion" matrix: E[kd, j] = 1 if j == kd else 0  -> places the (B, B) softmax
        # into the lane-dense (B, CPAD) output with zero padded lanes.
        kd = jax.lax.broadcasted_iota(jnp.int32, (b, cpad), 0)
        jd = jax.lax.broadcasted_iota(jnp.int32, (b, cpad), 1)
        expand = (kd == jd).astype(jnp.float32)

        def attn(q, kmat):
            # q @ kmat.T via lane-dim contraction (no wrapper transpose/pad needed)
            logits = jax.lax.dot_general(
                q, kmat, (((1,), (1,)), ((), ())),
                preferred_element_type=jnp.float32) * inv_scale        # (B, B)
            m = jnp.max(logits, axis=-1, keepdims=True)
            e = jnp.exp(logits - m)
            s = jnp.sum(e, axis=-1, keepdims=True)
            p = e * pl.reciprocal(s, approx=True)
            return jnp.dot(p, expand, preferred_element_type=jnp.float32)

        ca_ref[...] = attn(cd, bd)
        ba_ref[...] = attn(bd, cd)
    return kernel


def _make_rescale_kernel(b2c, b2b):
    def kernel(color_ref, bright_ref, w1c_ref, s1c_ref, w2c_ref,
               w1b_ref, s1b_ref, w2b_ref, ca_ref, ba_ref, co_ref, bo_ref):
        c = color_ref[0]
        br = bright_ref[0]
        cmap, bmap = _spatial_maps(c, br,
                                   w1c_ref[...], s1c_ref[...], w2c_ref[...], b2c,
                                   w1b_ref[...], s1b_ref[...], w2b_ref[...], b2b)
        ca = ca_ref[0]                                  # (1, CPAD)
        ba = ba_ref[0]
        co_ref[...] = ((c.astype(jnp.float32) * cmap) * ca)[None].astype(co_ref.dtype)
        bo_ref[...] = ((br.astype(jnp.float32) * bmap) * ba)[None].astype(bo_ref.dtype)
    return kernel


def _prep_spatial(sp, cin_p, ad_p):
    w1, b1, bn1, w2, b2 = sp["w1"], sp["b1"], sp["bn1"], sp["w2"], sp["b2"]
    ad, cin = w1.shape[0], w1.shape[1]
    gamma, beta, mean, var = bn1
    scale = gamma * jax.lax.rsqrt(var + _BN_EPS)
    shift = beta - mean * scale + b1 * scale
    w1m = w1.reshape(ad, cin).T * scale[None, :]                       # (Cin, AD), BN folded
    w1m = jnp.pad(w1m, ((0, cin_p - cin), (0, ad_p - ad))).astype(jnp.bfloat16)
    s1 = jnp.pad(shift, (0, ad_p - ad)).reshape(1, ad_p).astype(jnp.float32)
    w2row = jnp.pad(w2.reshape(ad), (0, ad_p - ad)).reshape(1, ad_p).astype(jnp.float32)
    return w1m, s1, w2row, float(b2)


def cross_modal_attention(color, bright, att):
    B, Ho, Wo, CPAD = color.shape
    HW = Ho * Wo
    ad = att["color_spatial"]["w1"].shape[0]
    ad_p = _cpad(ad)

    w1c, s1c, w2c, b2c = _prep_spatial(att["color_spatial"], CPAD, ad_p)
    w1b, s1b, w2b, b2b = _prep_spatial(att["brightness_spatial"], CPAD, ad_p)

    vlimit = _vmem_limit()
    thw = _choose_hw_tile(HW, CPAD, ad_p, vlimit)
    nj = HW // thw
    c3 = color.reshape(B, HW, CPAD).astype(jnp.bfloat16)
    b3 = bright.reshape(B, HW, CPAD).astype(jnp.bfloat16)

    tile_spec = pl.BlockSpec((1, thw, CPAD), lambda b, j: (b, j, 0))
    w1_spec = pl.BlockSpec((CPAD, ad_p), lambda b, j: (0, 0))
    row_spec = pl.BlockSpec((1, ad_p), lambda b, j: (0, 0))
    desc_spec = pl.BlockSpec((1, 1, CPAD), lambda b, j: (b, 0, 0))

    # Pass A: channel descriptors (sum over spatial positions of the gated features)
    cd, bd = pl.pallas_call(
        _make_desc_kernel(b2c, b2b),
        out_shape=(jax.ShapeDtypeStruct((B, 1, CPAD), jnp.float32),
                   jax.ShapeDtypeStruct((B, 1, CPAD), jnp.float32)),
        grid=(B, nj),
        in_specs=[tile_spec, tile_spec, w1_spec, row_spec, row_spec,
                  w1_spec, row_spec, row_spec],
        out_specs=(desc_spec, desc_spec),
        compiler_params=pltpu.CompilerParams(
            dimension_semantics=("parallel", "arbitrary"),
            vmem_limit_bytes=vlimit),
    )(c3, b3, w1c, s1c, w2c, w1b, s1b, w2b)

    cd2 = cd.reshape(B, CPAD)
    bd2 = bd.reshape(B, CPAD)

    # mean over HW (both descriptors) and /temperature folded into one constant
    inv_scale = 1.0 / (float(HW) * float(HW) * float(att["temperature"]))
    vmem = pl.BlockSpec(memory_space=pltpu.MemorySpace.VMEM)
    ca, ba = pl.pallas_call(
        _make_chan_attn_kernel(inv_scale),
        out_shape=(jax.ShapeDtypeStruct((B, CPAD), jnp.float32),
                   jax.ShapeDtypeStruct((B, CPAD), jnp.float32)),
        in_specs=[vmem, vmem],
        out_specs=(vmem, vmem),
        compiler_params=pltpu.CompilerParams(vmem_limit_bytes=vlimit),
    )(cd2, bd2)

    ca3 = ca.reshape(B, 1, CPAD)
    ba3 = ba.reshape(B, 1, CPAD)

    # Pass C: recompute maps (cheaper than an extra HBM round-trip) and rescale
    co, bo = pl.pallas_call(
        _make_rescale_kernel(b2c, b2b),
        out_shape=(jax.ShapeDtypeStruct((B, HW, CPAD), jnp.bfloat16),
                   jax.ShapeDtypeStruct((B, HW, CPAD), jnp.bfloat16)),
        grid=(B, nj),
        in_specs=[tile_spec, tile_spec, w1_spec, row_spec, row_spec,
                  w1_spec, row_spec, row_spec, desc_spec, desc_spec],
        out_specs=(tile_spec, tile_spec),
        compiler_params=pltpu.CompilerParams(
            dimension_semantics=("parallel", "parallel"),
            vmem_limit_bytes=vlimit),
    )(c3, b3, w1c, s1c, w2c, w1b, s1b, w2b, ca3, ba3)

    return co.reshape(B, Ho, Wo, CPAD), bo.reshape(B, Ho, Wo, CPAD)


# ----------------------------------------------------------------------------
# Forward pass (NCHW in / NCHW out; NHWC with 128-padded bf16 channels internally)
# ----------------------------------------------------------------------------

def attention_stage_forward(color_nchw, bright_nchw, params):
    c_out = params["out_channels"]
    color = jnp.transpose(color_nchw, (0, 2, 3, 1))
    bright = jnp.transpose(bright_nchw, (0, 2, 3, 1))
    cin = color.shape[-1]
    cin_p = _cpad(cin)
    color = jnp.pad(color, ((0, 0), (0, 0), (0, 0), (0, cin_p - cin))).astype(jnp.bfloat16)
    bright = jnp.pad(bright, ((0, 0), (0, 0), (0, 0), (0, cin_p - cin))).astype(jnp.bfloat16)

    for i in range(len(params["color_blocks"])):
        color = residual_block(color, params["color_blocks"][i])
        bright = residual_block(bright, params["brightness_blocks"][i])
        att = params["attention"][i]
        if att is not None:
            B = color.shape[0]
            assert B == c_out, "reference view(B, C, 1, 1) on a (B, B) matrix requires B == C"
            color, bright = cross_modal_attention(color, bright, att)

    color = color[..., :c_out].astype(jnp.float32)
    bright = bright[..., :c_out].astype(jnp.float32)
    return (jnp.transpose(color, (0, 3, 1, 2)),
            jnp.transpose(bright, (0, 3, 1, 2)))


# ----------------------------------------------------------------------------
# Deterministic parameter construction
# ----------------------------------------------------------------------------

def _init_bn(c):
    return (jnp.ones((c,), jnp.float32), jnp.zeros((c,), jnp.float32),
            jnp.zeros((c,), jnp.float32), jnp.ones((c,), jnp.float32))


def init_params(key, in_channels, out_channels, num_blocks, downsample, attention_dim):
    keys = list(jax.random.split(key, 256))
    kit = iter(keys)

    def nrm(shape, s=0.1):
        return s * jax.random.normal(next(kit), shape, jnp.float32)

    stride0 = 2 if downsample else 1
    params = {"color_blocks": [], "brightness_blocks": [], "attention": [],
              "out_channels": out_channels}

    for branch in ("color_blocks", "brightness_blocks"):
        for i in range(num_blocks):
            cin = in_channels if i == 0 else out_channels
            stride = stride0 if i == 0 else 1
            blk = {
                "stride": stride,
                "conv1_w": nrm((out_channels, cin, 3, 3)),
                "bn1": _init_bn(out_channels),
                "conv2_w": nrm((out_channels, out_channels, 3, 3)),
                "bn2": _init_bn(out_channels),
            }
            if stride != 1 or cin != out_channels:
                blk["shortcut"] = {"w": nrm((out_channels, cin, 1, 1)),
                                   "bn": _init_bn(out_channels)}
            else:
                blk["shortcut"] = None
            params[branch].append(blk)

    def spatial_params():
        return {
            "w1": nrm((attention_dim, out_channels, 1, 1)),
            "b1": nrm((attention_dim,)),
            "bn1": _init_bn(attention_dim),
            "w2": nrm((1, attention_dim, 1, 1)),
            "b2": float(jax.random.normal(next(kit), (), jnp.float32)) * 0.1,
        }

    for i in range(num_blocks):
        if i % 2 == 1 or i == num_blocks - 1:
            params["attention"].append({
                "color_spatial": spatial_params(),
                "brightness_spatial": spatial_params(),
                # temperature = channels ** 0.5  *  temperature_param (init = 1.0)
                "temperature": float(out_channels) ** 0.5 * 1.0,
            })
        else:
            params["attention"].append(None)

    return params


# ----------------------------------------------------------------------------
# Main
# ----------------------------------------------------------------------------

if __name__ == "__main__":
    # B must equal out_channels (see note about the reference's view(B, C, 1, 1)).
    B, C_in, C_out, H, W = 4, 4, 4, 16, 16
    num_blocks, downsample, attention_dim = 2, True, 8

    key = jax.random.PRNGKey(0)
    k_color, k_bright, k_params = jax.random.split(key, 3)

    color = jax.random.normal(k_color, (B, C_in, H, W), jnp.float32)
    brightness = jax.random.normal(k_bright, (B, C_in, H, W), jnp.float32)

    params = init_params(k_params, C_in, C_out, num_blocks, downsample, attention_dim)

    fwd = jax.jit(functools.partial(attention_stage_forward, params=params))
    color_out, bright_out = fwd(color, brightness)
    jax.block_until_ready((color_out, bright_out))

    assert color_out.shape == (B, C_out, H // 2, W // 2)
    assert bright_out.shape == (B, C_out, H // 2, W // 2)
    assert bool(jnp.all(jnp.isfinite(color_out))) and bool(jnp.all(jnp.isfinite(bright_out)))
    print("KERNEL_OK")
</pallas_src>

<mosaic_0001>
module attributes {stable_mosaic.version = 11 : i64} {
  func.func @kernel(%arg0: i32, %arg1: i32, %arg2: i32, %arg3: memref<256x128xbf16, #tpu.memory_space<vmem>>, %arg4: memref<128x128xbf16, #tpu.memory_space<vmem>>, %arg5: memref<1x128xf32, #tpu.memory_space<vmem>>, %arg6: memref<256x128xbf16, #tpu.memory_space<vmem>>) attributes {dimension_semantics = [#tpu.dimension_semantics<parallel>, #tpu.dimension_semantics<parallel>, #tpu.dimension_semantics<arbitrary>], iteration_bounds = array<i64: 1, 1, 1>, scalar_prefetch = 0 : i64, scratch_operands = 0 : i64, tpu.core_type = #tpu.core_type<tc>, window_params = [{transform_indices = @transform_0, window_bounds = array<i64: 256, 128>}, {transform_indices = @transform_1, window_bounds = array<i64: 128, 128>}, {transform_indices = @transform_2, window_bounds = array<i64: 1, 128>}, {transform_indices = @transform_3, window_bounds = array<i64: 256, 128>}]} {
    %c0 = arith.constant 0 : index
    %c0_0 = arith.constant 0 : index
    %0 = vector.load %arg3[%c0, %c0_0] : memref<256x128xbf16, #tpu.memory_space<vmem>>, vector<256x128xbf16>
    %c0_1 = arith.constant 0 : index
    %c0_2 = arith.constant 0 : index
    %1 = vector.load %arg4[%c0_1, %c0_2] : memref<128x128xbf16, #tpu.memory_space<vmem>>, vector<128x128xbf16>
    %cst = arith.constant dense<0.000000e+00> : vector<256x128xf32>
    %2 = tpu.matmul %0, %1, %cst {dimension_numbers = #tpu.dot_dimension_numbers<[1], [0], [0], [1], [0, 0, 1, 1], [], []>} : vector<256x128xbf16>, vector<128x128xbf16>, vector<256x128xf32> -> vector<256x128xf32>
    %c0_3 = arith.constant 0 : index
    %c0_4 = arith.constant 0 : index
    %3 = vector.load %arg5[%c0_3, %c0_4] : memref<1x128xf32, #tpu.memory_space<vmem>>, vector<1x128xf32>
    %4 = vector.broadcast %3 : vector<1x128xf32> to vector<256x128xf32>
    %5 = arith.addf %2, %4 : vector<256x128xf32>
    %cst_5 = arith.constant 0.000000e+00 : f32
    %6 = vector.broadcast %cst_5 : f32 to vector<256x128xf32>
    %7 = arith.maximumf %5, %6 : vector<256x128xf32>
    %8 = arith.truncf %7 : vector<256x128xf32> to vector<256x128xbf16>
    %c0_6 = arith.constant 0 : index
    %c0_7 = arith.constant 0 : index
    %9 = vector.load %arg6[%c0_6, %c0_7] : memref<256x128xbf16, #tpu.memory_space<vmem>>, vector<256x128xbf16>
    tpu.vector_store %arg6[%c0_6, %c0_7], %8 {strides = array<i32>} : memref<256x128xbf16, #tpu.memory_space<vmem>>, vector<256x128xbf16>,
    return
  }
  func.func @transform_0(%arg0: i32, %arg1: i32, %arg2: i32) -> (i32, i32) {
    %c0_i32 = arith.constant 0 : i32
    return %arg0, %arg2 : i32, i32
  }
  func.func @transform_1(%arg0: i32, %arg1: i32, %arg2: i32) -> (i32, i32) {
    %c0_i32 = arith.constant 0 : i32
    return %arg2, %arg1 : i32, i32
  }
  func.func @transform_2(%arg0: i32, %arg1: i32, %arg2: i32) -> (i32, i32) {
    %c0_i32 = arith.constant 0 : i32
    %c0_i32_0 = arith.constant 0 : i32
    return %c0_i32, %arg1 : i32, i32
  }
  func.func @transform_3(%arg0: i32, %arg1: i32, %arg2: i32) -> (i32, i32) {
    %c0_i32 = arith.constant 0 : i32
    return %arg0, %arg1 : i32, i32
  }
}

module attributes {stable_mosaic.version = 11 : i64} {
  func.func @kernel(%arg0: i32, %arg1: i32, %arg2: i32, %arg3: memref<256x128xbf16, #tpu.memory_space<vmem>>, %arg4: memref<128x128xbf16, #tpu.memory_space<vmem>>, %arg5: memref<1x128xf32, #tpu.memory_space<vmem>>, %arg6: memref<256x128xbf16, #tpu.memory_space<vmem>>) attributes {dimension_semantics = [#tpu.dimension_semantics<parallel>, #tpu.dimension_semantics<parallel>, #tpu.dimension_semantics<arbitrary>], iteration_bounds = array<i64: 1, 1, 1>, scalar_prefetch = 0 : i64, scratch_operands = 0 : i64, tpu.core_type = #tpu.core_type<tc>, window_params = [{transform_indices = @transform_0, window_bounds = array<i64: 256, 128>}, {transform_indices = @transform_1, window_bounds = array<i64: 128, 128>}, {transform_indices = @transform_2, window_bounds = array<i64: 1, 128>}, {transform_indices = @transform_3, window_bounds = array<i64: 256, 128>}]} {
    %c0 = arith.constant 0 : index
    %c0_0 = arith.constant 0 : index
    %0 = vector.load %arg3[%c0, %c0_0] : memref<256x128xbf16, #tpu.memory_space<vmem>>, vector<256x128xbf16>
    %c0_1 = arith.constant 0 : index
    %c0_2 = arith.constant 0 : index
    %1 = vector.load %arg4[%c0_1, %c0_2] : memref<128x128xbf16, #tpu.memory_space<vmem>>, vector<128x128xbf16>
    %cst = arith.constant dense<0.000000e+00> : vector<256x128xf32>
    %2 = tpu.matmul %0, %1, %cst {dimension_numbers = #tpu.dot_dimension_numbers<[1], [0], [0], [1], [0, 0, 1, 1], [], []>} : vector<256x128xbf16>, vector<128x128xbf16>, vector<256x128xf32> -> vector<256x128xf32>
    %c0_3 = arith.constant 0 : index
    %c0_4 = arith.constant 0 : index
    %3 = vector.load %arg5[%c0_3, %c0_4] : memref<1x128xf32, #tpu.memory_space<vmem>>, vector<1x128xf32>
    %4 = vector.broadcast %3 : vector<1x128xf32> to vector<256x128xf32>
    %5 = arith.addf %2, %4 : vector<256x128xf32>
    %6 = arith.truncf %5 : vector<256x128xf32> to vector<256x128xbf16>
    %c0_5 = arith.constant 0 : index
    %c0_6 = arith.constant 0 : index
    %7 = vector.load %arg6[%c0_5, %c0_6] : memref<256x128xbf16, #tpu.memory_space<vmem>>, vector<256x128xbf16>
    tpu.vector_store %arg6[%c0_5, %c0_6], %6 {strides = array<i32>} : memref<256x128xbf16, #tpu.memory_space<vmem>>, vector<256x128xbf16>,
    return
  }
  func.func @transform_0(%arg0: i32, %arg1: i32, %arg2: i32) -> (i32, i32) {
    %c0_i32 = arith.constant 0 : i32
    return %arg0, %arg2 : i32, i32
  }
  func.func @transform_1(%arg0: i32, %arg1: i32, %arg2: i32) -> (i32, i32) {
    %c0_i32 = arith.constant 0 : i32
    return %arg2, %arg1 : i32, i32
  }
  func.func @transform_2(%arg0: i32, %arg1: i32, %arg2: i32) -> (i32, i32) {
    %c0_i32 = arith.constant 0 : i32
    %c0_i32_0 = arith.constant 0 : i32
    return %c0_i32, %arg1 : i32, i32
  }
  func.func @transform_3(%arg0: i32, %arg1: i32, %arg2: i32) -> (i32, i32) {
    %c0_i32 = arith.constant 0 : i32
    return %arg0, %arg1 : i32, i32
  }
}

module attributes {stable_mosaic.version = 11 : i64} {
  func.func @kernel(%arg0: i32, %arg1: i32, %arg2: i32, %arg3: memref<256x128xbf16, #tpu.memory_space<vmem>>, %arg4: memref<128x128xbf16, #tpu.memory_space<vmem>>, %arg5: memref<1x128xf32, #tpu.memory_space<vmem>>, %arg6: memref<256x128xbf16, #tpu.memory_space<vmem>>, %arg7: memref<256x128xbf16, #tpu.memory_space<vmem>>) attributes {dimension_semantics = [#tpu.dimension_semantics<parallel>, #tpu.dimension_semantics<parallel>, #tpu.dimension_semantics<arbitrary>], iteration_bounds = array<i64: 1, 1, 1>, scalar_prefetch = 0 : i64, scratch_operands = 0 : i64, tpu.core_type = #tpu.core_type<tc>, window_params = [{transform_indices = @transform_0, window_bounds = array<i64: 256, 128>}, {transform_indices = @transform_1, window_bounds = array<i64: 128, 128>}, {transform_indices = @transform_2, window_bounds = array<i64: 1, 128>}, {transform_indices = @transform_3, window_bounds = array<i64: 256, 128>}, {transform_indices = @transform_4, window_bounds = array<i64: 256, 128>}]} {
    %c0 = arith.constant 0 : index
    %c0_0 = arith.constant 0 : index
    %0 = vector.load %arg3[%c0, %c0_0] : memref<256x128xbf16, #tpu.memory_space<vmem>>, vector<256x128xbf16>
    %c0_1 = arith.constant 0 : index
    %c0_2 = arith.constant 0 : index
    %1 = vector.load %arg4[%c0_1, %c0_2] : memref<128x128xbf16, #tpu.memory_space<vmem>>, vector<128x128xbf16>
    %cst = arith.constant dense<0.000000e+00> : vector<256x128xf32>
    %2 = tpu.matmul %0, %1, %cst {dimension_numbers = #tpu.dot_dimension_numbers<[1], [0], [0], [1], [0, 0, 1, 1], [], []>} : vector<256x128xbf16>, vector<128x128xbf16>, vector<256x128xf32> -> vector<256x128xf32>
    %c0_3 = arith.constant 0 : index
    %c0_4 = arith.constant 0 : index
    %3 = vector.load %arg5[%c0_3, %c0_4] : memref<1x128xf32, #tpu.memory_space<vmem>>, vector<1x128xf32>
    %4 = vector.broadcast %3 : vector<1x128xf32> to vector<256x128xf32>
    %5 = arith.addf %2, %4 : vector<256x128xf32>
    %c0_5 = arith.constant 0 : index
    %c0_6 = arith.constant 0 : index
    %6 = vector.load %arg6[%c0_5, %c0_6] : memref<256x128xbf16, #tpu.memory_space<vmem>>, vector<256x128xbf16>
    %7 = arith.extf %6 : vector<256x128xbf16> to vector<256x128xf32>
    %8 = arith.addf %5, %7 : vector<256x128xf32>
    %cst_7 = arith.constant 0.000000e+00 : f32
    %9 = vector.broadcast %cst_7 : f32 to vector<256x128xf32>
    %10 = arith.maximumf %8, %9 : vector<256x128xf32>
    %11 = arith.truncf %10 : vector<256x128xf32> to vector<256x128xbf16>
    %c0_8 = arith.constant 0 : index
    %c0_9 = arith.constant 0 : index
    %12 = vector.load %arg7[%c0_8, %c0_9] : memref<256x128xbf16, #tpu.memory_space<vmem>>, vector<256x128xbf16>
    tpu.vector_store %arg7[%c0_8, %c0_9], %11 {strides = array<i32>} : memref<256x128xbf16, #tpu.memory_space<vmem>>, vector<256x128xbf16>,
    return
  }
  func.func @transform_0(%arg0: i32, %arg1: i32, %arg2: i32) -> (i32, i32) {
    %c0_i32 = arith.constant 0 : i32
    return %arg0, %arg2 : i32, i32
  }
  func.func @transform_1(%arg0: i32, %arg1: i32, %arg2: i32) -> (i32, i32) {
    %c0_i32 = arith.constant 0 : i32
    return %arg2, %arg1 : i32, i32
  }
  func.func @transform_2(%arg0: i32, %arg1: i32, %arg2: i32) -> (i32, i32) {
    %c0_i32 = arith.constant 0 : i32
    %c0_i32_0 = arith.constant 0 : i32
    return %c0_i32, %arg1 : i32, i32
  }
  func.func @transform_3(%arg0: i32, %arg1: i32, %arg2: i32) -> (i32, i32) {
    %c0_i32 = arith.constant 0 : i32
    return %arg0, %arg1 : i32, i32
  }
  func.func @transform_4(%arg0: i32, %arg1: i32, %arg2: i32) -> (i32, i32) {
    %c0_i32 = arith.constant 0 : i32
    return %arg0, %arg1 : i32, i32
  }
}

module attributes {stable_mosaic.version = 11 : i64} {
  func.func @kernel(%arg0: i32, %arg1: i32, %arg2: memref<1x64x128xbf16, #tpu.memory_space<vmem>>, %arg3: memref<1x64x128xbf16, #tpu.memory_space<vmem>>, %arg4: memref<128x128xbf16, #tpu.memory_space<vmem>>, %arg5: memref<1x128xf32, #tpu.memory_space<vmem>>, %arg6: memref<1x128xf32, #tpu.memory_space<vmem>>, %arg7: memref<128x128xbf16, #tpu.memory_space<vmem>>, %arg8: memref<1x128xf32, #tpu.memory_space<vmem>>, %arg9: memref<1x128xf32, #tpu.memory_space<vmem>>, %arg10: memref<1x1x128xf32, #tpu.memory_space<vmem>>, %arg11: memref<1x1x128xf32, #tpu.memory_space<vmem>>) attributes {dimension_semantics = [#tpu.dimension_semantics<parallel>, #tpu.dimension_semantics<arbitrary>], iteration_bounds = array<i64: 4, 1>, scalar_prefetch = 0 : i64, scratch_operands = 0 : i64, tpu.core_type = #tpu.core_type<tc>, window_params = [{transform_indices = @transform_0, window_bounds = array<i64: 1, 64, 128>}, {transform_indices = @transform_1, window_bounds = array<i64: 1, 64, 128>}, {pipeline_mode = #tpu.pipeline_mode<synchronous>, transform_indices = @transform_2, window_bounds = array<i64: 128, 128>}, {pipeline_mode = #tpu.pipeline_mode<synchronous>, transform_indices = @transform_3, window_bounds = array<i64: 1, 128>}, {pipeline_mode = #tpu.pipeline_mode<synchronous>, transform_indices = @transform_4, window_bounds = array<i64: 1, 128>}, {pipeline_mode = #tpu.pipeline_mode<synchronous>, transform_indices = @transform_5, window_bounds = array<i64: 128, 128>}, {pipeline_mode = #tpu.pipeline_mode<synchronous>, transform_indices = @transform_6, window_bounds = array<i64: 1, 128>}, {pipeline_mode = #tpu.pipeline_mode<synchronous>, transform_indices = @transform_7, window_bounds = array<i64: 1, 128>}, {transform_indices = @transform_8, window_bounds = array<i64: 1, 1, 128>}, {transform_indices = @transform_9, window_bounds = array<i64: 1, 1, 128>}]} {
    %c0 = arith.constant 0 : index
    %c0_0 = arith.constant 0 : index
    %c0_1 = arith.constant 0 : index
    %0 = vector.load %arg2[%c0, %c0_0, %c0_1] : memref<1x64x128xbf16, #tpu.memory_space<vmem>>, vector<1x64x128xbf16>
    %1 = vector.shape_cast %0 : vector<1x64x128xbf16> to vector<64x128xbf16>
    %c0_2 = arith.constant 0 : index
    %c0_3 = arith.constant 0 : index
    %c0_4 = arith.constant 0 : index
    %2 = vector.load %arg3[%c0_2, %c0_3, %c0_4] : memref<1x64x128xbf16, #tpu.memory_space<vmem>>, vector<1x64x128xbf16>
    %3 = vector.shape_cast %2 : vector<1x64x128xbf16> to vector<64x128xbf16>
    %c0_5 = arith.constant 0 : index
    %c0_6 = arith.constant 0 : index
    %4 = vector.load %arg4[%c0_5, %c0_6] : memref<128x128xbf16, #tpu.memory_space<vmem>>, vector<128x128xbf16>
    %c0_7 = arith.constant 0 : index
    %c0_8 = arith.constant 0 : index
    %5 = vector.load %arg5[%c0_7, %c0_8] : memref<1x128xf32, #tpu.memory_space<vmem>>, vector<1x128xf32>
    %c0_9 = arith.constant 0 : index
    %c0_10 = arith.constant 0 : index
    %6 = vector.load %arg6[%c0_9, %c0_10] : memref<1x128xf32, #tpu.memory_space<vmem>>, vector<1x128xf32>
    %c0_11 = arith.constant 0 : index
    %c0_12 = arith.constant 0 : index
    %7 = vector.load %arg7[%c0_11, %c0_12] : memref<128x128xbf16, #tpu.memory_space<vmem>>, vector<128x128xbf16>
    %c0_13 = arith.constant 0 : index
    %c0_14 = arith.constant 0 : index
    %8 = vector.load %arg8[%c0_13, %c0_14] : memref<1x128xf32, #tpu.memory_space<vmem>>, vector<1x128xf32>
    %c0_15 = arith.constant 0 : index
    %c0_16 = arith.constant 0 : index
    %9 = vector.load %arg9[%c0_15, %c0_16] : memref<1x128xf32, #tpu.memory_space<vmem>>, vector<1x128xf32>
    %cst = arith.constant dense<0.000000e+00> : vector<64x128xf32>
    %10 = tpu.matmul %3, %4, %cst {dimension_numbers = #tpu.dot_dimension_numbers<[1], [0], [0], [1], [0, 0, 1, 1], [], []>} : vector<64x128xbf16>, vector<128x128xbf16>, vector<64x128xf32> -> vector<64x128xf32>
    %11 = vector.broadcast %5 : vector<1x128xf32> to vector<64x128xf32>
    %12 = arith.addf %10, %11 : vector<64x128xf32>
    %cst_17 = arith.constant 0.000000e+00 : f32
    %13 = vector.broadcast %cst_17 : f32 to vector<64x128xf32>
    %14 = arith.maximumf %12, %13 : vector<64x128xf32>
    %15 = vector.broadcast %6 : vector<1x128xf32> to vector<64x128xf32>
    %16 = arith.mulf %14, %15 : vector<64x128xf32>
    %cst_18 = arith.constant dense<0.000000e+00> : vector<64xf32>
    %17 = vector.multi_reduction <add>, %16, %cst_18 [1] : vector<64x128xf32> to vector<64xf32>
    %18 = vector.shape_cast %17 : vector<64xf32> to vector<64x1xf32>
    %cst_19 = arith.constant -0.121423602 : f32
    %19 = vector.broadcast %cst_19 : f32 to vector<64x1xf32>
    %20 = arith.addf %18, %19 : vector<64x1xf32>
    %21 = math.absf %20 : vector<64x1xf32>
    %cst_20 = arith.constant 0.000000e+00 : f32
    %22 = vector.broadcast %cst_20 : f32 to vector<64x1xf32>
    %23 = arith.subf %22, %21 : vector<64x1xf32>
    %24 = math.exp %23 : vector<64x1xf32>
    %cst_21 = arith.constant 0.000000e+00 : f32
    %25 = vector.broadcast %cst_21 : f32 to vector<64x1xf32>
    %26 = arith.cmpf oge, %20, %25 : vector<64x1xf32>
    %cst_22 = arith.constant 1.000000e+00 : f32
    %27 = vector.broadcast %cst_22 : f32 to vector<64x1xf32>
    %28 = arith.select %26, %27, %24 : vector<64x1xi1>, vector<64x1xf32>
    %cst_23 = arith.constant 1.000000e+00 : f32
    %29 = vector.broadcast %cst_23 : f32 to vector<64x1xf32>
    %30 = arith.addf %29, %24 : vector<64x1xf32>
    %31 = tpu.reciprocal %30 {approx = true} : vector<64x1xf32> -> vector<64x1xf32>
    %32 = arith.mulf %28, %31 : vector<64x1xf32>
    %cst_24 = arith.constant dense<0.000000e+00> : vector<64x128xf32>
    %33 = tpu.matmul %1, %7, %cst_24 {dimension_numbers = #tpu.dot_dimension_numbers<[1], [0], [0], [1], [0, 0, 1, 1], [], []>} : vector<64x128xbf16>, vector<128x128xbf16>, vector<64x128xf32> -> vector<64x128xf32>
    %34 = vector.broadcast %8 : vector<1x128xf32> to vector<64x128xf32>
    %35 = arith.addf %33, %34 : vector<64x128xf32>
    %cst_25 = arith.constant 0.000000e+00 : f32
    %36 = vector.broadcast %cst_25 : f32 to vector<64x128xf32>
    %37 = arith.maximumf %35, %36 : vector<64x128xf32>
    %38 = vector.broadcast %9 : vector<1x128xf32> to vector<64x128xf32>
    %39 = arith.mulf %37, %38 : vector<64x128xf32>
    %cst_26 = arith.constant dense<0.000000e+00> : vector<64xf32>
    %40 = vector.multi_reduction <add>, %39, %cst_26 [1] : vector<64x128xf32> to vector<64xf32>
    %41 = vector.shape_cast %40 : vector<64xf32> to vector<64x1xf32>
    %cst_27 = arith.constant -0.158815801 : f32
    %42 = vector.broadcast %cst_27 : f32 to vector<64x1xf32>
    %43 = arith.addf %41, %42 : vector<64x1xf32>
    %44 = math.absf %43 : vector<64x1xf32>
    %cst_28 = arith.constant 0.000000e+00 : f32
    %45 = vector.broadcast %cst_28 : f32 to vector<64x1xf32>
    %46 = arith.subf %45, %44 : vector<64x1xf32>
    %47 = math.exp %46 : vector<64x1xf32>
    %cst_29 = arith.constant 0.000000e+00 : f32
    %48 = vector.broadcast %cst_29 : f32 to vector<64x1xf32>
    %49 = arith.cmpf oge, %43, %48 : vector<64x1xf32>
    %cst_30 = arith.constant 1.000000e+00 : f32
    %50 = vector.broadcast %cst_30 : f32 to vector<64x1xf32>
    %51 = arith.select %49, %50, %47 : vector<64x1xi1>, vector<64x1xf32>
    %cst_31 = arith.constant 1.000000e+00 : f32
    %52 = vector.broadcast %cst_31 : f32 to vector<64x1xf32>
    %53 = arith.addf %52, %47 : vector<64x1xf32>
    %54 = tpu.reciprocal %53 {approx = true} : vector<64x1xf32> -> vector<64x1xf32>
    %55 = arith.mulf %51, %54 : vector<64x1xf32>
    %56 = arith.extf %1 : vector<64x128xbf16> to vector<64x128xf32>
    %57 = vector.broadcast %32 : vector<64x1xf32> to vector<64x128xf32>
    %58 = arith.mulf %56, %57 : vector<64x128xf32>
    %59 = arith.extf %3 : vector<64x128xbf16> to vector<64x128xf32>
    %60 = vector.broadcast %55 : vector<64x1xf32> to vector<64x128xf32>
    %61 = arith.mulf %59, %60 : vector<64x128xf32>
    %c0_i32 = arith.constant 0 : i32
    %62 = arith.cmpi eq, %arg1, %c0_i32 : i32
    %63 = arith.extui %62 : i1 to i32
    %c0_i32_32 = arith.constant 0 : i32
    %64 = arith.cmpi ne, %63, %c0_i32_32 : i32
    scf.if %64 {
      %cst_47 = arith.constant 0.000000e+00 : f32
      %77 = vector.broadcast %cst_47 : f32 to vector<1x1x128xf32>
      %c0_48 = arith.constant 0 : index
      %c0_49 = arith.constant 0 : index
      %c0_50 = arith.constant 0 : index
      %78 = vector.load %arg10[%c0_48, %c0_49, %c0_50] : memref<1x1x128xf32, #tpu.memory_space<vmem>>, vector<1x1x128xf32>
      tpu.vector_store %arg10[%c0_48, %c0_49, %c0_50], %77 {strides = array<i32>} : memref<1x1x128xf32, #tpu.memory_space<vmem>>, vector<1x1x128xf32>,
      %cst_51 = arith.constant 0.000000e+00 : f32
      %79 = vector.broadcast %cst_51 : f32 to vector<1x1x128xf32>
      %c0_52 = arith.constant 0 : index
      %c0_53 = arith.constant 0 : index
      %c0_54 = arith.constant 0 : index
      %80 = vector.load %arg11[%c0_52, %c0_53, %c0_54] : memref<1x1x128xf32, #tpu.memory_space<vmem>>, vector<1x1x128xf32>
      tpu.vector_store %arg11[%c0_52, %c0_53, %c0_54], %79 {strides = array<i32>} : memref<1x1x128xf32, #tpu.memory_space<vmem>>, vector<1x1x128xf32>,
    } else {
    }
    %c0_33 = arith.constant 0 : index
    %c0_34 = arith.constant 0 : index
    %c0_35 = arith.constant 0 : index
    %65 = vector.load %arg10[%c0_33, %c0_34, %c0_35] : memref<1x1x128xf32, #tpu.memory_space<vmem>>, vector<1x1x128xf32>
    %cst_36 = arith.constant dense<0.000000e+00> : vector<128xf32>
    %66 = vector.multi_reduction <add>, %58, %cst_36 [0] : vector<64x128xf32> to vector<128xf32>
    %67 = vector.shape_cast %66 : vector<128xf32> to vector<1x128xf32>
    %68 = vector.shape_cast %67 : vector<1x128xf32> to vector<1x1x128xf32>
    %69 = arith.addf %65, %68 : vector<1x1x128xf32>
    %c0_37 = arith.constant 0 : index
    %c0_38 = arith.constant 0 : index
    %c0_39 = arith.constant 0 : index
    %70 = vector.load %arg10[%c0_37, %c0_38, %c0_39] : memref<1x1x128xf32, #tpu.memory_space<vmem>>, vector<1x1x128xf32>
    tpu.vector_store %arg10[%c0_37, %c0_38, %c0_39], %69 {strides = array<i32>} : memref<1x1x128xf32, #tpu.memory_space<vmem>>, vector<1x1x128xf32>,
    %c0_40 = arith.constant 0 : index
    %c0_41 = arith.constant 0 : index
    %c0_42 = arith.constant 0 : index
    %71 = vector.load %arg11[%c0_40, %c0_41, %c0_42] : memref<1x1x128xf32, #tpu.memory_space<vmem>>, vector<1x1x128xf32>
    %cst_43 = arith.constant dense<0.000000e+00> : vector<128xf32>
    %72 = vector.multi_reduction <add>, %61, %cst_43 [0] : vector<64x128xf32> to vector<128xf32>
    %73 = vector.shape_cast %72 : vector<128xf32> to vector<1x128xf32>
    %74 = vector.shape_cast %73 : vector<1x128xf32> to vector<1x1x128xf32>
    %75 = arith.addf %71, %74 : vector<1x1x128xf32>
    %c0_44 = arith.constant 0 : index
    %c0_45 = arith.constant 0 : index
    %c0_46 = arith.constant 0 : index
    %76 = vector.load %arg11[%c0_44, %c0_45, %c0_46] : memref<1x1x128xf32, #tpu.memory_space<vmem>>, vector<1x1x128xf32>
    tpu.vector_store %arg11[%c0_44, %c0_45, %c0_46], %75 {strides = array<i32>} : memref<1x1x128xf32, #tpu.memory_space<vmem>>, vector<1x1x128xf32>,
    return
  }
  func.func @transform_0(%arg0: i32, %arg1: i32) -> (i32, i32, i32) {
    %c0_i32 = arith.constant 0 : i32
    %c0_i32_0 = arith.constant 0 : i32
    return %arg0, %arg1, %c0_i32 : i32, i32, i32
  }
  func.func @transform_1(%arg0: i32, %arg1: i32) -> (i32, i32, i32) {
    %c0_i32 = arith.constant 0 : i32
    %c0_i32_0 = arith.constant 0 : i32
    return %arg0, %arg1, %c0_i32 : i32, i32, i32
  }
  func.func @transform_2(%arg0: i32, %arg1: i32) -> (i32, i32) {
    %c0_i32 = arith.constant 0 : i32
    %c0_i32_0 = arith.constant 0 : i32
    %c0_i32_1 = arith.constant 0 : i32
    return %c0_i32, %c0_i32_0 : i32, i32
  }
  func.func @transform_3(%arg0: i32, %arg1: i32) -> (i32, i32) {
    %c0_i32 = arith.constant 0 : i32
    %c0_i32_0 = arith.constant 0 : i32
    %c0_i32_1 = arith.constant 0 : i32
    return %c0_i32, %c0_i32_0 : i32, i32
  }
  func.func @transform_4(%arg0: i32, %arg1: i32) -> (i32, i32) {
    %c0_i32 = arith.constant 0 : i32
    %c0_i32_0 = arith.constant 0 : i32
    %c0_i32_1 = arith.constant 0 : i32
    return %c0_i32, %c0_i32_0 : i32, i32
  }
  func.func @transform_5(%arg0: i32, %arg1: i32) -> (i32, i32) {
    %c0_i32 = arith.constant 0 : i32
    %c0_i32_0 = arith.constant 0 : i32
    %c0_i32_1 = arith.constant 0 : i32
    return %c0_i32, %c0_i32_0 : i32, i32
  }
  func.func @transform_6(%arg0: i32, %arg1: i32) -> (i32, i32) {
    %c0_i32 = arith.constant 0 : i32
    %c0_i32_0 = arith.constant 0 : i32
    %c0_i32_1 = arith.constant 0 : i32
    return %c0_i32, %c0_i32_0 : i32, i32
  }
  func.func @transform_7(%arg0: i32, %arg1: i32) -> (i32, i32) {
    %c0_i32 = arith.constant 0 : i32
    %c0_i32_0 = arith.constant 0 : i32
    %c0_i32_1 = arith.constant 0 : i32
    return %c0_i32, %c0_i32_0 : i32, i32
  }
  func.func @transform_8(%arg0: i32, %arg1: i32) -> (i32, i32, i32) {
    %c0_i32 = arith.constant 0 : i32
    %c0_i32_0 = arith.constant 0 : i32
    %c0_i32_1 = arith.constant 0 : i32
    return %arg0, %c0_i32, %c0_i32_0 : i32, i32, i32
  }
  func.func @transform_9(%arg0: i32, %arg1: i32) -> (i32, i32, i32) {
    %c0_i32 = arith.constant 0 : i32
    %c0_i32_0 = arith.constant 0 : i32
    %c0_i32_1 = arith.constant 0 : i32
    return %arg0, %c0_i32, %c0_i32_0 : i32, i32, i32
  }
}

module attributes {stable_mosaic.version = 11 : i64} {
  func.func @kernel(%arg0: memref<4x128xf32, #tpu.memory_space<vmem>>, %arg1: memref<4x128xf32, #tpu.memory_space<vmem>>, %arg2: memref<4x128xf32, #tpu.memory_space<vmem>>, %arg3: memref<4x128xf32, #tpu.memory_space<vmem>>) attributes {dimension_semantics = [], scalar_prefetch = 0 : i64, scratch_operands = 0 : i64, tpu.core_type = #tpu.core_type<tc>} {
    %c0 = arith.constant 0 : index
    %c0_0 = arith.constant 0 : index
    %0 = vector.load %arg0[%c0, %c0_0] : memref<4x128xf32, #tpu.memory_space<vmem>>, vector<4x128xf32>
    %c0_1 = arith.constant 0 : index
    %c0_2 = arith.constant 0 : index
    %1 = vector.load %arg1[%c0_1, %c0_2] : memref<4x128xf32, #tpu.memory_space<vmem>>, vector<4x128xf32>
    %2 = tpu.iota {dimensions = array<i32: 0>} : vector<4x128xi32>
    %3 = tpu.iota {dimensions = array<i32: 1>} : vector<4x128xi32>
    %4 = arith.cmpi eq, %2, %3 : vector<4x128xi32>
    %5 = arith.extui %4 : vector<4x128xi1> to vector<4x128xi32>
    %6 = arith.sitofp %5 : vector<4x128xi32> to vector<4x128xf32>
    %cst = arith.constant dense<0.000000e+00> : vector<4x4xf32>
    %7 = tpu.matmul %0, %1, %cst {dimension_numbers = #tpu.dot_dimension_numbers<[1], [1], [0], [0], [0, 0, 1, 0], [], []>} : vector<4x128xf32>, vector<4x128xf32>, vector<4x4xf32> -> vector<4x4xf32>
    %cst_3 = arith.constant 1.22070313E-4 : f32
    %8 = vector.broadcast %cst_3 : f32 to vector<4x4xf32>
    %9 = arith.mulf %7, %8 : vector<4x4xf32>
    %cst_4 = arith.constant dense<0xFF800000> : vector<4xf32>
    %10 = vector.multi_reduction <maximumf>, %9, %cst_4 [1] : vector<4x4xf32> to vector<4xf32>
    %11 = vector.shape_cast %10 : vector<4xf32> to vector<4x1xf32>
    %12 = vector.broadcast %11 : vector<4x1xf32> to vector<4x4xf32>
    %13 = arith.subf %9, %12 : vector<4x4xf32>
    %14 = math.exp %13 : vector<4x4xf32>
    %cst_5 = arith.constant dense<0.000000e+00> : vector<4xf32>
    %15 = vector.multi_reduction <add>, %14, %cst_5 [1] : vector<4x4xf32> to vector<4xf32>
    %16 = vector.shape_cast %15 : vector<4xf32> to vector<4x1xf32>
    %17 = tpu.reciprocal %16 {approx = true} : vector<4x1xf32> -> vector<4x1xf32>
    %18 = vector.broadcast %17 : vector<4x1xf32> to vector<4x4xf32>
    %19 = arith.mulf %14, %18 : vector<4x4xf32>
    %cst_6 = arith.constant dense<0.000000e+00> : vector<4x128xf32>
    %20 = tpu.matmul %19, %6, %cst_6 {dimension_numbers = #tpu.dot_dimension_numbers<[1], [0], [0], [1], [0, 0, 1, 1], [], []>} : vector<4x4xf32>, vector<4x128xf32>, vector<4x128xf32> -> vector<4x128xf32>
    %c0_7 = arith.constant 0 : index
    %c0_8 = arith.constant 0 : index
    %21 = vector.load %arg2[%c0_7, %c0_8] : memref<4x128xf32, #tpu.memory_space<vmem>>, vector<4x128xf32>
    tpu.vector_store %arg2[%c0_7, %c0_8], %20 {strides = array<i32>} : memref<4x128xf32, #tpu.memory_space<vmem>>, vector<4x128xf32>,
    %cst_9 = arith.constant dense<0.000000e+00> : vector<4x4xf32>
    %22 = tpu.matmul %1, %0, %cst_9 {dimension_numbers = #tpu.dot_dimension_numbers<[1], [1], [0], [0], [0, 0, 1, 0], [], []>} : vector<4x128xf32>, vector<4x128xf32>, vector<4x4xf32> -> vector<4x4xf32>
    %cst_10 = arith.constant 1.22070313E-4 : f32
    %23 = vector.broadcast %cst_10 : f32 to vector<4x4xf32>
    %24 = arith.mulf %22, %23 : vector<4x4xf32>
    %cst_11 = arith.constant dense<0xFF800000> : vector<4xf32>
    %25 = vector.multi_reduction <maximumf>, %24, %cst_11 [1] : vector<4x4xf32> to vector<4xf32>
    %26 = vector.shape_cast %25 : vector<4xf32> to vector<4x1xf32>
    %27 = vector.broadcast %26 : vector<4x1xf32> to vector<4x4xf32>
    %28 = arith.subf %24, %27 : vector<4x4xf32>
    %29 = math.exp %28 : vector<4x4xf32>
    %cst_12 = arith.constant dense<0.000000e+00> : vector<4xf32>
    %30 = vector.multi_reduction <add>, %29, %cst_12 [1] : vector<4x4xf32> to vector<4xf32>
    %31 = vector.shape_cast %30 : vector<4xf32> to vector<4x1xf32>
    %32 = tpu.reciprocal %31 {approx = true} : vector<4x1xf32> -> vector<4x1xf32>
    %33 = vector.broadcast %32 : vector<4x1xf32> to vector<4x4xf32>
    %34 = arith.mulf %29, %33 : vector<4x4xf32>
    %cst_13 = arith.constant dense<0.000000e+00> : vector<4x128xf32>
    %35 = tpu.matmul %34, %6, %cst_13 {dimension_numbers = #tpu.dot_dimension_numbers<[1], [0], [0], [1], [0, 0, 1, 1], [], []>} : vector<4x4xf32>, vector<4x128xf32>, vector<4x128xf32> -> vector<4x128xf32>
    %c0_14 = arith.constant 0 : index
    %c0_15 = arith.constant 0 : index
    %36 = vector.load %arg3[%c0_14, %c0_15] : memref<4x128xf32, #tpu.memory_space<vmem>>, vector<4x128xf32>
    tpu.vector_store %arg3[%c0_14, %c0_15], %35 {strides = array<i32>} : memref<4x128xf32, #tpu.memory_space<vmem>>, vector<4x128xf32>,
    return
  }
}

module attributes {stable_mosaic.version = 11 : i64} {
  func.func @kernel(%arg0: i32, %arg1: i32, %arg2: memref<1x64x128xbf16, #tpu.memory_space<vmem>>, %arg3: memref<1x64x128xbf16, #tpu.memory_space<vmem>>, %arg4: memref<128x128xbf16, #tpu.memory_space<vmem>>, %arg5: memref<1x128xf32, #tpu.memory_space<vmem>>, %arg6: memref<1x128xf32, #tpu.memory_space<vmem>>, %arg7: memref<128x128xbf16, #tpu.memory_space<vmem>>, %arg8: memref<1x128xf32, #tpu.memory_space<vmem>>, %arg9: memref<1x128xf32, #tpu.memory_space<vmem>>, %arg10: memref<1x1x128xf32, #tpu.memory_space<vmem>>, %arg11: memref<1x1x128xf32, #tpu.memory_space<vmem>>, %arg12: memref<1x64x128xbf16, #tpu.memory_space<vmem>>, %arg13: memref<1x64x128xbf16, #tpu.memory_space<vmem>>) attributes {dimension_semantics = [#tpu.dimension_semantics<parallel>, #tpu.dimension_semantics<parallel>], iteration_bounds = array<i64: 4, 1>, scalar_prefetch = 0 : i64, scratch_operands = 0 : i64, tpu.core_type = #tpu.core_type<tc>, window_params = [{transform_indices = @transform_0, window_bounds = array<i64: 1, 64, 128>}, {transform_indices = @transform_1, window_bounds = array<i64: 1, 64, 128>}, {pipeline_mode = #tpu.pipeline_mode<synchronous>, transform_indices = @transform_2, window_bounds = array<i64: 128, 128>}, {pipeline_mode = #tpu.pipeline_mode<synchronous>, transform_indices = @transform_3, window_bounds = array<i64: 1, 128>}, {pipeline_mode = #tpu.pipeline_mode<synchronous>, transform_indices = @transform_4, window_bounds = array<i64: 1, 128>}, {pipeline_mode = #tpu.pipeline_mode<synchronous>, transform_indices = @transform_5, window_bounds = array<i64: 128, 128>}, {pipeline_mode = #tpu.pipeline_mode<synchronous>, transform_indices = @transform_6, window_bounds = array<i64: 1, 128>}, {pipeline_mode = #tpu.pipeline_mode<synchronous>, transform_indices = @transform_7, window_bounds = array<i64: 1, 128>}, {transform_indices = @transform_8, window_bounds = array<i64: 1, 1, 128>}, {transform_indices = @transform_9, window_bounds = array<i64: 1, 1, 128>}, {transform_indices = @transform_10, window_bounds = array<i64: 1, 64, 128>}, {transform_indices = @transform_11, window_bounds = array<i64: 1, 64, 128>}]} {
    %c0 = arith.constant 0 : index
    %c0_0 = arith.constant 0 : index
    %c0_1 = arith.constant 0 : index
    %0 = vector.load %arg2[%c0, %c0_0, %c0_1] : memref<1x64x128xbf16, #tpu.memory_space<vmem>>, vector<1x64x128xbf16>
    %1 = vector.shape_cast %0 : vector<1x64x128xbf16> to vector<64x128xbf16>
    %c0_2 = arith.constant 0 : index
    %c0_3 = arith.constant 0 : index
    %c0_4 = arith.constant 0 : index
    %2 = vector.load %arg3[%c0_2, %c0_3, %c0_4] : memref<1x64x128xbf16, #tpu.memory_space<vmem>>, vector<1x64x128xbf16>
    %3 = vector.shape_cast %2 : vector<1x64x128xbf16> to vector<64x128xbf16>
    %c0_5 = arith.constant 0 : index
    %c0_6 = arith.constant 0 : index
    %4 = vector.load %arg4[%c0_5, %c0_6] : memref<128x128xbf16, #tpu.memory_space<vmem>>, vector<128x128xbf16>
    %c0_7 = arith.constant 0 : index
    %c0_8 = arith.constant 0 : index
    %5 = vector.load %arg5[%c0_7, %c0_8] : memref<1x128xf32, #tpu.memory_space<vmem>>, vector<1x128xf32>
    %c0_9 = arith.constant 0 : index
    %c0_10 = arith.constant 0 : index
    %6 = vector.load %arg6[%c0_9, %c0_10] : memref<1x128xf32, #tpu.memory_space<vmem>>, vector<1x128xf32>
    %c0_11 = arith.constant 0 : index
    %c0_12 = arith.constant 0 : index
    %7 = vector.load %arg7[%c0_11, %c0_12] : memref<128x128xbf16, #tpu.memory_space<vmem>>, vector<128x128xbf16>
    %c0_13 = arith.constant 0 : index
    %c0_14 = arith.constant 0 : index
    %8 = vector.load %arg8[%c0_13, %c0_14] : memref<1x128xf32, #tpu.memory_space<vmem>>, vector<1x128xf32>
    %c0_15 = arith.constant 0 : index
    %c0_16 = arith.constant 0 : index
    %9 = vector.load %arg9[%c0_15, %c0_16] : memref<1x128xf32, #tpu.memory_space<vmem>>, vector<1x128xf32>
    %cst = arith.constant dense<0.000000e+00> : vector<64x128xf32>
    %10 = tpu.matmul %3, %4, %cst {dimension_numbers = #tpu.dot_dimension_numbers<[1], [0], [0], [1], [0, 0, 1, 1], [], []>} : vector<64x128xbf16>, vector<128x128xbf16>, vector<64x128xf32> -> vector<64x128xf32>
    %11 = vector.broadcast %5 : vector<1x128xf32> to vector<64x128xf32>
    %12 = arith.addf %10, %11 : vector<64x128xf32>
    %cst_17 = arith.constant 0.000000e+00 : f32
    %13 = vector.broadcast %cst_17 : f32 to vector<64x128xf32>
    %14 = arith.maximumf %12, %13 : vector<64x128xf32>
    %15 = vector.broadcast %6 : vector<1x128xf32> to vector<64x128xf32>
    %16 = arith.mulf %14, %15 : vector<64x128xf32>
    %cst_18 = arith.constant dense<0.000000e+00> : vector<64xf32>
    %17 = vector.multi_reduction <add>, %16, %cst_18 [1] : vector<64x128xf32> to vector<64xf32>
    %18 = vector.shape_cast %17 : vector<64xf32> to vector<64x1xf32>
    %cst_19 = arith.constant -0.121423602 : f32
    %19 = vector.broadcast %cst_19 : f32 to vector<64x1xf32>
    %20 = arith.addf %18, %19 : vector<64x1xf32>
    %21 = math.absf %20 : vector<64x1xf32>
    %cst_20 = arith.constant 0.000000e+00 : f32
    %22 = vector.broadcast %cst_20 : f32 to vector<64x1xf32>
    %23 = arith.subf %22, %21 : vector<64x1xf32>
    %24 = math.exp %23 : vector<64x1xf32>
    %cst_21 = arith.constant 0.000000e+00 : f32
    %25 = vector.broadcast %cst_21 : f32 to vector<64x1xf32>
    %26 = arith.cmpf oge, %20, %25 : vector<64x1xf32>
    %cst_22 = arith.constant 1.000000e+00 : f32
    %27 = vector.broadcast %cst_22 : f32 to vector<64x1xf32>
    %28 = arith.select %26, %27, %24 : vector<64x1xi1>, vector<64x1xf32>
    %cst_23 = arith.constant 1.000000e+00 : f32
    %29 = vector.broadcast %cst_23 : f32 to vector<64x1xf32>
    %30 = arith.addf %29, %24 : vector<64x1xf32>
    %31 = tpu.reciprocal %30 {approx = true} : vector<64x1xf32> -> vector<64x1xf32>
    %32 = arith.mulf %28, %31 : vector<64x1xf32>
    %cst_24 = arith.constant dense<0.000000e+00> : vector<64x128xf32>
    %33 = tpu.matmul %1, %7, %cst_24 {dimension_numbers = #tpu.dot_dimension_numbers<[1], [0], [0], [1], [0, 0, 1, 1], [], []>} : vector<64x128xbf16>, vector<128x128xbf16>, vector<64x128xf32> -> vector<64x128xf32>
    %34 = vector.broadcast %8 : vector<1x128xf32> to vector<64x128xf32>
    %35 = arith.addf %33, %34 : vector<64x128xf32>
    %cst_25 = arith.constant 0.000000e+00 : f32
    %36 = vector.broadcast %cst_25 : f32 to vector<64x128xf32>
    %37 = arith.maximumf %35, %36 : vector<64x128xf32>
    %38 = vector.broadcast %9 : vector<1x128xf32> to vector<64x128xf32>
    %39 = arith.mulf %37, %38 : vector<64x128xf32>
    %cst_26 = arith.constant dense<0.000000e+00> : vector<64xf32>
    %40 = vector.multi_reduction <add>, %39, %cst_26 [1] : vector<64x128xf32> to vector<64xf32>
    %41 = vector.shape_cast %40 : vector<64xf32> to vector<64x1xf32>
    %cst_27 = arith.constant -0.158815801 : f32
    %42 = vector.broadcast %cst_27 : f32 to vector<64x1xf32>
    %43 = arith.addf %41, %42 : vector<64x1xf32>
    %44 = math.absf %43 : vector<64x1xf32>
    %cst_28 = arith.constant 0.000000e+00 : f32
    %45 = vector.broadcast %cst_28 : f32 to vector<64x1xf32>
    %46 = arith.subf %45, %44 : vector<64x1xf32>
    %47 = math.exp %46 : vector<64x1xf32>
    %cst_29 = arith.constant 0.000000e+00 : f32
    %48 = vector.broadcast %cst_29 : f32 to vector<64x1xf32>
    %49 = arith.cmpf oge, %43, %48 : vector<64x1xf32>
    %cst_30 = arith.constant 1.000000e+00 : f32
    %50 = vector.broadcast %cst_30 : f32 to vector<64x1xf32>
    %51 = arith.select %49, %50, %47 : vector<64x1xi1>, vector<64x1xf32>
    %cst_31 = arith.constant 1.000000e+00 : f32
    %52 = vector.broadcast %cst_31 : f32 to vector<64x1xf32>
    %53 = arith.addf %52, %47 : vector<64x1xf32>
    %54 = tpu.reciprocal %53 {approx = true} : vector<64x1xf32> -> vector<64x1xf32>
    %55 = arith.mulf %51, %54 : vector<64x1xf32>
    %c0_32 = arith.constant 0 : index
    %c0_33 = arith.constant 0 : index
    %c0_34 = arith.constant 0 : index
    %56 = vector.load %arg10[%c0_32, %c0_33, %c0_34] : memref<1x1x128xf32, #tpu.memory_space<vmem>>, vector<1x1x128xf32>
    %57 = vector.shape_cast %56 : vector<1x1x128xf32> to vector<1x128xf32>
    %c0_35 = arith.constant 0 : index
    %c0_36 = arith.constant 0 : index
    %c0_37 = arith.constant 0 : index
    %58 = vector.load %arg11[%c0_35, %c0_36, %c0_37] : memref<1x1x128xf32, #tpu.memory_space<vmem>>, vector<1x1x128xf32>
    %59 = vector.shape_cast %58 : vector<1x1x128xf32> to vector<1x128xf32>
    %60 = arith.extf %1 : vector<64x128xbf16> to vector<64x128xf32>
    %61 = vector.broadcast %32 : vector<64x1xf32> to vector<64x128xf32>
    %62 = arith.mulf %60, %61 : vector<64x128xf32>
    %63 = vector.broadcast %57 : vector<1x128xf32> to vector<64x128xf32>
    %64 = arith.mulf %62, %63 : vector<64x128xf32>
    %65 = vector.shape_cast %64 : vector<64x128xf32> to vector<1x64x128xf32>
    %66 = arith.truncf %65 : vector<1x64x128xf32> to vector<1x64x128xbf16>
    %c0_38 = arith.constant 0 : index
    %c0_39 = arith.constant 0 : index
    %c0_40 = arith.constant 0 : index
    %67 = vector.load %arg12[%c0_38, %c0_39, %c0_40] : memref<1x64x128xbf16, #tpu.memory_space<vmem>>, vector<1x64x128xbf16>
    tpu.vector_store %arg12[%c0_38, %c0_39, %c0_40], %66 {strides = array<i32>} : memref<1x64x128xbf16, #tpu.memory_space<vmem>>, vector<1x64x128xbf16>,
    %68 = arith.extf %3 : vector<64x128xbf16> to vector<64x128xf32>
    %69 = vector.broadcast %55 : vector<64x1xf32> to vector<64x128xf32>
    %70 = arith.mulf %68, %69 : vector<64x128xf32>
    %71 = vector.broadcast %59 : vector<1x128xf32> to vector<64x128xf32>
    %72 = arith.mulf %70, %71 : vector<64x128xf32>
    %73 = vector.shape_cast %72 : vector<64x128xf32> to vector<1x64x128xf32>
    %74 = arith.truncf %73 : vector<1x64x128xf32> to vector<1x64x128xbf16>
    %c0_41 = arith.constant 0 : index
    %c0_42 = arith.constant 0 : index
    %c0_43 = arith.constant 0 : index
    %75 = vector.load %arg13[%c0_41, %c0_42, %c0_43] : memref<1x64x128xbf16, #tpu.memory_space<vmem>>, vector<1x64x128xbf16>
    tpu.vector_store %arg13[%c0_41, %c0_42, %c0_43], %74 {strides = array<i32>} : memref<1x64x128xbf16, #tpu.memory_space<vmem>>, vector<1x64x128xbf16>,
    return
  }
  func.func @transform_0(%arg0: i32, %arg1: i32) -> (i32, i32, i32) {
    %c0_i32 = arith.constant 0 : i32
    %c0_i32_0 = arith.constant 0 : i32
    return %arg0, %arg1, %c0_i32 : i32, i32, i32
  }
  func.func @transform_1(%arg0: i32, %arg1: i32) -> (i32, i32, i32) {
    %c0_i32 = arith.constant 0 : i32
    %c0_i32_0 = arith.constant 0 : i32
    return %arg0, %arg1, %c0_i32 : i32, i32, i32
  }
  func.func @transform_2(%arg0: i32, %arg1: i32) -> (i32, i32) {
    %c0_i32 = arith.constant 0 : i32
    %c0_i32_0 = arith.constant 0 : i32
    %c0_i32_1 = arith.constant 0 : i32
    return %c0_i32, %c0_i32_0 : i32, i32
  }
  func.func @transform_3(%arg0: i32, %arg1: i32) -> (i32, i32) {
    %c0_i32 = arith.constant 0 : i32
    %c0_i32_0 = arith.constant 0 : i32
    %c0_i32_1 = arith.constant 0 : i32
    return %c0_i32, %c0_i32_0 : i32, i32
  }
  func.func @transform_4(%arg0: i32, %arg1: i32) -> (i32, i32) {
    %c0_i32 = arith.constant 0 : i32
    %c0_i32_0 = arith.constant 0 : i32
    %c0_i32_1 = arith.constant 0 : i32
    return %c0_i32, %c0_i32_0 : i32, i32
  }
  func.func @transform_5(%arg0: i32, %arg1: i32) -> (i32, i32) {
    %c0_i32 = arith.constant 0 : i32
    %c0_i32_0 = arith.constant 0 : i32
    %c0_i32_1 = arith.constant 0 : i32
    return %c0_i32, %c0_i32_0 : i32, i32
  }
  func.func @transform_6(%arg0: i32, %arg1: i32) -> (i32, i32) {
    %c0_i32 = arith.constant 0 : i32
    %c0_i32_0 = arith.constant 0 : i32
    %c0_i32_1 = arith.constant 0 : i32
    return %c0_i32, %c0_i32_0 : i32, i32
  }
  func.func @transform_7(%arg0: i32, %arg1: i32) -> (i32, i32) {
    %c0_i32 = arith.constant 0 : i32
    %c0_i32_0 = arith.constant 0 : i32
    %c0_i32_1 = arith.constant 0 : i32
    return %c0_i32, %c0_i32_0 : i32, i32
  }
  func.func @transform_8(%arg0: i32, %arg1: i32) -> (i32, i32, i32) {
    %c0_i32 = arith.constant 0 : i32
    %c0_i32_0 = arith.constant 0 : i32
    %c0_i32_1 = arith.constant 0 : i32
    return %arg0, %c0_i32, %c0_i32_0 : i32, i32, i32
  }
  func.func @transform_9(%arg0: i32, %arg1: i32) -> (i32, i32, i32) {
    %c0_i32 = arith.constant 0 : i32
    %c0_i32_0 = arith.constant 0 : i32
    %c0_i32_1 = arith.constant 0 : i32
    return %arg0, %c0_i32, %c0_i32_0 : i32, i32, i32
  }
  func.func @transform_10(%arg0: i32, %arg1: i32) -> (i32, i32, i32) {
    %c0_i32 = arith.constant 0 : i32
    %c0_i32_0 = arith.constant 0 : i32
    return %arg0, %arg1, %c0_i32 : i32, i32, i32
  }
  func.func @transform_11(%arg0: i32, %arg1: i32) -> (i32, i32, i32) {
    %c0_i32 = arith.constant 0 : i32
    %c0_i32_0 = arith.constant 0 : i32
    return %arg0, %arg1, %c0_i32 : i32, i32, i32
  }
}

</mosaic_0001>

<llo_original>
// kernel: attention_stage_forward.17
$region0: #{attention_stage_forward.17}
  #allocation0 [shape = 'u32[]', space=smem, size = 0x4, offset = 0x4, fixed_abs, tag = 'smem constant byte address 0x4 - core index']
  #allocation1 [shape = 'u32[144,128]{1,0:T(1,128)}', space=vmem, size = 0x12000, scoped, tag = 'internal scratch']
  %s0 = inlined_call_operand.vmem [shape: bf16[256,128], index: 0, kind: input, shape index: {}]
  %s1 = inlined_call_operand.vmem [shape: bf16[128,128], index: 1, kind: input, shape index: {}]
  %s2 = inlined_call_operand.vmem [shape: f32[1,128], index: 2, kind: input, shape index: {}]
  %s3 = inlined_call_operand.vmem [shape: bf16[256,128], index: 3, kind: output, shape index: {}]
  %s4 = sld [smem:[#allocation0]]
  $region22: #{attention_stage_forward.17} parent=0
    _
  %s6 = ssub.s32 1, %s4
  %s7 = scalar_select 0, %s6, %s4
  // Predicated region
  $region2: #{attention_stage_forward.17} parent=0 // pred_check
    _
  $region3: #{attention_stage_forward.17} parent=0 // pred_check_branch
    %9 = sbr.rel (0) target = $region5
  $region4: #{attention_stage_forward.17} parent=0 // pred_region
    _
  $region5: #{attention_stage_forward.17} parent=0 // pred_fallthru
    _
  // Predicated region
  $region6: #{attention_stage_forward.17} parent=0 // pred_check
    _
  $region7: #{attention_stage_forward.17} parent=0 // pred_check_branch
    %11 = sbr.rel (0) target = $region9
  $region8: #{attention_stage_forward.17} parent=0 // pred_region
    _
  $region9: #{attention_stage_forward.17} parent=0 // pred_fallthru
    _
  // Predicated region
  $region10: #{attention_stage_forward.17} parent=0 // pred_check
    _
  $region11: #{attention_stage_forward.17} parent=0 // pred_check_branch
    %13 = sbr.rel (0) target = $region13
  $region12: #{attention_stage_forward.17} parent=0 // pred_region
    _
  $region13: #{attention_stage_forward.17} parent=0 // pred_fallthru
    _
  %v15 = vld [vmem:[%s0] sm:$0xf]
  %v16 = vld [vmem:[%s0 + $0x4] sm:$0xf]
  %v17 = vld [vmem:[%s0 + $0x8] sm:$0xf]
  %v18 = vld [vmem:[%s0 + $0xc] sm:$0xf]
  %v19 = vld [vmem:[%s0 + $0x10] sm:$0xf]
  %v20 = vld [vmem:[%s0 + $0x14] sm:$0xf]
  %v21 = vld [vmem:[%s0 + $0x18] sm:$0xf]
  %v22 = vld [vmem:[%s0 + $0x1c] sm:$0xf]
  %v23 = vld [vmem:[%s0 + $0x20] sm:$0xf]
  %v24 = vld [vmem:[%s0 + $0x24] sm:$0xf]
  %v25 = vld [vmem:[%s0 + $0x28] sm:$0xf]
  %v26 = vld [vmem:[%s0 + $0x2c] sm:$0xf]
  %v27 = vld [vmem:[%s0 + $0x30] sm:$0xf]
  %v28 = vld [vmem:[%s0 + $0x34] sm:$0xf]
  %v29 = vld [vmem:[%s0 + $0x38] sm:$0xf]
  %v30 = vld [vmem:[%s0 + $0x3c] sm:$0xf]
  %v31 = vld [vmem:[%s0 + $0x40] sm:$0xf]
  %v32 = vld [vmem:[%s0 + $0x44] sm:$0xf]
  %v33 = vld [vmem:[%s0 + $0x48] sm:$0xf]
  %v34 = vld [vmem:[%s0 + $0x4c] sm:$0xf]
  %v35 = vld [vmem:[%s0 + $0x50] sm:$0xf]
  %v36 = vld [vmem:[%s0 + $0x54] sm:$0xf]
  %v37 = vld [vmem:[%s0 + $0x58] sm:$0xf]
  %v38 = vld [vmem:[%s0 + $0x5c] sm:$0xf]
  %v39 = vld [vmem:[%s0 + $0x60] sm:$0xf]
  %v40 = vld [vmem:[%s0 + $0x64] sm:$0xf]
  %v41 = vld [vmem:[%s0 + $0x68] sm:$0xf]
  %v42 = vld [vmem:[%s0 + $0x6c] sm:$0xf]
  %v43 = vld [vmem:[%s0 + $0x70] sm:$0xf]
  %v44 = vld [vmem:[%s0 + $0x74] sm:$0xf]
  %v45 = vld [vmem:[%s0 + $0x78] sm:$0xf]
  %v46 = vld [vmem:[%s0 + $0x7c] sm:$0xf]
  %v47 = vld [vmem:[%s1] sm:$0xf]
  %v48 = vld [vmem:[%s1 + $0x4] sm:$0xf]
  %v49 = vld [vmem:[%s1 + $0x8] sm:$0xf]
  %v50 = vld [vmem:[%s1 + $0xc] sm:$0xf]
  %v51 = vld [vmem:[%s1 + $0x10] sm:$0xf]
  %v52 = vld [vmem:[%s1 + $0x14] sm:$0xf]
  %v53 = vld [vmem:[%s1 + $0x18] sm:$0xf]
  %v54 = vld [vmem:[%s1 + $0x1c] sm:$0xf]
  %v55 = vld [vmem:[%s1 + $0x20] sm:$0xf]
  %v56 = vld [vmem:[%s1 + $0x24] sm:$0xf]
  %v57 = vld [vmem:[%s1 + $0x28] sm:$0xf]
  %v58 = vld [vmem:[%s1 + $0x2c] sm:$0xf]
  %v59 = vld [vmem:[%s1 + $0x30] sm:$0xf]
  %v60 = vld [vmem:[%s1 + $0x34] sm:$0xf]
  %v61 = vld [vmem:[%s1 + $0x38] sm:$0xf]
  %v62 = vld [vmem:[%s1 + $0x3c] sm:$0xf]
  %v63 = vld [vmem:[%s2] sm:$0x1]
  %v65 = vlaneseq
  %v66 = vshrl.u32 %v65, 7
  %v67 = vsub.s32 0, %v66
  %v68 = vrot.slane %v63, %v67
  %v102 = vunpack.c.l.b16 %v15
  %v103 = vunpack.c.l.b16 %v16
  %v104 = vunpack.c.l.b16 %v17
  %v105 = vunpack.c.l.b16 %v18
  %v106 = vunpack.c.l.b16 %v19
  %v107 = vunpack.c.l.b16 %v20
  %v108 = vunpack.c.l.b16 %v21
  %v109 = vunpack.c.l.b16 %v22
  %v110 = vunpack.c.l.b16 %v23
  %v111 = vunpack.c.l.b16 %v24
  %v112 = vunpack.c.l.b16 %v25
  %v113 = vunpack.c.l.b16 %v26
  %v114 = vunpack.c.l.b16 %v27
  %v115 = vunpack.c.l.b16 %v28
  %v116 = vunpack.c.l.b16 %v29
  %v117 = vunpack.c.l.b16 %v30
  %v118 = vunpack.c.l.b16 %v31
  %v119 = vunpack.c.l.b16 %v32
  %v120 = vunpack.c.l.b16 %v33
  %v121 = vunpack.c.l.b16 %v34
  %v122 = vunpack.c.l.b16 %v35
  %v123 = vunpack.c.l.b16 %v36
  %v124 = vunpack.c.l.b16 %v37
  %v125 = vunpack.c.l.b16 %v38
  %v126 = vunpack.c.l.b16 %v39
  %v127 = vunpack.c.l.b16 %v40
  %v128 = vunpack.c.l.b16 %v41
  %v129 = vunpack.c.l.b16 %v42
  %v130 = vunpack.c.l.b16 %v43
  %v131 = vunpack.c.l.b16 %v44
  %v132 = vunpack.c.l.b16 %v45
  %v133 = vunpack.c.l.b16 %v46
  %v134 = vpack.c.b16 %v103, %v102
  %v135 = vpack.c.b16 %v105, %v104
  %v136 = vpack.c.b16 %v107, %v106
  %v137 = vpack.c.b16 %v109, %v108
  %v138 = vpack.c.b16 %v111, %v110
  %v139 = vpack.c.b16 %v113, %v112
  %v140 = vpack.c.b16 %v115, %v114
  %v141 = vpack.c.b16 %v117, %v116
  %v142 = vpack.c.b16 %v119, %v118
  %v143 = vpack.c.b16 %v121, %v120
  %v144 = vpack.c.b16 %v123, %v122
  %v145 = vpack.c.b16 %v125, %v124
  %v146 = vpack.c.b16 %v127, %v126
  %v147 = vpack.c.b16 %v129, %v128
  %v148 = vpack.c.b16 %v131, %v130
  %v149 = vpack.c.b16 %v133, %v132
  %v182 = vunpack.c.l.b16 %v47
  %v183 = vunpack.c.l.b16 %v48
  %v184 = vunpack.c.l.b16 %v49
  %v185 = vunpack.c.l.b16 %v50
  %v186 = vunpack.c.l.b16 %v51
  %v187 = vunpack.c.l.b16 %v52
  %v188 = vunpack.c.l.b16 %v53
  %v189 = vunpack.c.l.b16 %v54
  %v190 = vunpack.c.l.b16 %v55
  %v191 = vunpack.c.l.b16 %v56
  %v192 = vunpack.c.l.b16 %v57
  %v193 = vunpack.c.l.b16 %v58
  %v194 = vunpack.c.l.b16 %v59
  %v195 = vunpack.c.l.b16 %v60
  %v196 = vunpack.c.l.b16 %v61
  %v197 = vunpack.c.l.b16 %v62
  %v198 = vpack.c.b16 %v183, %v182
  %v199 = vpack.c.b16 %v185, %v184
  %v200 = vpack.c.b16 %v187, %v186
  %v201 = vpack.c.b16 %v189, %v188
  %v202 = vpack.c.b16 %v191, %v190
  %v203 = vpack.c.b16 %v193, %v192
  %v204 = vpack.c.b16 %v195, %v194
  %v205 = vpack.c.b16 %v197, %v196
  %214 = vmatprep.subr.bf16.mxu0 0
  %215 = vmatpush1.bf16.msra.mxu0 %v198
  %216 = vmatprep.subr.bf16.mxu0 0
  %217 = vmatpush1.bf16.msra.mxu0 %v199
  %218 = vmatprep.subr.bf16.mxu0 0
  %219 = vmatpush1.bf16.msra.mxu0 %v200
  %220 = vmatprep.subr.bf16.mxu0 0
  %221 = vmatpush1.bf16.msra.mxu0 %v201
  %222 = vmatprep.subr.bf16.mxu0 0
  %223 = vmatpush1.bf16.msra.mxu0 %v202
  %224 = vmatprep.subr.bf16.mxu0 0
  %225 = vmatpush1.bf16.msra.mxu0 %v203
  %226 = vmatprep.subr.bf16.mxu0 0
  %227 = vmatpush1.bf16.msra.mxu0 %v204
  %228 = vmatprep.subr.bf16.mxu0 0
  %229 = vmatpush1.bf16.msra.mxu0 %v205
  %230 = vmatprep.subr.bf16.mxu0 0
  %231 = vmatpush1.bf16.msra.mxu0 0
  %232 = vmatprep.subr.bf16.mxu0 0
  %233 = vmatpush1.bf16.msra.mxu0 0
  %234 = vmatprep.subr.bf16.mxu0 0
  %235 = vmatpush1.bf16.msra.mxu0 0
  %236 = vmatprep.subr.bf16.mxu0 0
  %237 = vmatpush1.bf16.msra.mxu0 0
  %238 = vmatprep.subr.bf16.mxu0 0
  %239 = vmatpush1.bf16.msra.mxu0 0
  %240 = vmatprep.subr.bf16.mxu0 0
  %241 = vmatpush1.bf16.msra.mxu0 0
  %242 = vmatprep.subr.bf16.mxu0 0
  %243 = vmatpush1.bf16.msra.mxu0 0
  %244 = vmatprep.subr.bf16.mxu0 0
  %245 = vmatpush1.bf16.msra.mxu0 0
  %246 = vmatprep.mubr.bf16.mxu0 0
  %247 = vmatmul.mubr.bf16.gmra.mrb[0].mxu0 %v134
  %v248 = vpop.f32.mrb[0].mxu0
  %v249 = vadd.f32 %v68, %v248
  %v250 = vpop.f32.mrb[0].mxu0
  %v251 = vpop.f32.mrb[0].mxu0
  %v252 = vadd.f32 %v68, %v251
  %v253 = vpop.f32.mrb[0].mxu0
  %254 = vmatprep.mubr.bf16.mxu0 0
  %255 = vmatmul.mubr.bf16.gmra.mrb[0].mxu0 %v135
  %v256 = vpop.f32.mrb[0].mxu0
  %v257 = vadd.f32 %v68, %v256
  %v258 = vpop.f32.mrb[0].mxu0
  %v259 = vpop.f32.mrb[0].mxu0
  %v260 = vadd.f32 %v68, %v259
  %v261 = vpop.f32.mrb[0].mxu0
  %262 = vmatprep.mubr.bf16.mxu0 0
  %263 = vmatmul.mubr.bf16.gmra.mrb[0].mxu0 %v136
  %v264 = vpop.f32.mrb[0].mxu0
  %v265 = vadd.f32 %v68, %v264
  %v266 = vpop.f32.mrb[0].mxu0
  %v267 = vpop.f32.mrb[0].mxu0
  %v268 = vadd.f32 %v68, %v267
  %v269 = vpop.f32.mrb[0].mxu0
  %270 = vmatprep.mubr.bf16.mxu0 0
  %271 = vmatmul.mubr.bf16.gmra.mrb[0].mxu0 %v137
  %v272 = vpop.f32.mrb[0].mxu0
  %v273 = vadd.f32 %v68, %v272
  %v274 = vpop.f32.mrb[0].mxu0
  %v275 = vpop.f32.mrb[0].mxu0
  %v276 = vadd.f32 %v68, %v275
  %v277 = vpop.f32.mrb[0].mxu0
  %278 = vmatprep.mubr.bf16.mxu0 0
  %279 = vmatmul.mubr.bf16.gmra.mrb[0].mxu0 %v138
  %v280 = vpop.f32.mrb[0].mxu0
  %v281 = vadd.f32 %v68, %v280
  %v282 = vpop.f32.mrb[0].mxu0
  %v283 = vpop.f32.mrb[0].mxu0
  %v284 = vadd.f32 %v68, %v283
  %v285 = vpop.f32.mrb[0].mxu0
  %286 = vmatprep.mubr.bf16.mxu0 0
  %287 = vmatmul.mubr.bf16.gmra.mrb[0].mxu0 %v139
  %v288 = vpop.f32.mrb[0].mxu0
  %v289 = vadd.f32 %v68, %v288
  %v290 = vpop.f32.mrb[0].mxu0
  %v291 = vpop.f32.mrb[0].mxu0
  %v292 = vadd.f32 %v68, %v291
  %v293 = vpop.f32.mrb[0].mxu0
  %294 = vmatprep.mubr.bf16.mxu0 0
  %295 = vmatmul.mubr.bf16.gmra.mrb[0].mxu0 %v140
  %v296 = vpop.f32.mrb[0].mxu0
  %v297 = vadd.f32 %v68, %v296
  %v298 = vpop.f32.mrb[0].mxu0
  %v299 = vpop.f32.mrb[0].mxu0
  %v300 = vadd.f32 %v68, %v299
  %v301 = vpop.f32.mrb[0].mxu0
  %302 = vmatprep.mubr.bf16.mxu0 0
  %303 = vmatmul.mubr.bf16.gmra.mrb[0].mxu0 %v141
  %v304 = vpop.f32.mrb[0].mxu0
  %v305 = vadd.f32 %v68, %v304
  %v306 = vpop.f32.mrb[0].mxu0
  %v307 = vpop.f32.mrb[0].mxu0
  %v308 = vadd.f32 %v68, %v307
  %v309 = vpop.f32.mrb[0].mxu0
  %310 = vmatprep.mubr.bf16.mxu0 0
  %311 = vmatmul.mubr.bf16.gmra.mrb[0].mxu0 %v142
  %v312 = vpop.f32.mrb[0].mxu0
  %v313 = vadd.f32 %v68, %v312
  %v314 = vpop.f32.mrb[0].mxu0
  %v315 = vpop.f32.mrb[0].mxu0
  %v316 = vadd.f32 %v68, %v315
  %v317 = vpop.f32.mrb[0].mxu0
  %318 = vmatprep.mubr.bf16.mxu0 0
  %319 = vmatmul.mubr.bf16.gmra.mrb[0].mxu0 %v143
  %v320 = vpop.f32.mrb[0].mxu0
  %v321 = vadd.f32 %v68, %v320
  %v322 = vpop.f32.mrb[0].mxu0
  %v323 = vpop.f32.mrb[0].mxu0
  %v324 = vadd.f32 %v68, %v323
  %v325 = vpop.f32.mrb[0].mxu0
  %326 = vmatprep.mubr.bf16.mxu0 0
  %327 = vmatmul.mubr.bf16.gmra.mrb[0].mxu0 %v144
  %v328 = vpop.f32.mrb[0].mxu0
  %v329 = vadd.f32 %v68, %v328
  %v330 = vpop.f32.mrb[0].mxu0
  %v331 = vpop.f32.mrb[0].mxu0
  %v332 = vadd.f32 %v68, %v331
  %v333 = vpop.f32.mrb[0].mxu0
  %334 = vmatprep.mubr.bf16.mxu0 0
  %335 = vmatmul.mubr.bf16.gmra.mrb[0].mxu0 %v145
  %v336 = vpop.f32.mrb[0].mxu0
  %v337 = vadd.f32 %v68, %v336
  %v338 = vpop.f32.mrb[0].mxu0
  %v339 = vpop.f32.mrb[0].mxu0
  %v340 = vadd.f32 %v68, %v339
  %v341 = vpop.f32.mrb[0].mxu0
  %342 = vmatprep.mubr.bf16.mxu0 0
  %343 = vmatmul.mubr.bf16.gmra.mrb[0].mxu0 %v146
  %v344 = vpop.f32.mrb[0].mxu0
  %v345 = vadd.f32 %v68, %v344
  %v346 = vpop.f32.mrb[0].mxu0
  %v347 = vpop.f32.mrb[0].mxu0
  %v348 = vadd.f32 %v68, %v347
  %v349 = vpop.f32.mrb[0].mxu0
  %350 = vmatprep.mubr.bf16.mxu0 0
  %351 = vmatmul.mubr.bf16.gmra.mrb[0].mxu0 %v147
  %v352 = vpop.f32.mrb[0].mxu0
  %v353 = vadd.f32 %v68, %v352
  %v354 = vpop.f32.mrb[0].mxu0
  %v355 = vpop.f32.mrb[0].mxu0
  %v356 = vadd.f32 %v68, %v355
  %v357 = vpop.f32.mrb[0].mxu0
  %358 = vmatprep.mubr.bf16.mxu0 0
  %359 = vmatmul.mubr.bf16.gmra.mrb[0].mxu0 %v148
  %v360 = vpop.f32.mrb[0].mxu0
  %v361 = vadd.f32 %v68, %v360
  %v362 = vpop.f32.mrb[0].mxu0
  %v363 = vpop.f32.mrb[0].mxu0
  %v364 = vadd.f32 %v68, %v363
  %v365 = vpop.f32.mrb[0].mxu0
  %366 = vmatprep.mubr.bf16.mxu0 0
  %367 = vmatmul.mubr.bf16.gmra.mrb[0].mxu0 %v149
  %v368 = vpop.f32.mrb[0].mxu0
  %v369 = vadd.f32 %v68, %v368
  %v370 = vpop.f32.mrb[0].mxu0
  %v371 = vpop.f32.mrb[0].mxu0
  %v372 = vadd.f32 %v68, %v371
  %v373 = vpop.f32.mrb[0].mxu0
  %374 = vdwg.mxu0
  %v375 = vmax.f32 %v249, 0.0
  %v376 = vmax.f32 %v252, 0.0
  %v377 = vmax.f32 %v257, 0.0
  %v378 = vmax.f32 %v260, 0.0
  %v379 = vmax.f32 %v265, 0.0
  %v380 = vmax.f32 %v268, 0.0
  %v381 = vmax.f32 %v273, 0.0
  %v382 = vmax.f32 %v276, 0.0
  %v383 = vmax.f32 %v281, 0.0
  %v384 = vmax.f32 %v284, 0.0
  %v385 = vmax.f32 %v289, 0.0
  %v386 = vmax.f32 %v292, 0.0
  %v387 = vmax.f32 %v297, 0.0
  %v388 = vmax.f32 %v300, 0.0
  %v389 = vmax.f32 %v305, 0.0
  %v390 = vmax.f32 %v308, 0.0
  %v391 = vmax.f32 %v313, 0.0
  %v392 = vmax.f32 %v316, 0.0
  %v393 = vmax.f32 %v321, 0.0
  %v394 = vmax.f32 %v324, 0.0
  %v395 = vmax.f32 %v329, 0.0
  %v396 = vmax.f32 %v332, 0.0
  %v397 = vmax.f32 %v337, 0.0
  %v398 = vmax.f32 %v340, 0.0
  %v399 = vmax.f32 %v345, 0.0
  %v400 = vmax.f32 %v348, 0.0
  %v401 = vmax.f32 %v353, 0.0
  %v402 = vmax.f32 %v356, 0.0
  %v403 = vmax.f32 %v361, 0.0
  %v404 = vmax.f32 %v364, 0.0
  %v405 = vmax.f32 %v369, 0.0
  %v406 = vmax.f32 %v372, 0.0
  %v407 = vpack.c.bf16 %v376, %v375
  %v408 = vpack.c.bf16 %v378, %v377
  %v409 = vpack.c.bf16 %v380, %v379
  %v410 = vpack.c.bf16 %v382, %v381
  %v411 = vpack.c.bf16 %v384, %v383
  %v412 = vpack.c.bf16 %v386, %v385
  %v413 = vpack.c.bf16 %v388, %v387
  %v414 = vpack.c.bf16 %v390, %v389
  %v415 = vpack.c.bf16 %v392, %v391
  %v416 = vpack.c.bf16 %v394, %v393
  %v417 = vpack.c.bf16 %v396, %v395
  %v418 = vpack.c.bf16 %v398, %v397
  %v419 = vpack.c.bf16 %v400, %v399
  %v420 = vpack.c.bf16 %v402, %v401
  %v421 = vpack.c.bf16 %v404, %v403
  %v422 = vpack.c.bf16 %v406, %v405
  %v439 = vunpack.c.l.b16 %v407
  %v440 = vunpack.c.h.b16 %v407
  %v441 = vunpack.c.l.b16 %v408
  %v442 = vunpack.c.h.b16 %v408
  %v443 = vunpack.c.l.b16 %v409
  %v444 = vunpack.c.h.b16 %v409
  %v445 = vunpack.c.l.b16 %v410
  %v446 = vunpack.c.h.b16 %v410
  %v447 = vunpack.c.l.b16 %v411
  %v448 = vunpack.c.h.b16 %v411
  %v449 = vunpack.c.l.b16 %v412
  %v450 = vunpack.c.h.b16 %v412
  %v451 = vunpack.c.l.b16 %v413
  %v452 = vunpack.c.h.b16 %v413
  %v453 = vunpack.c.l.b16 %v414
  %v454 = vunpack.c.h.b16 %v414
  %v455 = vunpack.c.l.b16 %v415
  %v456 = vunpack.c.h.b16 %v415
  %v457 = vunpack.c.l.b16 %v416
  %v458 = vunpack.c.h.b16 %v416
  %v459 = vunpack.c.l.b16 %v417
  %v460 = vunpack.c.h.b16 %v417
  %v461 = vunpack.c.l.b16 %v418
  %v462 = vunpack.c.h.b16 %v418
  %v463 = vunpack.c.l.b16 %v419
  %v464 = vunpack.c.h.b16 %v419
  %v465 = vunpack.c.l.b16 %v420
  %v466 = vunpack.c.h.b16 %v420
  %v467 = vunpack.c.l.b16 %v421
  %v468 = vunpack.c.h.b16 %v421
  %v469 = vunpack.c.l.b16 %v422
  %v470 = vunpack.c.h.b16 %v422
  %v471 = vpack.c.b16 %v439, %v439
  %v472 = vpack.c.b16 %v440, %v440
  %v473 = vpack.c.b16 %v441, %v441
  %v474 = vpack.c.b16 %v442, %v442
  %v475 = vpack.c.b16 %v443, %v443
  %v476 = vpack.c.b16 %v444, %v444
  %v477 = vpack.c.b16 %v445, %v445
  %v478 = vpack.c.b16 %v446, %v446
  %v479 = vpack.c.b16 %v447, %v447
  %v480 = vpack.c.b16 %v448, %v448
  %v481 = vpack.c.b16 %v449, %v449
  %v482 = vpack.c.b16 %v450, %v450
  %v483 = vpack.c.b16 %v451, %v451
  %v484 = vpack.c.b16 %v452, %v452
  %v485 = vpack.c.b16 %v453, %v453
  %v486 = vpack.c.b16 %v454, %v454
  %v487 = vpack.c.b16 %v455, %v455
  %v488 = vpack.c.b16 %v456, %v456
  %v489 = vpack.c.b16 %v457, %v457
  %v490 = vpack.c.b16 %v458, %v458
  %v491 = vpack.c.b16 %v459, %v459
  %v492 = vpack.c.b16 %v460, %v460
  %v493 = vpack.c.b16 %v461, %v461
  %v494 = vpack.c.b16 %v462, %v462
  %v495 = vpack.c.b16 %v463, %v463
  %v496 = vpack.c.b16 %v464, %v464
  %v497 = vpack.c.b16 %v465, %v465
  %v498 = vpack.c.b16 %v466, %v466
  %v499 = vpack.c.b16 %v467, %v467
  %v500 = vpack.c.b16 %v468, %v468
  %v501 = vpack.c.b16 %v469, %v469
  %v502 = vpack.c.b16 %v470, %v470
  %535 = vst [vmem:[%s3] sm:$0xf] %v471
  %536 = vst [vmem:[%s3 + $0x4] sm:$0xf] %v472
  %537 = vst [vmem:[%s3 + $0x8] sm:$0xf] %v473
  %538 = vst [vmem:[%s3 + $0xc] sm:$0xf] %v474
  %539 = vst [vmem:[%s3 + $0x10] sm:$0xf] %v475
  %540 = vst [vmem:[%s3 + $0x14] sm:$0xf] %v476
  %541 = vst [vmem:[%s3 + $0x18] sm:$0xf] %v477
  %542 = vst [vmem:[%s3 + $0x1c] sm:$0xf] %v478
  %543 = vst [vmem:[%s3 + $0x20] sm:$0xf] %v479
  %544 = vst [vmem:[%s3 + $0x24] sm:$0xf] %v480
  %545 = vst [vmem:[%s3 + $0x28] sm:$0xf] %v481
  %546 = vst [vmem:[%s3 + $0x2c] sm:$0xf] %v482
  %547 = vst [vmem:[%s3 + $0x30] sm:$0xf] %v483
  %548 = vst [vmem:[%s3 + $0x34] sm:$0xf] %v484
  %549 = vst [vmem:[%s3 + $0x38] sm:$0xf] %v485
  %550 = vst [vmem:[%s3 + $0x3c] sm:$0xf] %v486
  %551 = vst [vmem:[%s3 + $0x40] sm:$0xf] %v487
  %552 = vst [vmem:[%s3 + $0x44] sm:$0xf] %v488
  %553 = vst [vmem:[%s3 + $0x48] sm:$0xf] %v489
  %554 = vst [vmem:[%s3 + $0x4c] sm:$0xf] %v490
  %555 = vst [vmem:[%s3 + $0x50] sm:$0xf] %v491
  %556 = vst [vmem:[%s3 + $0x54] sm:$0xf] %v492
  %557 = vst [vmem:[%s3 + $0x58] sm:$0xf] %v493
  %558 = vst [vmem:[%s3 + $0x5c] sm:$0xf] %v494
  %559 = vst [vmem:[%s3 + $0x60] sm:$0xf] %v495
  %560 = vst [vmem:[%s3 + $0x64] sm:$0xf] %v496
  %561 = vst [vmem:[%s3 + $0x68] sm:$0xf] %v497
  %562 = vst [vmem:[%s3 + $0x6c] sm:$0xf] %v498
  %563 = vst [vmem:[%s3 + $0x70] sm:$0xf] %v499
  %564 = vst [vmem:[%s3 + $0x74] sm:$0xf] %v500
  %565 = vst [vmem:[%s3 + $0x78] sm:$0xf] %v501
  %566 = vst [vmem:[%s3 + $0x7c] sm:$0xf] %v502
  // Predicated region
  $region14: #{attention_stage_forward.17} parent=0 // pred_check
    _
  $region15: #{attention_stage_forward.17} parent=0 // pred_check_branch
    %568 = sbr.rel (0) target = $region17
  $region16: #{attention_stage_forward.17} parent=0 // pred_region
    _
  $region17: #{attention_stage_forward.17} parent=0 // pred_fallthru
    _
  // Predicated region
  $region18: #{attention_stage_forward.17} parent=0 // pred_check
    _
  $region19: #{attention_stage_forward.17} parent=0 // pred_check_branch
    %570 = sbr.rel (0) target = $region21
  $region20: #{attention_stage_forward.17} parent=0 // pred_region
    _
  $region21: #{attention_stage_forward.17} parent=0 // pred_fallthru
    _

// kernel: attention_stage_forward.16
$region0: #{attention_stage_forward.16}
  #allocation0 [shape = 'u32[]', space=smem, size = 0x4, offset = 0x4, fixed_abs, tag = 'smem constant byte address 0x4 - core index']
  #allocation1 [shape = 'u32[144,128]{1,0:T(1,128)}', space=vmem, size = 0x12000, scoped, tag = 'internal scratch']
  %s0 = inlined_call_operand.vmem [shape: bf16[256,128], index: 0, kind: input, shape index: {}]
  %s1 = inlined_call_operand.vmem [shape: bf16[128,128], index: 1, kind: input, shape index: {}]
  %s2 = inlined_call_operand.vmem [shape: f32[1,128], index: 2, kind: input, shape index: {}]
  %s3 = inlined_call_operand.vmem [shape: bf16[256,128], index: 3, kind: output, shape index: {}]
  %s4 = sld [smem:[#allocation0]]
  $region22: #{attention_stage_forward.16} parent=0
    _
  %s6 = ssub.s32 1, %s4
  %s7 = scalar_select 0, %s6, %s4
  // Predicated region
  $region2: #{attention_stage_forward.16} parent=0 // pred_check
    _
  $region3: #{attention_stage_forward.16} parent=0 // pred_check_branch
    %9 = sbr.rel (0) target = $region5
  $region4: #{attention_stage_forward.16} parent=0 // pred_region
    _
  $region5: #{attention_stage_forward.16} parent=0 // pred_fallthru
    _
  // Predicated region
  $region6: #{attention_stage_forward.16} parent=0 // pred_check
    _
  $region7: #{attention_stage_forward.16} parent=0 // pred_check_branch
    %11 = sbr.rel (0) target = $region9
  $region8: #{attention_stage_forward.16} parent=0 // pred_region
    _
  $region9: #{attention_stage_forward.16} parent=0 // pred_fallthru
    _
  // Predicated region
  $region10: #{attention_stage_forward.16} parent=0 // pred_check
    _
  $region11: #{attention_stage_forward.16} parent=0 // pred_check_branch
    %13 = sbr.rel (0) target = $region13
  $region12: #{attention_stage_forward.16} parent=0 // pred_region
    _
  $region13: #{attention_stage_forward.16} parent=0 // pred_fallthru
    _
  %v15 = vld [vmem:[%s0] sm:$0xf]
  %v16 = vld [vmem:[%s0 + $0x4] sm:$0xf]
  %v17 = vld [vmem:[%s0 + $0x8] sm:$0xf]
  %v18 = vld [vmem:[%s0 + $0xc] sm:$0xf]
  %v19 = vld [vmem:[%s0 + $0x10] sm:$0xf]
  %v20 = vld [vmem:[%s0 + $0x14] sm:$0xf]
  %v21 = vld [vmem:[%s0 + $0x18] sm:$0xf]
  %v22 = vld [vmem:[%s0 + $0x1c] sm:$0xf]
  %v23 = vld [vmem:[%s0 + $0x20] sm:$0xf]
  %v24 = vld [vmem:[%s0 + $0x24] sm:$0xf]
  %v25 = vld [vmem:[%s0 + $0x28] sm:$0xf]
  %v26 = vld [vmem:[%s0 + $0x2c] sm:$0xf]
  %v27 = vld [vmem:[%s0 + $0x30] sm:$0xf]
  %v28 = vld [vmem:[%s0 + $0x34] sm:$0xf]
  %v29 = vld [vmem:[%s0 + $0x38] sm:$0xf]
  %v30 = vld [vmem:[%s0 + $0x3c] sm:$0xf]
  %v31 = vld [vmem:[%s0 + $0x40] sm:$0xf]
  %v32 = vld [vmem:[%s0 + $0x44] sm:$0xf]
  %v33 = vld [vmem:[%s0 + $0x48] sm:$0xf]
  %v34 = vld [vmem:[%s0 + $0x4c] sm:$0xf]
  %v35 = vld [vmem:[%s0 + $0x50] sm:$0xf]
  %v36 = vld [vmem:[%s0 + $0x54] sm:$0xf]
  %v37 = vld [vmem:[%s0 + $0x58] sm:$0xf]
  %v38 = vld [vmem:[%s0 + $0x5c] sm:$0xf]
  %v39 = vld [vmem:[%s0 + $0x60] sm:$0xf]
  %v40 = vld [vmem:[%s0 + $0x64] sm:$0xf]
  %v41 = vld [vmem:[%s0 + $0x68] sm:$0xf]
  %v42 = vld [vmem:[%s0 + $0x6c] sm:$0xf]
  %v43 = vld [vmem:[%s0 + $0x70] sm:$0xf]
  %v44 = vld [vmem:[%s0 + $0x74] sm:$0xf]
  %v45 = vld [vmem:[%s0 + $0x78] sm:$0xf]
  %v46 = vld [vmem:[%s0 + $0x7c] sm:$0xf]
  %v47 = vld [vmem:[%s1] sm:$0xf]
  %v48 = vld [vmem:[%s1 + $0x4] sm:$0xf]
  %v49 = vld [vmem:[%s1 + $0x8] sm:$0xf]
  %v50 = vld [vmem:[%s1 + $0xc] sm:$0xf]
  %v51 = vld [vmem:[%s1 + $0x10] sm:$0xf]
  %v52 = vld [vmem:[%s1 + $0x14] sm:$0xf]
  %v53 = vld [vmem:[%s1 + $0x18] sm:$0xf]
  %v54 = vld [vmem:[%s1 + $0x1c] sm:$0xf]
  %v55 = vld [vmem:[%s1 + $0x20] sm:$0xf]
  %v56 = vld [vmem:[%s1 + $0x24] sm:$0xf]
  %v57 = vld [vmem:[%s1 + $0x28] sm:$0xf]
  %v58 = vld [vmem:[%s1 + $0x2c] sm:$0xf]
  %v59 = vld [vmem:[%s1 + $0x30] sm:$0xf]
  %v60 = vld [vmem:[%s1 + $0x34] sm:$0xf]
  %v61 = vld [vmem:[%s1 + $0x38] sm:$0xf]
  %v62 = vld [vmem:[%s1 + $0x3c] sm:$0xf]
  %v63 = vld [vmem:[%s2] sm:$0x1]
  %v65 = vlaneseq
  %v66 = vshrl.u32 %v65, 7
  %v67 = vsub.s32 0, %v66
  %v68 = vrot.slane %v63, %v67
  %v102 = vunpack.c.l.b16 %v15
  %v103 = vunpack.c.l.b16 %v16
  %v104 = vunpack.c.l.b16 %v17
  %v105 = vunpack.c.l.b16 %v18
  %v106 = vunpack.c.l.b16 %v19
  %v107 = vunpack.c.l.b16 %v20
  %v108 = vunpack.c.l.b16 %v21
  %v109 = vunpack.c.l.b16 %v22
  %v110 = vunpack.c.l.b16 %v23
  %v111 = vunpack.c.l.b16 %v24
  %v112 = vunpack.c.l.b16 %v25
  %v113 = vunpack.c.l.b16 %v26
  %v114 = vunpack.c.l.b16 %v27
  %v115 = vunpack.c.l.b16 %v28
  %v116 = vunpack.c.l.b16 %v29
  %v117 = vunpack.c.l.b16 %v30
  %v118 = vunpack.c.l.b16 %v31
  %v119 = vunpack.c.l.b16 %v32
  %v120 = vunpack.c.l.b16 %v33
  %v121 = vunpack.c.l.b16 %v34
  %v122 = vunpack.c.l.b16 %v35
  %v123 = vunpack.c.l.b16 %v36
  %v124 = vunpack.c.l.b16 %v37
  %v125 = vunpack.c.l.b16 %v38
  %v126 = vunpack.c.l.b16 %v39
  %v127 = vunpack.c.l.b16 %v40
  %v128 = vunpack.c.l.b16 %v41
  %v129 = vunpack.c.l.b16 %v42
  %v130 = vunpack.c.l.b16 %v43
  %v131 = vunpack.c.l.b16 %v44
  %v132 = vunpack.c.l.b16 %v45
  %v133 = vunpack.c.l.b16 %v46
  %v134 = vpack.c.b16 %v103, %v102
  %v135 = vpack.c.b16 %v105, %v104
  %v136 = vpack.c.b16 %v107, %v106
  %v137 = vpack.c.b16 %v109, %v108
  %v138 = vpack.c.b16 %v111, %v110
  %v139 = vpack.c.b16 %v113, %v112
  %v140 = vpack.c.b16 %v115, %v114
  %v141 = vpack.c.b16 %v117, %v116
  %v142 = vpack.c.b16 %v119, %v118
  %v143 = vpack.c.b16 %v121, %v120
  %v144 = vpack.c.b16 %v123, %v122
  %v145 = vpack.c.b16 %v125, %v124
  %v146 = vpack.c.b16 %v127, %v126
  %v147 = vpack.c.b16 %v129, %v128
  %v148 = vpack.c.b16 %v131, %v130
  %v149 = vpack.c.b16 %v133, %v132
  %v182 = vunpack.c.l.b16 %v47
  %v183 = vunpack.c.l.b16 %v48
  %v184 = vunpack.c.l.b16 %v49
  %v185 = vunpack.c.l.b16 %v50
  %v186 = vunpack.c.l.b16 %v51
  %v187 = vunpack.c.l.b16 %v52
  %v188 = vunpack.c.l.b16 %v53
  %v189 = vunpack.c.l.b16 %v54
  %v190 = vunpack.c.l.b16 %v55
  %v191 = vunpack.c.l.b16 %v56
  %v192 = vunpack.c.l.b16 %v57
  %v193 = vunpack.c.l.b16 %v58
  %v194 = vunpack.c.l.b16 %v59
  %v195 = vunpack.c.l.b16 %v60
  %v196 = vunpack.c.l.b16 %v61
  %v197 = vunpack.c.l.b16 %v62
  %v198 = vpack.c.b16 %v183, %v182
  %v199 = vpack.c.b16 %v185, %v184
  %v200 = vpack.c.b16 %v187, %v186
  %v201 = vpack.c.b16 %v189, %v188
  %v202 = vpack.c.b16 %v191, %v190
  %v203 = vpack.c.b16 %v193, %v192
  %v204 = vpack.c.b16 %v195, %v194
  %v205 = vpack.c.b16 %v197, %v196
  %214 = vmatprep.subr.bf16.mxu0 0
  %215 = vmatpush1.bf16.msra.mxu0 %v198
  %216 = vmatprep.subr.bf16.mxu0 0
  %217 = vmatpush1.bf16.msra.mxu0 %v199
  %218 = vmatprep.subr.bf16.mxu0 0
  %219 = vmatpush1.bf16.msra.mxu0 %v200
  %220 = vmatprep.subr.bf16.mxu0 0
  %221 = vmatpush1.bf16.msra.mxu0 %v201
  %222 = vmatprep.subr.bf16.mxu0 0
  %223 = vmatpush1.bf16.msra.mxu0 %v202
  %224 = vmatprep.subr.bf16.mxu0 0
  %225 = vmatpush1.bf16.msra.mxu0 %v203
  %226 = vmatprep.subr.bf16.mxu0 0
  %227 = vmatpush1.bf16.msra.mxu0 %v204
  %228 = vmatprep.subr.bf16.mxu0 0
  %229 = vmatpush1.bf16.msra.mxu0 %v205
  %230 = vmatprep.subr.bf16.mxu0 0
  %231 = vmatpush1.bf16.msra.mxu0 0
  %232 = vmatprep.subr.bf16.mxu0 0
  %233 = vmatpush1.bf16.msra.mxu0 0
  %234 = vmatprep.subr.bf16.mxu0 0
  %235 = vmatpush1.bf16.msra.mxu0 0
  %236 = vmatprep.subr.bf16.mxu0 0
  %237 = vmatpush1.bf16.msra.mxu0 0
  %238 = vmatprep.subr.bf16.mxu0 0
  %239 = vmatpush1.bf16.msra.mxu0 0
  %240 = vmatprep.subr.bf16.mxu0 0
  %241 = vmatpush1.bf16.msra.mxu0 0
  %242 = vmatprep.subr.bf16.mxu0 0
  %243 = vmatpush1.bf16.msra.mxu0 0
  %244 = vmatprep.subr.bf16.mxu0 0
  %245 = vmatpush1.bf16.msra.mxu0 0
  %246 = vmatprep.mubr.bf16.mxu0 0
  %247 = vmatmul.mubr.bf16.gmra.mrb[0].mxu0 %v134
  %v248 = vpop.f32.mrb[0].mxu0
  %v249 = vadd.f32 %v68, %v248
  %v250 = vpop.f32.mrb[0].mxu0
  %v251 = vpop.f32.mrb[0].mxu0
  %v252 = vadd.f32 %v68, %v251
  %v253 = vpop.f32.mrb[0].mxu0
  %254 = vmatprep.mubr.bf16.mxu0 0
  %255 = vmatmul.mubr.bf16.gmra.mrb[0].mxu0 %v135
  %v256 = vpop.f32.mrb[0].mxu0
  %v257 = vadd.f32 %v68, %v256
  %v258 = vpop.f32.mrb[0].mxu0
  %v259 = vpop.f32.mrb[0].mxu0
  %v260 = vadd.f32 %v68, %v259
  %v261 = vpop.f32.mrb[0].mxu0
  %262 = vmatprep.mubr.bf16.mxu0 0
  %263 = vmatmul.mubr.bf16.gmra.mrb[0].mxu0 %v136
  %v264 = vpop.f32.mrb[0].mxu0
  %v265 = vadd.f32 %v68, %v264
  %v266 = vpop.f32.mrb[0].mxu0
  %v267 = vpop.f32.mrb[0].mxu0
  %v268 = vadd.f32 %v68, %v267
  %v269 = vpop.f32.mrb[0].mxu0
  %270 = vmatprep.mubr.bf16.mxu0 0
  %271 = vmatmul.mubr.bf16.gmra.mrb[0].mxu0 %v137
  %v272 = vpop.f32.mrb[0].mxu0
  %v273 = vadd.f32 %v68, %v272
  %v274 = vpop.f32.mrb[0].mxu0
  %v275 = vpop.f32.mrb[0].mxu0
  %v276 = vadd.f32 %v68, %v275
  %v277 = vpop.f32.mrb[0].mxu0
  %278 = vmatprep.mubr.bf16.mxu0 0
  %279 = vmatmul.mubr.bf16.gmra.mrb[0].mxu0 %v138
  %v280 = vpop.f32.mrb[0].mxu0
  %v281 = vadd.f32 %v68, %v280
  %v282 = vpop.f32.mrb[0].mxu0
  %v283 = vpop.f32.mrb[0].mxu0
  %v284 = vadd.f32 %v68, %v283
  %v285 = vpop.f32.mrb[0].mxu0
  %286 = vmatprep.mubr.bf16.mxu0 0
  %287 = vmatmul.mubr.bf16.gmra.mrb[0].mxu0 %v139
  %v288 = vpop.f32.mrb[0].mxu0
  %v289 = vadd.f32 %v68, %v288
  %v290 = vpop.f32.mrb[0].mxu0
  %v291 = vpop.f32.mrb[0].mxu0
  %v292 = vadd.f32 %v68, %v291
  %v293 = vpop.f32.mrb[0].mxu0
  %294 = vmatprep.mubr.bf16.mxu0 0
  %295 = vmatmul.mubr.bf16.gmra.mrb[0].mxu0 %v140
  %v296 = vpop.f32.mrb[0].mxu0
  %v297 = vadd.f32 %v68, %v296
  %v298 = vpop.f32.mrb[0].mxu0
  %v299 = vpop.f32.mrb[0].mxu0
  %v300 = vadd.f32 %v68, %v299
  %v301 = vpop.f32.mrb[0].mxu0
  %302 = vmatprep.mubr.bf16.mxu0 0
  %303 = vmatmul.mubr.bf16.gmra.mrb[0].mxu0 %v141
  %v304 = vpop.f32.mrb[0].mxu0
  %v305 = vadd.f32 %v68, %v304
  %v306 = vpop.f32.mrb[0].mxu0
  %v307 = vpop.f32.mrb[0].mxu0
  %v308 = vadd.f32 %v68, %v307
  %v309 = vpop.f32.mrb[0].mxu0
  %310 = vmatprep.mubr.bf16.mxu0 0
  %311 = vmatmul.mubr.bf16.gmra.mrb[0].mxu0 %v142
  %v312 = vpop.f32.mrb[0].mxu0
  %v313 = vadd.f32 %v68, %v312
  %v314 = vpop.f32.mrb[0].mxu0
  %v315 = vpop.f32.mrb[0].mxu0
  %v316 = vadd.f32 %v68, %v315
  %v317 = vpop.f32.mrb[0].mxu0
  %318 = vmatprep.mubr.bf16.mxu0 0
  %319 = vmatmul.mubr.bf16.gmra.mrb[0].mxu0 %v143
  %v320 = vpop.f32.mrb[0].mxu0
  %v321 = vadd.f32 %v68, %v320
  %v322 = vpop.f32.mrb[0].mxu0
  %v323 = vpop.f32.mrb[0].mxu0
  %v324 = vadd.f32 %v68, %v323
  %v325 = vpop.f32.mrb[0].mxu0
  %326 = vmatprep.mubr.bf16.mxu0 0
  %327 = vmatmul.mubr.bf16.gmra.mrb[0].mxu0 %v144
  %v328 = vpop.f32.mrb[0].mxu0
  %v329 = vadd.f32 %v68, %v328
  %v330 = vpop.f32.mrb[0].mxu0
  %v331 = vpop.f32.mrb[0].mxu0
  %v332 = vadd.f32 %v68, %v331
  %v333 = vpop.f32.mrb[0].mxu0
  %334 = vmatprep.mubr.bf16.mxu0 0
  %335 = vmatmul.mubr.bf16.gmra.mrb[0].mxu0 %v145
  %v336 = vpop.f32.mrb[0].mxu0
  %v337 = vadd.f32 %v68, %v336
  %v338 = vpop.f32.mrb[0].mxu0
  %v339 = vpop.f32.mrb[0].mxu0
  %v340 = vadd.f32 %v68, %v339
  %v341 = vpop.f32.mrb[0].mxu0
  %342 = vmatprep.mubr.bf16.mxu0 0
  %343 = vmatmul.mubr.bf16.gmra.mrb[0].mxu0 %v146
  %v344 = vpop.f32.mrb[0].mxu0
  %v345 = vadd.f32 %v68, %v344
  %v346 = vpop.f32.mrb[0].mxu0
  %v347 = vpop.f32.mrb[0].mxu0
  %v348 = vadd.f32 %v68, %v347
  %v349 = vpop.f32.mrb[0].mxu0
  %350 = vmatprep.mubr.bf16.mxu0 0
  %351 = vmatmul.mubr.bf16.gmra.mrb[0].mxu0 %v147
  %v352 = vpop.f32.mrb[0].mxu0
  %v353 = vadd.f32 %v68, %v352
  %v354 = vpop.f32.mrb[0].mxu0
  %v355 = vpop.f32.mrb[0].mxu0
  %v356 = vadd.f32 %v68, %v355
  %v357 = vpop.f32.mrb[0].mxu0
  %358 = vmatprep.mubr.bf16.mxu0 0
  %359 = vmatmul.mubr.bf16.gmra.mrb[0].mxu0 %v148
  %v360 = vpop.f32.mrb[0].mxu0
  %v361 = vadd.f32 %v68, %v360
  %v362 = vpop.f32.mrb[0].mxu0
  %v363 = vpop.f32.mrb[0].mxu0
  %v364 = vadd.f32 %v68, %v363
  %v365 = vpop.f32.mrb[0].mxu0
  %366 = vmatprep.mubr.bf16.mxu0 0
  %367 = vmatmul.mubr.bf16.gmra.mrb[0].mxu0 %v149
  %v368 = vpop.f32.mrb[0].mxu0
  %v369 = vadd.f32 %v68, %v368
  %v370 = vpop.f32.mrb[0].mxu0
  %v371 = vpop.f32.mrb[0].mxu0
  %v372 = vadd.f32 %v68, %v371
  %v373 = vpop.f32.mrb[0].mxu0
  %374 = vdwg.mxu0
  %v375 = vpack.c.bf16 %v252, %v249
  %v376 = vpack.c.bf16 %v260, %v257
  %v377 = vpack.c.bf16 %v268, %v265
  %v378 = vpack.c.bf16 %v276, %v273
  %v379 = vpack.c.bf16 %v284, %v281
  %v380 = vpack.c.bf16 %v292, %v289
  %v381 = vpack.c.bf16 %v300, %v297
  %v382 = vpack.c.bf16 %v308, %v305
  %v383 = vpack.c.bf16 %v316, %v313
  %v384 = vpack.c.bf16 %v324, %v321
  %v385 = vpack.c.bf16 %v332, %v329
  %v386 = vpack.c.bf16 %v340, %v337
  %v387 = vpack.c.bf16 %v348, %v345
  %v388 = vpack.c.bf16 %v356, %v353
  %v389 = vpack.c.bf16 %v364, %v361
  %v390 = vpack.c.bf16 %v372, %v369
  %v407 = vunpack.c.l.b16 %v375
  %v408 = vunpack.c.h.b16 %v375
  %v409 = vunpack.c.l.b16 %v376
  %v410 = vunpack.c.h.b16 %v376
  %v411 = vunpack.c.l.b16 %v377
  %v412 = vunpack.c.h.b16 %v377
  %v413 = vunpack.c.l.b16 %v378
  %v414 = vunpack.c.h.b16 %v378
  %v415 = vunpack.c.l.b16 %v379
  %v416 = vunpack.c.h.b16 %v379
  %v417 = vunpack.c.l.b16 %v380
  %v418 = vunpack.c.h.b16 %v380
  %v419 = vunpack.c.l.b16 %v381
  %v420 = vunpack.c.h.b16 %v381
  %v421 = vunpack.c.l.b16 %v382
  %v422 = vunpack.c.h.b16 %v382
  %v423 = vunpack.c.l.b16 %v383
  %v424 = vunpack.c.h.b16 %v383
  %v425 = vunpack.c.l.b16 %v384
  %v426 = vunpack.c.h.b16 %v384
  %v427 = vunpack.c.l.b16 %v385
  %v428 = vunpack.c.h.b16 %v385
  %v429 = vunpack.c.l.b16 %v386
  %v430 = vunpack.c.h.b16 %v386
  %v431 = vunpack.c.l.b16 %v387
  %v432 = vunpack.c.h.b16 %v387
  %v433 = vunpack.c.l.b16 %v388
  %v434 = vunpack.c.h.b16 %v388
  %v435 = vunpack.c.l.b16 %v389
  %v436 = vunpack.c.h.b16 %v389
  %v437 = vunpack.c.l.b16 %v390
  %v438 = vunpack.c.h.b16 %v390
  %v439 = vpack.c.b16 %v407, %v407
  %v440 = vpack.c.b16 %v408, %v408
  %v441 = vpack.c.b16 %v409, %v409
  %v442 = vpack.c.b16 %v410, %v410
  %v443 = vpack.c.b16 %v411, %v411
  %v444 = vpack.c.b16 %v412, %v412
  %v445 = vpack.c.b16 %v413, %v413
  %v446 = vpack.c.b16 %v414, %v414
  %v447 = vpack.c.b16 %v415, %v415
  %v448 = vpack.c.b16 %v416, %v416
  %v449 = vpack.c.b16 %v417, %v417
  %v450 = vpack.c.b16 %v418, %v418
  %v451 = vpack.c.b16 %v419, %v419
  %v452 = vpack.c.b16 %v420, %v420
  %v453 = vpack.c.b16 %v421, %v421
  %v454 = vpack.c.b16 %v422, %v422
  %v455 = vpack.c.b16 %v423, %v423
  %v456 = vpack.c.b16 %v424, %v424
  %v457 = vpack.c.b16 %v425, %v425
  %v458 = vpack.c.b16 %v426, %v426
  %v459 = vpack.c.b16 %v427, %v427
  %v460 = vpack.c.b16 %v428, %v428
  %v461 = vpack.c.b16 %v429, %v429
  %v462 = vpack.c.b16 %v430, %v430
  %v463 = vpack.c.b16 %v431, %v431
  %v464 = vpack.c.b16 %v432, %v432
  %v465 = vpack.c.b16 %v433, %v433
  %v466 = vpack.c.b16 %v434, %v434
  %v467 = vpack.c.b16 %v435, %v435
  %v468 = vpack.c.b16 %v436, %v436
  %v469 = vpack.c.b16 %v437, %v437
  %v470 = vpack.c.b16 %v438, %v438
  %503 = vst [vmem:[%s3] sm:$0xf] %v439
  %504 = vst [vmem:[%s3 + $0x4] sm:$0xf] %v440
  %505 = vst [vmem:[%s3 + $0x8] sm:$0xf] %v441
  %506 = vst [vmem:[%s3 + $0xc] sm:$0xf] %v442
  %507 = vst [vmem:[%s3 + $0x10] sm:$0xf] %v443
  %508 = vst [vmem:[%s3 + $0x14] sm:$0xf] %v444
  %509 = vst [vmem:[%s3 + $0x18] sm:$0xf] %v445
  %510 = vst [vmem:[%s3 + $0x1c] sm:$0xf] %v446
  %511 = vst [vmem:[%s3 + $0x20] sm:$0xf] %v447
  %512 = vst [vmem:[%s3 + $0x24] sm:$0xf] %v448
  %513 = vst [vmem:[%s3 + $0x28] sm:$0xf] %v449
  %514 = vst [vmem:[%s3 + $0x2c] sm:$0xf] %v450
  %515 = vst [vmem:[%s3 + $0x30] sm:$0xf] %v451
  %516 = vst [vmem:[%s3 + $0x34] sm:$0xf] %v452
  %517 = vst [vmem:[%s3 + $0x38] sm:$0xf] %v453
  %518 = vst [vmem:[%s3 + $0x3c] sm:$0xf] %v454
  %519 = vst [vmem:[%s3 + $0x40] sm:$0xf] %v455
  %520 = vst [vmem:[%s3 + $0x44] sm:$0xf] %v456
  %521 = vst [vmem:[%s3 + $0x48] sm:$0xf] %v457
  %522 = vst [vmem:[%s3 + $0x4c] sm:$0xf] %v458
  %523 = vst [vmem:[%s3 + $0x50] sm:$0xf] %v459
  %524 = vst [vmem:[%s3 + $0x54] sm:$0xf] %v460
  %525 = vst [vmem:[%s3 + $0x58] sm:$0xf] %v461
  %526 = vst [vmem:[%s3 + $0x5c] sm:$0xf] %v462
  %527 = vst [vmem:[%s3 + $0x60] sm:$0xf] %v463
  %528 = vst [vmem:[%s3 + $0x64] sm:$0xf] %v464
  %529 = vst [vmem:[%s3 + $0x68] sm:$0xf] %v465
  %530 = vst [vmem:[%s3 + $0x6c] sm:$0xf] %v466
  %531 = vst [vmem:[%s3 + $0x70] sm:$0xf] %v467
  %532 = vst [vmem:[%s3 + $0x74] sm:$0xf] %v468
  %533 = vst [vmem:[%s3 + $0x78] sm:$0xf] %v469
  %534 = vst [vmem:[%s3 + $0x7c] sm:$0xf] %v470
  // Predicated region
  $region14: #{attention_stage_forward.16} parent=0 // pred_check
    _
  $region15: #{attention_stage_forward.16} parent=0 // pred_check_branch
    %536 = sbr.rel (0) target = $region17
  $region16: #{attention_stage_forward.16} parent=0 // pred_region
    _
  $region17: #{attention_stage_forward.16} parent=0 // pred_fallthru
    _
  // Predicated region
  $region18: #{attention_stage_forward.16} parent=0 // pred_check
    _
  $region19: #{attention_stage_forward.16} parent=0 // pred_check_branch
    %538 = sbr.rel (0) target = $region21
  $region20: #{attention_stage_forward.16} parent=0 // pred_region
    _
  $region21: #{attention_stage_forward.16} parent=0 // pred_fallthru
    _

// kernel: attention_stage_forward.18
$region0: #{attention_stage_forward.18}
  #allocation0 [shape = 'u32[]', space=smem, size = 0x4, offset = 0x4, fixed_abs, tag = 'smem constant byte address 0x4 - core index']
  #allocation1 [shape = 'u32[144,128]{1,0:T(1,128)}', space=vmem, size = 0x12000, scoped, tag = 'internal scratch']
  %s0 = inlined_call_operand.vmem [shape: bf16[256,128], index: 0, kind: input, shape index: {}]
  %s1 = inlined_call_operand.vmem [shape: bf16[128,128], index: 1, kind: input, shape index: {}]
  %s2 = inlined_call_operand.vmem [shape: f32[1,128], index: 2, kind: input, shape index: {}]
  %s3 = inlined_call_operand.vmem [shape: bf16[256,128], index: 3, kind: input, shape index: {}]
  %s4 = inlined_call_operand.vmem [shape: bf16[256,128], index: 4, kind: output, shape index: {}]
  %s5 = sld [smem:[#allocation0]]
  $region26: #{attention_stage_forward.18} parent=0
    _
  %s7 = ssub.s32 1, %s5
  %s8 = scalar_select 0, %s7, %s5
  // Predicated region
  $region2: #{attention_stage_forward.18} parent=0 // pred_check
    _
  $region3: #{attention_stage_forward.18} parent=0 // pred_check_branch
    %10 = sbr.rel (0) target = $region5
  $region4: #{attention_stage_forward.18} parent=0 // pred_region
    _
  $region5: #{attention_stage_forward.18} parent=0 // pred_fallthru
    _
  // Predicated region
  $region6: #{attention_stage_forward.18} parent=0 // pred_check
    _
  $region7: #{attention_stage_forward.18} parent=0 // pred_check_branch
    %12 = sbr.rel (0) target = $region9
  $region8: #{attention_stage_forward.18} parent=0 // pred_region
    _
  $region9: #{attention_stage_forward.18} parent=0 // pred_fallthru
    _
  // Predicated region
  $region10: #{attention_stage_forward.18} parent=0 // pred_check
    _
  $region11: #{attention_stage_forward.18} parent=0 // pred_check_branch
    %14 = sbr.rel (0) target = $region13
  $region12: #{attention_stage_forward.18} parent=0 // pred_region
    _
  $region13: #{attention_stage_forward.18} parent=0 // pred_fallthru
    _
  // Predicated region
  $region14: #{attention_stage_forward.18} parent=0 // pred_check
    _
  $region15: #{attention_stage_forward.18} parent=0 // pred_check_branch
    %16 = sbr.rel (0) target = $region17
  $region16: #{attention_stage_forward.18} parent=0 // pred_region
    _
  $region17: #{attention_stage_forward.18} parent=0 // pred_fallthru
    _
  %v18 = vld [vmem:[%s0] sm:$0xf]
  %v19 = vld [vmem:[%s0 + $0x4] sm:$0xf]
  %v20 = vld [vmem:[%s0 + $0x8] sm:$0xf]
  %v21 = vld [vmem:[%s0 + $0xc] sm:$0xf]
  %v22 = vld [vmem:[%s0 + $0x10] sm:$0xf]
  %v23 = vld [vmem:[%s0 + $0x14] sm:$0xf]
  %v24 = vld [vmem:[%s0 + $0x18] sm:$0xf]
  %v25 = vld [vmem:[%s0 + $0x1c] sm:$0xf]
  %v26 = vld [vmem:[%s0 + $0x20] sm:$0xf]
  %v27 = vld [vmem:[%s0 + $0x24] sm:$0xf]
  %v28 = vld [vmem:[%s0 + $0x28] sm:$0xf]
  %v29 = vld [vmem:[%s0 + $0x2c] sm:$0xf]
  %v30 = vld [vmem:[%s0 + $0x30] sm:$0xf]
  %v31 = vld [vmem:[%s0 + $0x34] sm:$0xf]
  %v32 = vld [vmem:[%s0 + $0x38] sm:$0xf]
  %v33 = vld [vmem:[%s0 + $0x3c] sm:$0xf]
  %v34 = vld [vmem:[%s0 + $0x40] sm:$0xf]
  %v35 = vld [vmem:[%s0 + $0x44] sm:$0xf]
  %v36 = vld [vmem:[%s0 + $0x48] sm:$0xf]
  %v37 = vld [vmem:[%s0 + $0x4c] sm:$0xf]
  %v38 = vld [vmem:[%s0 + $0x50] sm:$0xf]
  %v39 = vld [vmem:[%s0 + $0x54] sm:$0xf]
  %v40 = vld [vmem:[%s0 + $0x58] sm:$0xf]
  %v41 = vld [vmem:[%s0 + $0x5c] sm:$0xf]
  %v42 = vld [vmem:[%s0 + $0x60] sm:$0xf]
  %v43 = vld [vmem:[%s0 + $0x64] sm:$0xf]
  %v44 = vld [vmem:[%s0 + $0x68] sm:$0xf]
  %v45 = vld [vmem:[%s0 + $0x6c] sm:$0xf]
  %v46 = vld [vmem:[%s0 + $0x70] sm:$0xf]
  %v47 = vld [vmem:[%s0 + $0x74] sm:$0xf]
  %v48 = vld [vmem:[%s0 + $0x78] sm:$0xf]
  %v49 = vld [vmem:[%s0 + $0x7c] sm:$0xf]
  %v50 = vld [vmem:[%s1] sm:$0xf]
  %v51 = vld [vmem:[%s1 + $0x4] sm:$0xf]
  %v52 = vld [vmem:[%s1 + $0x8] sm:$0xf]
  %v53 = vld [vmem:[%s1 + $0xc] sm:$0xf]
  %v54 = vld [vmem:[%s1 + $0x10] sm:$0xf]
  %v55 = vld [vmem:[%s1 + $0x14] sm:$0xf]
  %v56 = vld [vmem:[%s1 + $0x18] sm:$0xf]
  %v57 = vld [vmem:[%s1 + $0x1c] sm:$0xf]
  %v58 = vld [vmem:[%s1 + $0x20] sm:$0xf]
  %v59 = vld [vmem:[%s1 + $0x24] sm:$0xf]
  %v60 = vld [vmem:[%s1 + $0x28] sm:$0xf]
  %v61 = vld [vmem:[%s1 + $0x2c] sm:$0xf]
  %v62 = vld [vmem:[%s1 + $0x30] sm:$0xf]
  %v63 = vld [vmem:[%s1 + $0x34] sm:$0xf]
  %v64 = vld [vmem:[%s1 + $0x38] sm:$0xf]
  %v65 = vld [vmem:[%s1 + $0x3c] sm:$0xf]
  %v66 = vld [vmem:[%s2] sm:$0x1]
  %v68 = vlaneseq
  %v69 = vshrl.u32 %v68, 7
  %v70 = vsub.s32 0, %v69
  %v71 = vrot.slane %v66, %v70
  %v105 = vunpack.c.l.b16 %v18
  %v106 = vunpack.c.l.b16 %v19
  %v107 = vunpack.c.l.b16 %v20
  %v108 = vunpack.c.l.b16 %v21
  %v109 = vunpack.c.l.b16 %v22
  %v110 = vunpack.c.l.b16 %v23
  %v111 = vunpack.c.l.b16 %v24
  %v112 = vunpack.c.l.b16 %v25
  %v113 = vunpack.c.l.b16 %v26
  %v114 = vunpack.c.l.b16 %v27
  %v115 = vunpack.c.l.b16 %v28
  %v116 = vunpack.c.l.b16 %v29
  %v117 = vunpack.c.l.b16 %v30
  %v118 = vunpack.c.l.b16 %v31
  %v119 = vunpack.c.l.b16 %v32
  %v120 = vunpack.c.l.b16 %v33
  %v121 = vunpack.c.l.b16 %v34
  %v122 = vunpack.c.l.b16 %v35
  %v123 = vunpack.c.l.b16 %v36
  %v124 = vunpack.c.l.b16 %v37
  %v125 = vunpack.c.l.b16 %v38
  %v126 = vunpack.c.l.b16 %v39
  %v127 = vunpack.c.l.b16 %v40
  %v128 = vunpack.c.l.b16 %v41
  %v129 = vunpack.c.l.b16 %v42
  %v130 = vunpack.c.l.b16 %v43
  %v131 = vunpack.c.l.b16 %v44
  %v132 = vunpack.c.l.b16 %v45
  %v133 = vunpack.c.l.b16 %v46
  %v134 = vunpack.c.l.b16 %v47
  %v135 = vunpack.c.l.b16 %v48
  %v136 = vunpack.c.l.b16 %v49
  %v137 = vpack.c.b16 %v106, %v105
  %v138 = vpack.c.b16 %v108, %v107
  %v139 = vpack.c.b16 %v110, %v109
  %v140 = vpack.c.b16 %v112, %v111
  %v141 = vpack.c.b16 %v114, %v113
  %v142 = vpack.c.b16 %v116, %v115
  %v143 = vpack.c.b16 %v118, %v117
  %v144 = vpack.c.b16 %v120, %v119
  %v145 = vpack.c.b16 %v122, %v121
  %v146 = vpack.c.b16 %v124, %v123
  %v147 = vpack.c.b16 %v126, %v125
  %v148 = vpack.c.b16 %v128, %v127
  %v149 = vpack.c.b16 %v130, %v129
  %v150 = vpack.c.b16 %v132, %v131
  %v151 = vpack.c.b16 %v134, %v133
  %v152 = vpack.c.b16 %v136, %v135
  %v185 = vunpack.c.l.b16 %v50
  %v186 = vunpack.c.l.b16 %v51
  %v187 = vunpack.c.l.b16 %v52
  %v188 = vunpack.c.l.b16 %v53
  %v189 = vunpack.c.l.b16 %v54
  %v190 = vunpack.c.l.b16 %v55
  %v191 = vunpack.c.l.b16 %v56
  %v192 = vunpack.c.l.b16 %v57
  %v193 = vunpack.c.l.b16 %v58
  %v194 = vunpack.c.l.b16 %v59
  %v195 = vunpack.c.l.b16 %v60
  %v196 = vunpack.c.l.b16 %v61
  %v197 = vunpack.c.l.b16 %v62
  %v198 = vunpack.c.l.b16 %v63
  %v199 = vunpack.c.l.b16 %v64
  %v200 = vunpack.c.l.b16 %v65
  %v201 = vpack.c.b16 %v186, %v185
  %v202 = vpack.c.b16 %v188, %v187
  %v203 = vpack.c.b16 %v190, %v189
  %v204 = vpack.c.b16 %v192, %v191
  %v205 = vpack.c.b16 %v194, %v193
  %v206 = vpack.c.b16 %v196, %v195
  %v207 = vpack.c.b16 %v198, %v197
  %v208 = vpack.c.b16 %v200, %v199
  %217 = vmatprep.subr.bf16.mxu0 0
  %218 = vmatpush1.bf16.msra.mxu0 %v201
  %219 = vmatprep.subr.bf16.mxu0 0
  %220 = vmatpush1.bf16.msra.mxu0 %v202
  %221 = vmatprep.subr.bf16.mxu0 0
  %222 = vmatpush1.bf16.msra.mxu0 %v203
  %223 = vmatprep.subr.bf16.mxu0 0
  %224 = vmatpush1.bf16.msra.mxu0 %v204
  %225 = vmatprep.subr.bf16.mxu0 0
  %226 = vmatpush1.bf16.msra.mxu0 %v205
  %227 = vmatprep.subr.bf16.mxu0 0
  %228 = vmatpush1.bf16.msra.mxu0 %v206
  %229 = vmatprep.subr.bf16.mxu0 0
  %230 = vmatpush1.bf16.msra.mxu0 %v207
  %231 = vmatprep.subr.bf16.mxu0 0
  %232 = vmatpush1.bf16.msra.mxu0 %v208
  %233 = vmatprep.subr.bf16.mxu0 0
  %234 = vmatpush1.bf16.msra.mxu0 0
  %235 = vmatprep.subr.bf16.mxu0 0
  %236 = vmatpush1.bf16.msra.mxu0 0
  %237 = vmatprep.subr.bf16.mxu0 0
  %238 = vmatpush1.bf16.msra.mxu0 0
  %239 = vmatprep.subr.bf16.mxu0 0
  %240 = vmatpush1.bf16.msra.mxu0 0
  %241 = vmatprep.subr.bf16.mxu0 0
  %242 = vmatpush1.bf16.msra.mxu0 0
  %243 = vmatprep.subr.bf16.mxu0 0
  %244 = vmatpush1.bf16.msra.mxu0 0
  %245 = vmatprep.subr.bf16.mxu0 0
  %246 = vmatpush1.bf16.msra.mxu0 0
  %247 = vmatprep.subr.bf16.mxu0 0
  %248 = vmatpush1.bf16.msra.mxu0 0
  %249 = vmatprep.mubr.bf16.mxu0 0
  %250 = vmatmul.mubr.bf16.gmra.mrb[0].mxu0 %v137
  %v251 = vpop.f32.mrb[0].mxu0
  %v252 = vadd.f32 %v71, %v251
  %v253 = vpop.f32.mrb[0].mxu0
  %v254 = vpop.f32.mrb[0].mxu0
  %v255 = vadd.f32 %v71, %v254
  %v256 = vpop.f32.mrb[0].mxu0
  %257 = vmatprep.mubr.bf16.mxu0 0
  %258 = vmatmul.mubr.bf16.gmra.mrb[0].mxu0 %v138
  %v259 = vpop.f32.mrb[0].mxu0
  %v260 = vadd.f32 %v71, %v259
  %v261 = vpop.f32.mrb[0].mxu0
  %v262 = vpop.f32.mrb[0].mxu0
  %v263 = vadd.f32 %v71, %v262
  %v264 = vpop.f32.mrb[0].mxu0
  %265 = vmatprep.mubr.bf16.mxu0 0
  %266 = vmatmul.mubr.bf16.gmra.mrb[0].mxu0 %v139
  %v267 = vpop.f32.mrb[0].mxu0
  %v268 = vadd.f32 %v71, %v267
  %v269 = vpop.f32.mrb[0].mxu0
  %v270 = vpop.f32.mrb[0].mxu0
  %v271 = vadd.f32 %v71, %v270
  %v272 = vpop.f32.mrb[0].mxu0
  %273 = vmatprep.mubr.bf16.mxu0 0
  %274 = vmatmul.mubr.bf16.gmra.mrb[0].mxu0 %v140
  %v275 = vpop.f32.mrb[0].mxu0
  %v276 = vadd.f32 %v71, %v275
  %v277 = vpop.f32.mrb[0].mxu0
  %v278 = vpop.f32.mrb[0].mxu0
  %v279 = vadd.f32 %v71, %v278
  %v280 = vpop.f32.mrb[0].mxu0
  %281 = vmatprep.mubr.bf16.mxu0 0
  %282 = vmatmul.mubr.bf16.gmra.mrb[0].mxu0 %v141
  %v283 = vpop.f32.mrb[0].mxu0
  %v284 = vadd.f32 %v71, %v283
  %v285 = vpop.f32.mrb[0].mxu0
  %v286 = vpop.f32.mrb[0].mxu0
  %v287 = vadd.f32 %v71, %v286
  %v288 = vpop.f32.mrb[0].mxu0
  %289 = vmatprep.mubr.bf16.mxu0 0
  %290 = vmatmul.mubr.bf16.gmra.mrb[0].mxu0 %v142
  %v291 = vpop.f32.mrb[0].mxu0
  %v292 = vadd.f32 %v71, %v291
  %v293 = vpop.f32.mrb[0].mxu0
  %v294 = vpop.f32.mrb[0].mxu0
  %v295 = vadd.f32 %v71, %v294
  %v296 = vpop.f32.mrb[0].mxu0
  %297 = vmatprep.mubr.bf16.mxu0 0
  %298 = vmatmul.mubr.bf16.gmra.mrb[0].mxu0 %v143
  %v299 = vpop.f32.mrb[0].mxu0
  %v300 = vadd.f32 %v71, %v299
  %v301 = vpop.f32.mrb[0].mxu0
  %v302 = vpop.f32.mrb[0].mxu0
  %v303 = vadd.f32 %v71, %v302
  %v304 = vpop.f32.mrb[0].mxu0
  %305 = vmatprep.mubr.bf16.mxu0 0
  %306 = vmatmul.mubr.bf16.gmra.mrb[0].mxu0 %v144
  %v307 = vpop.f32.mrb[0].mxu0
  %v308 = vadd.f32 %v71, %v307
  %v309 = vpop.f32.mrb[0].mxu0
  %v310 = vpop.f32.mrb[0].mxu0
  %v311 = vadd.f32 %v71, %v310
  %v312 = vpop.f32.mrb[0].mxu0
  %313 = vmatprep.mubr.bf16.mxu0 0
  %314 = vmatmul.mubr.bf16.gmra.mrb[0].mxu0 %v145
  %v315 = vpop.f32.mrb[0].mxu0
  %v316 = vadd.f32 %v71, %v315
  %v317 = vpop.f32.mrb[0].mxu0
  %v318 = vpop.f32.mrb[0].mxu0
  %v319 = vadd.f32 %v71, %v318
  %v320 = vpop.f32.mrb[0].mxu0
  %321 = vmatprep.mubr.bf16.mxu0 0
  %322 = vmatmul.mubr.bf16.gmra.mrb[0].mxu0 %v146
  %v323 = vpop.f32.mrb[0].mxu0
  %v324 = vadd.f32 %v71, %v323
  %v325 = vpop.f32.mrb[0].mxu0
  %v326 = vpop.f32.mrb[0].mxu0
  %v327 = vadd.f32 %v71, %v326
  %v328 = vpop.f32.mrb[0].mxu0
  %329 = vmatprep.mubr.bf16.mxu0 0
  %330 = vmatmul.mubr.bf16.gmra.mrb[0].mxu0 %v147
  %v331 = vpop.f32.mrb[0].mxu0
  %v332 = vadd.f32 %v71, %v331
  %v333 = vpop.f32.mrb[0].mxu0
  %v334 = vpop.f32.mrb[0].mxu0
  %v335 = vadd.f32 %v71, %v334
  %v336 = vpop.f32.mrb[0].mxu0
  %337 = vmatprep.mubr.bf16.mxu0 0
  %338 = vmatmul.mubr.bf16.gmra.mrb[0].mxu0 %v148
  %v339 = vpop.f32.mrb[0].mxu0
  %v340 = vadd.f32 %v71, %v339
  %v341 = vpop.f32.mrb[0].mxu0
  %v342 = vpop.f32.mrb[0].mxu0
  %v343 = vadd.f32 %v71, %v342
  %v344 = vpop.f32.mrb[0].mxu0
  %345 = vmatprep.mubr.bf16.mxu0 0
  %346 = vmatmul.mubr.bf16.gmra.mrb[0].mxu0 %v149
  %v347 = vpop.f32.mrb[0].mxu0
  %v348 = vadd.f32 %v71, %v347
  %v349 = vpop.f32.mrb[0].mxu0
  %v350 = vpop.f32.mrb[0].mxu0
  %v351 = vadd.f32 %v71, %v350
  %v352 = vpop.f32.mrb[0].mxu0
  %353 = vmatprep.mubr.bf16.mxu0 0
  %354 = vmatmul.mubr.bf16.gmra.mrb[0].mxu0 %v150
  %v355 = vpop.f32.mrb[0].mxu0
  %v356 = vadd.f32 %v71, %v355
  %v357 = vpop.f32.mrb[0].mxu0
  %v358 = vpop.f32.mrb[0].mxu0
  %v359 = vadd.f32 %v71, %v358
  %v360 = vpop.f32.mrb[0].mxu0
  %361 = vmatprep.mubr.bf16.mxu0 0
  %362 = vmatmul.mubr.bf16.gmra.mrb[0].mxu0 %v151
  %v363 = vpop.f32.mrb[0].mxu0
  %v364 = vadd.f32 %v71, %v363
  %v365 = vpop.f32.mrb[0].mxu0
  %v366 = vpop.f32.mrb[0].mxu0
  %v367 = vadd.f32 %v71, %v366
  %v368 = vpop.f32.mrb[0].mxu0
  %369 = vmatprep.mubr.bf16.mxu0 0
  %370 = vmatmul.mubr.bf16.gmra.mrb[0].mxu0 %v152
  %v371 = vpop.f32.mrb[0].mxu0
  %v372 = vadd.f32 %v71, %v371
  %v373 = vpop.f32.mrb[0].mxu0
  %v374 = vpop.f32.mrb[0].mxu0
  %v375 = vadd.f32 %v71, %v374
  %v376 = vpop.f32.mrb[0].mxu0
  %377 = vdwg.mxu0
  %v378 = vld [vmem:[%s3] sm:$0xf]
  %v379 = vld [vmem:[%s3 + $0x4] sm:$0xf]
  %v380 = vld [vmem:[%s3 + $0x8] sm:$0xf]
  %v381 = vld [vmem:[%s3 + $0xc] sm:$0xf]
  %v382 = vld [vmem:[%s3 + $0x10] sm:$0xf]
  %v383 = vld [vmem:[%s3 + $0x14] sm:$0xf]
  %v384 = vld [vmem:[%s3 + $0x18] sm:$0xf]
  %v385 = vld [vmem:[%s3 + $0x1c] sm:$0xf]
  %v386 = vld [vmem:[%s3 + $0x20] sm:$0xf]
  %v387 = vld [vmem:[%s3 + $0x24] sm:$0xf]
  %v388 = vld [vmem:[%s3 + $0x28] sm:$0xf]
  %v389 = vld [vmem:[%s3 + $0x2c] sm:$0xf]
  %v390 = vld [vmem:[%s3 + $0x30] sm:$0xf]
  %v391 = vld [vmem:[%s3 + $0x34] sm:$0xf]
  %v392 = vld [vmem:[%s3 + $0x38] sm:$0xf]
  %v393 = vld [vmem:[%s3 + $0x3c] sm:$0xf]
  %v394 = vld [vmem:[%s3 + $0x40] sm:$0xf]
  %v395 = vld [vmem:[%s3 + $0x44] sm:$0xf]
  %v396 = vld [vmem:[%s3 + $0x48] sm:$0xf]
  %v397 = vld [vmem:[%s3 + $0x4c] sm:$0xf]
  %v398 = vld [vmem:[%s3 + $0x50] sm:$0xf]
  %v399 = vld [vmem:[%s3 + $0x54] sm:$0xf]
  %v400 = vld [vmem:[%s3 + $0x58] sm:$0xf]
  %v401 = vld [vmem:[%s3 + $0x5c] sm:$0xf]
  %v402 = vld [vmem:[%s3 + $0x60] sm:$0xf]
  %v403 = vld [vmem:[%s3 + $0x64] sm:$0xf]
  %v404 = vld [vmem:[%s3 + $0x68] sm:$0xf]
  %v405 = vld [vmem:[%s3 + $0x6c] sm:$0xf]
  %v406 = vld [vmem:[%s3 + $0x70] sm:$0xf]
  %v407 = vld [vmem:[%s3 + $0x74] sm:$0xf]
  %v408 = vld [vmem:[%s3 + $0x78] sm:$0xf]
  %v409 = vld [vmem:[%s3 + $0x7c] sm:$0xf]
  %v410 = vunpack.c.l.bf16 %v378
  %v411 = vunpack.c.l.bf16 %v379
  %v412 = vunpack.c.l.bf16 %v380
  %v413 = vunpack.c.l.bf16 %v381
  %v414 = vunpack.c.l.bf16 %v382
  %v415 = vunpack.c.l.bf16 %v383
  %v416 = vunpack.c.l.bf16 %v384
  %v417 = vunpack.c.l.bf16 %v385
  %v418 = vunpack.c.l.bf16 %v386
  %v419 = vunpack.c.l.bf16 %v387
  %v420 = vunpack.c.l.bf16 %v388
  %v421 = vunpack.c.l.bf16 %v389
  %v422 = vunpack.c.l.bf16 %v390
  %v423 = vunpack.c.l.bf16 %v391
  %v424 = vunpack.c.l.bf16 %v392
  %v425 = vunpack.c.l.bf16 %v393
  %v426 = vunpack.c.l.bf16 %v394
  %v427 = vunpack.c.l.bf16 %v395
  %v428 = vunpack.c.l.bf16 %v396
  %v429 = vunpack.c.l.bf16 %v397
  %v430 = vunpack.c.l.bf16 %v398
  %v431 = vunpack.c.l.bf16 %v399
  %v432 = vunpack.c.l.bf16 %v400
  %v433 = vunpack.c.l.bf16 %v401
  %v434 = vunpack.c.l.bf16 %v402
  %v435 = vunpack.c.l.bf16 %v403
  %v436 = vunpack.c.l.bf16 %v404
  %v437 = vunpack.c.l.bf16 %v405
  %v438 = vunpack.c.l.bf16 %v406
  %v439 = vunpack.c.l.bf16 %v407
  %v440 = vunpack.c.l.bf16 %v408
  %v441 = vunpack.c.l.bf16 %v409
  %v442 = vadd.f32 %v252, %v410
  %v443 = vadd.f32 %v255, %v411
  %v444 = vadd.f32 %v260, %v412
  %v445 = vadd.f32 %v263, %v413
  %v446 = vadd.f32 %v268, %v414
  %v447 = vadd.f32 %v271, %v415
  %v448 = vadd.f32 %v276, %v416
  %v449 = vadd.f32 %v279, %v417
  %v450 = vadd.f32 %v284, %v418
  %v451 = vadd.f32 %v287, %v419
  %v452 = vadd.f32 %v292, %v420
  %v453 = vadd.f32 %v295, %v421
  %v454 = vadd.f32 %v300, %v422
  %v455 = vadd.f32 %v303, %v423
  %v456 = vadd.f32 %v308, %v424
  %v457 = vadd.f32 %v311, %v425
  %v458 = vadd.f32 %v316, %v426
  %v459 = vadd.f32 %v319, %v427
  %v460 = vadd.f32 %v324, %v428
  %v461 = vadd.f32 %v327, %v429
  %v462 = vadd.f32 %v332, %v430
  %v463 = vadd.f32 %v335, %v431
  %v464 = vadd.f32 %v340, %v432
  %v465 = vadd.f32 %v343, %v433
  %v466 = vadd.f32 %v348, %v434
  %v467 = vadd.f32 %v351, %v435
  %v468 = vadd.f32 %v356, %v436
  %v469 = vadd.f32 %v359, %v437
  %v470 = vadd.f32 %v364, %v438
  %v471 = vadd.f32 %v367, %v439
  %v472 = vadd.f32 %v372, %v440
  %v473 = vadd.f32 %v375, %v441
  %v474 = vmax.f32 %v442, 0.0
  %v475 = vmax.f32 %v443, 0.0
  %v476 = vmax.f32 %v444, 0.0
  %v477 = vmax.f32 %v445, 0.0
  %v478 = vmax.f32 %v446, 0.0
  %v479 = vmax.f32 %v447, 0.0
  %v480 = vmax.f32 %v448, 0.0
  %v481 = vmax.f32 %v449, 0.0
  %v482 = vmax.f32 %v450, 0.0
  %v483 = vmax.f32 %v451, 0.0
  %v484 = vmax.f32 %v452, 0.0
  %v485 = vmax.f32 %v453, 0.0
  %v486 = vmax.f32 %v454, 0.0
  %v487 = vmax.f32 %v455, 0.0
  %v488 = vmax.f32 %v456, 0.0
  %v489 = vmax.f32 %v457, 0.0
  %v490 = vmax.f32 %v458, 0.0
  %v491 = vmax.f32 %v459, 0.0
  %v492 = vmax.f32 %v460, 0.0
  %v493 = vmax.f32 %v461, 0.0
  %v494 = vmax.f32 %v462, 0.0
  %v495 = vmax.f32 %v463, 0.0
  %v496 = vmax.f32 %v464, 0.0
  %v497 = vmax.f32 %v465, 0.0
  %v498 = vmax.f32 %v466, 0.0
  %v499 = vmax.f32 %v467, 0.0
  %v500 = vmax.f32 %v468, 0.0
  %v501 = vmax.f32 %v469, 0.0
  %v502 = vmax.f32 %v470, 0.0
  %v503 = vmax.f32 %v471, 0.0
  %v504 = vmax.f32 %v472, 0.0
  %v505 = vmax.f32 %v473, 0.0
  %v506 = vpack.c.bf16 %v475, %v474
  %v507 = vpack.c.bf16 %v477, %v476
  %v508 = vpack.c.bf16 %v479, %v478
  %v509 = vpack.c.bf16 %v481, %v480
  %v510 = vpack.c.bf16 %v483, %v482
  %v511 = vpack.c.bf16 %v485, %v484
  %v512 = vpack.c.bf16 %v487, %v486
  %v513 = vpack.c.bf16 %v489, %v488
  %v514 = vpack.c.bf16 %v491, %v490
  %v515 = vpack.c.bf16 %v493, %v492
  %v516 = vpack.c.bf16 %v495, %v494
  %v517 = vpack.c.bf16 %v497, %v496
  %v518 = vpack.c.bf16 %v499, %v498
  %v519 = vpack.c.bf16 %v501, %v500
  %v520 = vpack.c.bf16 %v503, %v502
  %v521 = vpack.c.bf16 %v505, %v504
  %v538 = vunpack.c.l.b16 %v506
  %v539 = vunpack.c.h.b16 %v506
  %v540 = vunpack.c.l.b16 %v507
  %v541 = vunpack.c.h.b16 %v507
  %v542 = vunpack.c.l.b16 %v508
  %v543 = vunpack.c.h.b16 %v508
  %v544 = vunpack.c.l.b16 %v509
  %v545 = vunpack.c.h.b16 %v509
  %v546 = vunpack.c.l.b16 %v510
  %v547 = vunpack.c.h.b16 %v510
  %v548 = vunpack.c.l.b16 %v511
  %v549 = vunpack.c.h.b16 %v511
  %v550 = vunpack.c.l.b16 %v512
  %v551 = vunpack.c.h.b16 %v512
  %v552 = vunpack.c.l.b16 %v513
  %v553 = vunpack.c.h.b16 %v513
  %v554 = vunpack.c.l.b16 %v514
  %v555 = vunpack.c.h.b16 %v514
  %v556 = vunpack.c.l.b16 %v515
  %v557 = vunpack.c.h.b16 %v515
  %v558 = vunpack.c.l.b16 %v516
  %v559 = vunpack.c.h.b16 %v516
  %v560 = vunpack.c.l.b16 %v517
  %v561 = vunpack.c.h.b16 %v517
  %v562 = vunpack.c.l.b16 %v518
  %v563 = vunpack.c.h.b16 %v518
  %v564 = vunpack.c.l.b16 %v519
  %v565 = vunpack.c.h.b16 %v519
  %v566 = vunpack.c.l.b16 %v520
  %v567 = vunpack.c.h.b16 %v520
  %v568 = vunpack.c.l.b16 %v521
  %v569 = vunpack.c.h.b16 %v521
  %v570 = vpack.c.b16 %v538, %v538
  %v571 = vpack.c.b16 %v539, %v539
  %v572 = vpack.c.b16 %v540, %v540
  %v573 = vpack.c.b16 %v541, %v541
  %v574 = vpack.c.b16 %v542, %v542
  %v575 = vpack.c.b16 %v543, %v543
  %v576 = vpack.c.b16 %v544, %v544
  %v577 = vpack.c.b16 %v545, %v545
  %v578 = vpack.c.b16 %v546, %v546
  %v579 = vpack.c.b16 %v547, %v547
  %v580 = vpack.c.b16 %v548, %v548
  %v581 = vpack.c.b16 %v549, %v549
  %v582 = vpack.c.b16 %v550, %v550
  %v583 = vpack.c.b16 %v551, %v551
  %v584 = vpack.c.b16 %v552, %v552
  %v585 = vpack.c.b16 %v553, %v553
  %v586 = vpack.c.b16 %v554, %v554
  %v587 = vpack.c.b16 %v555, %v555
  %v588 = vpack.c.b16 %v556, %v556
  %v589 = vpack.c.b16 %v557, %v557
  %v590 = vpack.c.b16 %v558, %v558
  %v591 = vpack.c.b16 %v559, %v559
  %v592 = vpack.c.b16 %v560, %v560
  %v593 = vpack.c.b16 %v561, %v561
  %v594 = vpack.c.b16 %v562, %v562
  %v595 = vpack.c.b16 %v563, %v563
  %v596 = vpack.c.b16 %v564, %v564
  %v597 = vpack.c.b16 %v565, %v565
  %v598 = vpack.c.b16 %v566, %v566
  %v599 = vpack.c.b16 %v567, %v567
  %v600 = vpack.c.b16 %v568, %v568
  %v601 = vpack.c.b16 %v569, %v569
  %634 = vst [vmem:[%s4] sm:$0xf] %v570
  %635 = vst [vmem:[%s4 + $0x4] sm:$0xf] %v571
  %636 = vst [vmem:[%s4 + $0x8] sm:$0xf] %v572
  %637 = vst [vmem:[%s4 + $0xc] sm:$0xf] %v573
  %638 = vst [vmem:[%s4 + $0x10] sm:$0xf] %v574
  %639 = vst [vmem:[%s4 + $0x14] sm:$0xf] %v575
  %640 = vst [vmem:[%s4 + $0x18] sm:$0xf] %v576
  %641 = vst [vmem:[%s4 + $0x1c] sm:$0xf] %v577
  %642 = vst [vmem:[%s4 + $0x20] sm:$0xf] %v578
  %643 = vst [vmem:[%s4 + $0x24] sm:$0xf] %v579
  %644 = vst [vmem:[%s4 + $0x28] sm:$0xf] %v580
  %645 = vst [vmem:[%s4 + $0x2c] sm:$0xf] %v581
  %646 = vst [vmem:[%s4 + $0x30] sm:$0xf] %v582
  %647 = vst [vmem:[%s4 + $0x34] sm:$0xf] %v583
  %648 = vst [vmem:[%s4 + $0x38] sm:$0xf] %v584
  %649 = vst [vmem:[%s4 + $0x3c] sm:$0xf] %v585
  %650 = vst [vmem:[%s4 + $0x40] sm:$0xf] %v586
  %651 = vst [vmem:[%s4 + $0x44] sm:$0xf] %v587
  %652 = vst [vmem:[%s4 + $0x48] sm:$0xf] %v588
  %653 = vst [vmem:[%s4 + $0x4c] sm:$0xf] %v589
  %654 = vst [vmem:[%s4 + $0x50] sm:$0xf] %v590
  %655 = vst [vmem:[%s4 + $0x54] sm:$0xf] %v591
  %656 = vst [vmem:[%s4 + $0x58] sm:$0xf] %v592
  %657 = vst [vmem:[%s4 + $0x5c] sm:$0xf] %v593
  %658 = vst [vmem:[%s4 + $0x60] sm:$0xf] %v594
  %659 = vst [vmem:[%s4 + $0x64] sm:$0xf] %v595
  %660 = vst [vmem:[%s4 + $0x68] sm:$0xf] %v596
  %661 = vst [vmem:[%s4 + $0x6c] sm:$0xf] %v597
  %662 = vst [vmem:[%s4 + $0x70] sm:$0xf] %v598
  %663 = vst [vmem:[%s4 + $0x74] sm:$0xf] %v599
  %664 = vst [vmem:[%s4 + $0x78] sm:$0xf] %v600
  %665 = vst [vmem:[%s4 + $0x7c] sm:$0xf] %v601
  // Predicated region
  $region18: #{attention_stage_forward.18} parent=0 // pred_check
    _
  $region19: #{attention_stage_forward.18} parent=0 // pred_check_branch
    %667 = sbr.rel (0) target = $region21
  $region20: #{attention_stage_forward.18} parent=0 // pred_region
    _
  $region21: #{attention_stage_forward.18} parent=0 // pred_fallthru
    _
  // Predicated region
  $region22: #{attention_stage_forward.18} parent=0 // pred_check
    _
  $region23: #{attention_stage_forward.18} parent=0 // pred_check_branch
    %669 = sbr.rel (0) target = $region25
  $region24: #{attention_stage_forward.18} parent=0 // pred_region
    _
  $region25: #{attention_stage_forward.18} parent=0 // pred_fallthru
    _

// kernel: attention_stage_forward.23
$region0: #{attention_stage_forward.23}
  #allocation0 [shape = 'u32[]', space=smem, size = 0x4, offset = 0x4, fixed_abs, tag = 'smem constant byte address 0x4 - core index']
  #allocation1 [shape = 'u32[144,128]{1,0:T(1,128)}', space=vmem, size = 0x12000, scoped, tag = 'internal scratch']
  %s0 = inlined_call_operand.vmem [shape: bf16[4,64,128], index: 0, kind: input, shape index: {}]
  %s1 = inlined_call_operand.vmem [shape: bf16[4,64,128], index: 1, kind: input, shape index: {}]
  %s2 = inlined_call_operand.vmem [shape: bf16[128,128], index: 2, kind: input, shape index: {}]
  %s3 = inlined_call_operand.vmem [shape: f32[1,128], index: 3, kind: input, shape index: {}]
  %s4 = inlined_call_operand.vmem [shape: f32[1,128], index: 4, kind: input, shape index: {}]
  %s5 = inlined_call_operand.vmem [shape: bf16[128,128], index: 5, kind: input, shape index: {}]
  %s6 = inlined_call_operand.vmem [shape: f32[1,128], index: 6, kind: input, shape index: {}]
  %s7 = inlined_call_operand.vmem [shape: f32[1,128], index: 7, kind: input, shape index: {}]
  %s8 = inlined_call_operand.vmem [shape: f32[4,1,128], index: 8, kind: output, shape index: {0}]
  %s9 = inlined_call_operand.vmem [shape: f32[4,1,128], index: 9, kind: output, shape index: {1}]
  %10 = xla_tuple %s8, %s9
  %s11 = sld [smem:[#allocation0]]
  $region77: #{attention_stage_forward.23} parent=0
    _
  %s13 = ssub.s32 1, %s11
  %s14 = scalar_select 0, %s13, %s11
  loop: start=0, step=1, limit=6
  $region2: #{attention_stage_forward.23} parent=0 // loop_pre_header
    _
  $region3: #{attention_stage_forward.23} parent=0 // loop_header
    %s16 = sphi 0, %s20
    %p17 = scmp.ge.s32.totalorder %s16, 6
    %s23 = sphi 0, %s35
    %s24 = sphi 0, %s31
    %s25 = sphi 0, %s23
    %s26 = sphi 0, %s24
    %s27 = sphi 0, %s25
    %s28 = sphi 0, %s26
    %s40 = sphi 0, %s42
    %s43 = sphi 0, %s40
    %s44 = sphi 0, %s43
    %s60 = sphi 0, %s44
    %s68 = sphi 0, %s70
    %s71 = sphi 0, %s68
    %s72 = sphi 0, %s71
    %s88 = sphi 0, %s72
    %s92 = sphi 0, %s92
    %s94 = sphi 0, %s92
    %s95 = sphi 0, %s94
    %s109 = sphi 0, %s95
    %s113 = sphi 0, %s113
    %s115 = sphi 0, %s113
    %s116 = sphi 0, %s115
    %s130 = sphi 0, %s116
    %s134 = sphi 0, %s134
    %s136 = sphi 0, %s134
    %s137 = sphi 0, %s136
    %s151 = sphi 0, %s137
    %s155 = sphi 0, %s155
    %s157 = sphi 0, %s155
    %s158 = sphi 0, %s157
    %s172 = sphi 0, %s158
    %s176 = sphi 0, %s176
    %s178 = sphi 0, %s176
    %s179 = sphi 0, %s178
    %s193 = sphi 0, %s179
    %s197 = sphi 0, %s197
    %s199 = sphi 0, %s197
    %s200 = sphi 0, %s199
    %s214 = sphi 0, %s200
    %s220 = sphi 0, %s222
    %s223 = sphi 0, %s220
    %s224 = sphi 0, %s223
    %s240 = sphi 0, %s224
    %s246 = sphi 0, %s248
    %s249 = sphi 0, %s246
    %s250 = sphi 0, %s249
    %s266 = sphi 0, %s250
  $region4: #{attention_stage_forward.23} parent=0 // loop_header_branch
    %19 = sbr.rel (%p17) target = $region8
  $region5: #{attention_stage_forward.23} parent=0 // loop_body
    %s21 = ssub.s32 %s16, 1
    %s22 = ssub.s32 %s16, 2
    %s29 = sadd.s32 1, %s24
    %p30 = scmp.ge.s32.totalorder %s29, 1
    %s31 = scalar_select %p30, 0, %s29
    %s32 = sadd.s32 1, %s23
    %s33 = scalar_select %p30, %s32, %s23
    %p34 = scmp.ge.s32.totalorder %s33, 4
    %s35 = scalar_select %p34, 0, %s33
    %s36 = ssub.s32 %s23, %s35
    %s37 = ssub.s32 %s24, %s31
    %s38 = sor.u32 %s36, %s37
    %p39 = scmp.eq.s32.totalorder %s38, 0
    %s41 = sadd.s32 %s40, 1
    %s42 = scalar_select %p39, %s40, %s41
    %p45 = pneg %p39
    %p46 = scmp.eq.s32.totalorder %s16, 3
    %p47 = por %p45, %p46
    %p48 = scmp.ne.s32.totalorder %s40, %s43
    %p49 = scmp.eq.s32.totalorder %s16, 0
    %p50 = por %p48, %p49
    %p51 = scmp.ne.s32.totalorder %s40, %s43
    %p52 = scmp.eq.s32.totalorder %s21, 3
    %p53 = por %p51, %p52
    %p54 = scmp.ne.s32.totalorder %s43, %s44
    %p55 = scmp.eq.s32.totalorder %s21, 0
    %p56 = por %p54, %p55
    %p57 = scmp.ne.s32.totalorder %s43, %s44
    %p58 = scmp.eq.s32.totalorder %s22, 3
    %p59 = por %p57, %p58
    %p61 = scmp.ne.s32.totalorder %s44, %s60
    %p62 = scmp.eq.s32.totalorder %s22, 0
    %p63 = por %p61, %p62
    %s64 = ssub.s32 %s23, %s35
    %s65 = ssub.s32 %s24, %s31
    %s66 = sor.u32 %s64, %s65
    %p67 = scmp.eq.s32.totalorder %s66, 0
    %s69 = sadd.s32 %s68, 1
    %s70 = scalar_select %p67, %s68, %s69
    %p73 = pneg %p67
    %p74 = scmp.eq.s32.totalorder %s16, 3
    %p75 = por %p73, %p74
    %p76 = scmp.ne.s32.totalorder %s68, %s71
    %p77 = scmp.eq.s32.totalorder %s16, 0
    %p78 = por %p76, %p77
    %p79 = scmp.ne.s32.totalorder %s68, %s71
    %p80 = scmp.eq.s32.totalorder %s21, 3
    %p81 = por %p79, %p80
    %p82 = scmp.ne.s32.totalorder %s71, %s72
    %p83 = scmp.eq.s32.totalorder %s21, 0
    %p84 = por %p82, %p83
    %p85 = scmp.ne.s32.totalorder %s71, %s72
    %p86 = scmp.eq.s32.totalorder %s22, 3
    %p87 = por %p85, %p86
    %p89 = scmp.ne.s32.totalorder %s72, %s88
    %p90 = scmp.eq.s32.totalorder %s22, 0
    %p91 = por %p89, %p90
    %s93 = sadd.s32 %s92, 1
    %p96 = scmp.eq.s32.totalorder %s16, 3
    %p97 = scmp.ne.s32.totalorder %s92, %s94
    %p98 = scmp.eq.s32.totalorder %s16, 0
    %p99 = por %p97, %p98
    %p100 = scmp.ne.s32.totalorder %s92, %s94
    %p101 = scmp.eq.s32.totalorder %s21, 3
    %p102 = por %p100, %p101
    %p103 = scmp.ne.s32.totalorder %s94, %s95
    %p104 = scmp.eq.s32.totalorder %s21, 0
    %p105 = por %p103, %p104
    %p106 = scmp.ne.s32.totalorder %s94, %s95
    %p107 = scmp.eq.s32.totalorder %s22, 3
    %p108 = por %p106, %p107
    %p110 = scmp.ne.s32.totalorder %s95, %s109
    %p111 = scmp.eq.s32.totalorder %s22, 0
    %p112 = por %p110, %p111
    %s114 = sadd.s32 %s113, 1
    %p117 = scmp.eq.s32.totalorder %s16, 3
    %p118 = scmp.ne.s32.totalorder %s113, %s115
    %p119 = scmp.eq.s32.totalorder %s16, 0
    %p120 = por %p118, %p119
    %p121 = scmp.ne.s32.totalorder %s113, %s115
    %p122 = scmp.eq.s32.totalorder %s21, 3
    %p123 = por %p121, %p122
    %p124 = scmp.ne.s32.totalorder %s115, %s116
    %p125 = scmp.eq.s32.totalorder %s21, 0
    %p126 = por %p124, %p125
    %p127 = scmp.ne.s32.totalorder %s115, %s116
    %p128 = scmp.eq.s32.totalorder %s22, 3
    %p129 = por %p127, %p128
    %p131 = scmp.ne.s32.totalorder %s116, %s130
    %p132 = scmp.eq.s32.totalorder %s22, 0
    %p133 = por %p131, %p132
    %s135 = sadd.s32 %s134, 1
    %p138 = scmp.eq.s32.totalorder %s16, 3
    %p139 = scmp.ne.s32.totalorder %s134, %s136
    %p140 = scmp.eq.s32.totalorder %s16, 0
    %p141 = por %p139, %p140
    %p142 = scmp.ne.s32.totalorder %s134, %s136
    %p143 = scmp.eq.s32.totalorder %s21, 3
    %p144 = por %p142, %p143
    %p145 = scmp.ne.s32.totalorder %s136, %s137
    %p146 = scmp.eq.s32.totalorder %s21, 0
    %p147 = por %p145, %p146
    %p148 = scmp.ne.s32.totalorder %s136, %s137
    %p149 = scmp.eq.s32.totalorder %s22, 3
    %p150 = por %p148, %p149
    %p152 = scmp.ne.s32.totalorder %s137, %s151
    %p153 = scmp.eq.s32.totalorder %s22, 0
    %p154 = por %p152, %p153
    %s156 = sadd.s32 %s155, 1
    %p159 = scmp.eq.s32.totalorder %s16, 3
    %p160 = scmp.ne.s32.totalorder %s155, %s157
    %p161 = scmp.eq.s32.totalorder %s16, 0
    %p162 = por %p160, %p161
    %p163 = scmp.ne.s32.totalorder %s155, %s157
    %p164 = scmp.eq.s32.totalorder %s21, 3
    %p165 = por %p163, %p164
    %p166 = scmp.ne.s32.totalorder %s157, %s158
    %p167 = scmp.eq.s32.totalorder %s21, 0
    %p168 = por %p166, %p167
    %p169 = scmp.ne.s32.totalorder %s157, %s158
    %p170 = scmp.eq.s32.totalorder %s22, 3
    %p171 = por %p169, %p170
    %p173 = scmp.ne.s32.totalorder %s158, %s172
    %p174 = scmp.eq.s32.totalorder %s22, 0
    %p175 = por %p173, %p174
    %s177 = sadd.s32 %s176, 1
    %p180 = scmp.eq.s32.totalorder %s16, 3
    %p181 = scmp.ne.s32.totalorder %s176, %s178
    %p182 = scmp.eq.s32.totalorder %s16, 0
    %p183 = por %p181, %p182
    %p184 = scmp.ne.s32.totalorder %s176, %s178
    %p185 = scmp.eq.s32.totalorder %s21, 3
    %p186 = por %p184, %p185
    %p187 = scmp.ne.s32.totalorder %s178, %s179
    %p188 = scmp.eq.s32.totalorder %s21, 0
    %p189 = por %p187, %p188
    %p190 = scmp.ne.s32.totalorder %s178, %s179
    %p191 = scmp.eq.s32.totalorder %s22, 3
    %p192 = por %p190, %p191
    %p194 = scmp.ne.s32.totalorder %s179, %s193
    %p195 = scmp.eq.s32.totalorder %s22, 0
    %p196 = por %p194, %p195
    %s198 = sadd.s32 %s197, 1
    %p201 = scmp.eq.s32.totalorder %s16, 3
    %p202 = scmp.ne.s32.totalorder %s197, %s199
    %p203 = scmp.eq.s32.totalorder %s16, 0
    %p204 = por %p202, %p203
    %p205 = scmp.ne.s32.totalorder %s197, %s199
    %p206 = scmp.eq.s32.totalorder %s21, 3
    %p207 = por %p205, %p206
    %p208 = scmp.ne.s32.totalorder %s199, %s200
    %p209 = scmp.eq.s32.totalorder %s21, 0
    %p210 = por %p208, %p209
    %p211 = scmp.ne.s32.totalorder %s199, %s200
    %p212 = scmp.eq.s32.totalorder %s22, 3
    %p213 = por %p211, %p212
    %p215 = scmp.ne.s32.totalorder %s200, %s214
    %p216 = scmp.eq.s32.totalorder %s22, 0
    %p217 = por %p215, %p216
    %s218 = ssub.s32 %s23, %s35
    %p219 = scmp.eq.s32.totalorder %s218, 0
    %s221 = sadd.s32 %s220, 1
    %s222 = scalar_select %p219, %s220, %s221
    %p225 = pneg %p219
    %p226 = scmp.eq.s32.totalorder %s16, 3
    %p227 = por %p225, %p226
    %p228 = scmp.ne.s32.totalorder %s220, %s223
    %p229 = scmp.eq.s32.totalorder %s16, 0
    %p230 = por %p228, %p229
    %p231 = scmp.ne.s32.totalorder %s220, %s223
    %p232 = scmp.eq.s32.totalorder %s21, 3
    %p233 = por %p231, %p232
    %p234 = scmp.ne.s32.totalorder %s223, %s224
    %p235 = scmp.eq.s32.totalorder %s21, 0
    %p236 = por %p234, %p235
    %p237 = scmp.ne.s32.totalorder %s223, %s224
    %p238 = scmp.eq.s32.totalorder %s22, 3
    %p239 = por %p237, %p238
    %p241 = scmp.ne.s32.totalorder %s224, %s240
    %p242 = scmp.eq.s32.totalorder %s22, 0
    %p243 = por %p241, %p242
    %s244 = ssub.s32 %s23, %s35
    %p245 = scmp.eq.s32.totalorder %s244, 0
    %s247 = sadd.s32 %s246, 1
    %s248 = scalar_select %p245, %s246, %s247
    %p251 = pneg %p245
    %p252 = scmp.eq.s32.totalorder %s16, 3
    %p253 = por %p251, %p252
    %p254 = scmp.ne.s32.totalorder %s246, %s249
    %p255 = scmp.eq.s32.totalorder %s16, 0
    %p256 = por %p254, %p255
    %p257 = scmp.ne.s32.totalorder %s246, %s249
    %p258 = scmp.eq.s32.totalorder %s21, 3
    %p259 = por %p257, %p258
    %p260 = scmp.ne.s32.totalorder %s249, %s250
    %p261 = scmp.eq.s32.totalorder %s21, 0
    %p262 = por %p260, %p261
    %p263 = scmp.ne.s32.totalorder %s249, %s250
    %p264 = scmp.eq.s32.totalorder %s22, 3
    %p265 = por %p263, %p264
    %p267 = scmp.ne.s32.totalorder %s250, %s266
    %p268 = scmp.eq.s32.totalorder %s22, 0
    %p269 = por %p267, %p268
    %p270 = scmp.le.s32.totalorder 1, %s16
    %p271 = scmp.lt.s32.totalorder %s16, 5
    %p272 = pnand %p270, %p271
    %p273 = pneg %p272
    // Predicated region
    $region9: #{attention_stage_forward.23} parent=5 // pred_check
      _
    $region10: #{attention_stage_forward.23} parent=5 // pred_check_branch
      %275 = sbr.rel (%p272) target = $region12
    $region11: #{attention_stage_forward.23} parent=5 // pred_region
      %s276 = ssub.s32 %s16, 1
      // Predicated region
      $region13: #{attention_stage_forward.23} parent=11 // pred_check
        %p277 = pneg %p105
      $region14: #{attention_stage_forward.23} parent=11 // pred_check_branch
        %279 = sbr.rel (%p277) target = $region16
      $region15: #{attention_stage_forward.23} parent=11 // pred_region
        _
      $region16: #{attention_stage_forward.23} parent=11 // pred_fallthru
        _
      // Predicated region
      $region17: #{attention_stage_forward.23} parent=11 // pred_check
        %p280 = pneg %p126
      $region18: #{attention_stage_forward.23} parent=11 // pred_check_branch
        %282 = sbr.rel (%p280) target = $region20
      $region19: #{attention_stage_forward.23} parent=11 // pred_region
        _
      $region20: #{attention_stage_forward.23} parent=11 // pred_fallthru
        _
      // Predicated region
      $region21: #{attention_stage_forward.23} parent=11 // pred_check
        %p283 = pneg %p147
      $region22: #{attention_stage_forward.23} parent=11 // pred_check_branch
        %285 = sbr.rel (%p283) target = $region24
      $region23: #{attention_stage_forward.23} parent=11 // pred_region
        _
      $region24: #{attention_stage_forward.23} parent=11 // pred_fallthru
        _
      // Predicated region
      $region25: #{attention_stage_forward.23} parent=11 // pred_check
        %p286 = pneg %p168
      $region26: #{attention_stage_forward.23} parent=11 // pred_check_branch
        %288 = sbr.rel (%p286) target = $region28
      $region27: #{attention_stage_forward.23} parent=11 // pred_region
        _
      $region28: #{attention_stage_forward.23} parent=11 // pred_fallthru
        _
      // Predicated region
      $region29: #{attention_stage_forward.23} parent=11 // pred_check
        %p289 = pneg %p189
      $region30: #{attention_stage_forward.23} parent=11 // pred_check_branch
        %291 = sbr.rel (%p289) target = $region32
      $region31: #{attention_stage_forward.23} parent=11 // pred_region
        _
      $region32: #{attention_stage_forward.23} parent=11 // pred_fallthru
        _
      // Predicated region
      $region33: #{attention_stage_forward.23} parent=11 // pred_check
        %p292 = pneg %p210
      $region34: #{attention_stage_forward.23} parent=11 // pred_check_branch
        %294 = sbr.rel (%p292) target = $region36
      $region35: #{attention_stage_forward.23} parent=11 // pred_region
        _
      $region36: #{attention_stage_forward.23} parent=11 // pred_fallthru
        _
    $region12: #{attention_stage_forward.23} parent=5 // pred_fallthru
      _
    %p295 = scmp.lt.s32.totalorder %s16, 4
    // Predicated region
    $region37: #{attention_stage_forward.23} parent=5 // pred_check
      %p296 = pneg %p295
    $region38: #{attention_stage_forward.23} parent=5 // pred_check_branch
      %298 = sbr.rel (%p296) target = $region40
    $region39: #{attention_stage_forward.23} parent=5 // pred_region
      // Predicated region
      $region41: #{attention_stage_forward.23} parent=39 // pred_check
        %p299 = pneg %p50
      $region42: #{attention_stage_forward.23} parent=39 // pred_check_branch
        %301 = sbr.rel (%p299) target = $region44
      $region43: #{attention_stage_forward.23} parent=39 // pred_region
        %s302 = smul.u32 8, %s24
        %p303 = scmp.lt.s32.totalorder %s23, 3
        %s304 = scalar_select %p303, %s23, 3
        %p305 = scmp.lt.s32.totalorder %s302, 7
        %s306 = scalar_select %p305, %s302, 7
        %s307 = smul.addr %s304, 8
        %s308 = sadd.s32 %s306, %s307
        %s309 = smul.addr %s308, 4
        %s310 = scalar_lea.vmem %s0, %s309
        %s311 = smul.u32 8, %s24
      $region44: #{attention_stage_forward.23} parent=39 // pred_fallthru
        _
      // Predicated region
      $region45: #{attention_stage_forward.23} parent=39 // pred_check
        %p312 = pneg %p78
      $region46: #{attention_stage_forward.23} parent=39 // pred_check_branch
        %314 = sbr.rel (%p312) target = $region48
      $region47: #{attention_stage_forward.23} parent=39 // pred_region
        %s315 = smul.u32 8, %s24
        %p316 = scmp.lt.s32.totalorder %s23, 3
        %s317 = scalar_select %p316, %s23, 3
        %p318 = scmp.lt.s32.totalorder %s315, 7
        %s319 = scalar_select %p318, %s315, 7
        %s320 = smul.addr %s317, 8
        %s321 = sadd.s32 %s319, %s320
        %s322 = smul.addr %s321, 4
        %s323 = scalar_lea.vmem %s1, %s322
        %s324 = smul.u32 8, %s24
      $region48: #{attention_stage_forward.23} parent=39 // pred_fallthru
        _
    $region40: #{attention_stage_forward.23} parent=5 // pred_fallthru
      _
    %p325 = scmp.le.s32.totalorder 1, %s16
    %p326 = scmp.lt.s32.totalorder %s16, 5
    %p327 = pnand %p325, %p326
    %p328 = pneg %p327
    // Predicated region
    $region49: #{attention_stage_forward.23} parent=5 // pred_check
      _
    $region50: #{attention_stage_forward.23} parent=5 // pred_check_branch
      %330 = sbr.rel (%p327) target = $region52
    $region51: #{attention_stage_forward.23} parent=5 // pred_region
      %s331 = ssub.s32 %s16, 1
      %s332 = smul.u32 8, %s26
      %p333 = scmp.lt.s32.totalorder %s25, 3
      %s334 = scalar_select %p333, %s25, 3
      %p335 = scmp.lt.s32.totalorder %s332, 7
      %s336 = scalar_select %p335, %s332, 7
      %s337 = smul.addr %s334, 8
      %s338 = sadd.s32 %s336, %s337
      %s339 = smul.addr %s338, 4
      %s340 = scalar_lea.vmem %s0, %s339
      %p341 = pneg %p56
      %p342 = pneg %p53
      %s343 = smul.u32 8, %s26
      %p344 = scmp.lt.s32.totalorder %s25, 3
      %s345 = scalar_select %p344, %s25, 3
      %p346 = scmp.lt.s32.totalorder %s343, 7
      %s347 = scalar_select %p346, %s343, 7
      %s348 = smul.addr %s345, 8
      %s349 = sadd.s32 %s347, %s348
      %s350 = smul.addr %s349, 4
      %s351 = scalar_lea.vmem %s1, %s350
      %p352 = pneg %p84
      %p353 = pneg %p81
      %p354 = pneg %p105
      %p355 = pneg %p102
      %p356 = pneg %p126
      %p357 = pneg %p123
      %p358 = pneg %p147
      %p359 = pneg %p144
      %p360 = pneg %p168
      %p361 = pneg %p165
      %p362 = pneg %p189
      %p363 = pneg %p186
      %p364 = pneg %p210
      %p365 = pneg %p207
      %p366 = pneg %p236
      %p367 = pneg %p233
      %p368 = scmp.lt.s32.totalorder %s25, 3
      %s369 = scalar_select %p368, %s25, 3
      %s370 = scalar_lea.vmem %s8, %s369
      %p371 = pneg %p262
      %p372 = pneg %p259
      %p373 = scmp.lt.s32.totalorder %s25, 3
      %s374 = scalar_select %p373, %s25, 3
      %s375 = scalar_lea.vmem %s9, %s374
      %s376 = smul.u32 8, %s26
      %p377 = scmp.lt.s32.totalorder %s25, 3
      %s378 = scalar_select %p377, %s25, 3
      %p379 = scmp.lt.s32.totalorder %s376, 7
      %s380 = scalar_select %p379, %s376, 7
      %s381 = smul.addr %s378, 8
      %s382 = sadd.s32 %s380, %s381
      %s383 = smul.addr %s382, 4
      %s384 = scalar_lea.vmem %s0, %s383
      %s385 = smul.u32 8, %s26
      %s386 = smul.u32 8, %s26
      %p387 = scmp.lt.s32.totalorder %s25, 3
      %s388 = scalar_select %p387, %s25, 3
      %p389 = scmp.lt.s32.totalorder %s386, 7
      %s390 = scalar_select %p389, %s386, 7
      %s391 = smul.addr %s388, 8
      %s392 = sadd.s32 %s390, %s391
      %s393 = smul.addr %s392, 4
      %s394 = scalar_lea.vmem %s1, %s393
      %s395 = smul.u32 8, %s26
      %p396 = scmp.lt.s32.totalorder %s25, 3
      %s397 = scalar_select %p396, %s25, 3
      %s398 = scalar_lea.vmem %s8, %s397
      %p399 = scmp.lt.s32.totalorder %s25, 3
      %s400 = scalar_select %p399, %s25, 3
      %s401 = scalar_lea.vmem %s9, %s400
      %v403 = vld [vmem:[%s384] sm:$0xf]
      %v404 = vld [vmem:[%s384 + $0x4] sm:$0xf]
      %v405 = vld [vmem:[%s384 + $0x8] sm:$0xf]
      %v406 = vld [vmem:[%s384 + $0xc] sm:$0xf]
      %v407 = vld [vmem:[%s384 + $0x10] sm:$0xf]
      %v408 = vld [vmem:[%s384 + $0x14] sm:$0xf]
      %v409 = vld [vmem:[%s384 + $0x18] sm:$0xf]
      %v410 = vld [vmem:[%s384 + $0x1c] sm:$0xf]
      %v411 = vld [vmem:[%s394] sm:$0xf]
      %v412 = vld [vmem:[%s394 + $0x4] sm:$0xf]
      %v413 = vld [vmem:[%s394 + $0x8] sm:$0xf]
      %v414 = vld [vmem:[%s394 + $0xc] sm:$0xf]
      %v415 = vld [vmem:[%s394 + $0x10] sm:$0xf]
      %v416 = vld [vmem:[%s394 + $0x14] sm:$0xf]
      %v417 = vld [vmem:[%s394 + $0x18] sm:$0xf]
      %v418 = vld [vmem:[%s394 + $0x1c] sm:$0xf]
      %v419 = vld [vmem:[%s2] sm:$0xf]
      %v420 = vld [vmem:[%s2 + $0x4] sm:$0xf]
      %v421 = vld [vmem:[%s2 + $0x8] sm:$0xf]
      %v422 = vld [vmem:[%s2 + $0xc] sm:$0xf]
      %v423 = vld [vmem:[%s2 + $0x10] sm:$0xf]
      %v424 = vld [vmem:[%s2 + $0x14] sm:$0xf]
      %v425 = vld [vmem:[%s2 + $0x18] sm:$0xf]
      %v426 = vld [vmem:[%s2 + $0x1c] sm:$0xf]
      %v427 = vld [vmem:[%s2 + $0x20] sm:$0xf]
      %v428 = vld [vmem:[%s2 + $0x24] sm:$0xf]
      %v429 = vld [vmem:[%s2 + $0x28] sm:$0xf]
      %v430 = vld [vmem:[%s2 + $0x2c] sm:$0xf]
      %v431 = vld [vmem:[%s2 + $0x30] sm:$0xf]
      %v432 = vld [vmem:[%s2 + $0x34] sm:$0xf]
      %v433 = vld [vmem:[%s2 + $0x38] sm:$0xf]
      %v434 = vld [vmem:[%s2 + $0x3c] sm:$0xf]
      %v435 = vld [vmem:[%s3] sm:$0x1]
      %v436 = vld [vmem:[%s4] sm:$0x1]
      %v437 = vld [vmem:[%s5] sm:$0xf]
      %v438 = vld [vmem:[%s5 + $0x4] sm:$0xf]
      %v439 = vld [vmem:[%s5 + $0x8] sm:$0xf]
      %v440 = vld [vmem:[%s5 + $0xc] sm:$0xf]
      %v441 = vld [vmem:[%s5 + $0x10] sm:$0xf]
      %v442 = vld [vmem:[%s5 + $0x14] sm:$0xf]
      %v443 = vld [vmem:[%s5 + $0x18] sm:$0xf]
      %v444 = vld [vmem:[%s5 + $0x1c] sm:$0xf]
      %v445 = vld [vmem:[%s5 + $0x20] sm:$0xf]
      %v446 = vld [vmem:[%s5 + $0x24] sm:$0xf]
      %v447 = vld [vmem:[%s5 + $0x28] sm:$0xf]
      %v448 = vld [vmem:[%s5 + $0x2c] sm:$0xf]
      %v449 = vld [vmem:[%s5 + $0x30] sm:$0xf]
      %v450 = vld [vmem:[%s5 + $0x34] sm:$0xf]
      %v451 = vld [vmem:[%s5 + $0x38] sm:$0xf]
      %v452 = vld [vmem:[%s5 + $0x3c] sm:$0xf]
      %v453 = vld [vmem:[%s6] sm:$0x1]
      %v454 = vld [vmem:[%s7] sm:$0x1]
      %v456 = vlaneseq
      %v457 = vshrl.u32 %v456, 7
      %v458 = vsub.s32 0, %v457
      %v459 = vrot.slane %v435, %v458
      %v469 = vunpack.c.l.b16 %v411
      %v470 = vunpack.c.l.b16 %v412
      %v471 = vunpack.c.l.b16 %v413
      %v472 = vunpack.c.l.b16 %v414
      %v473 = vunpack.c.l.b16 %v415
      %v474 = vunpack.c.l.b16 %v416
      %v475 = vunpack.c.l.b16 %v417
      %v476 = vunpack.c.l.b16 %v418
      %v477 = vpack.c.b16 %v470, %v469
      %v478 = vpack.c.b16 %v472, %v471
      %v479 = vpack.c.b16 %v474, %v473
      %v480 = vpack.c.b16 %v476, %v475
      %v501 = vunpack.c.l.b16 %v419
      %v502 = vunpack.c.l.b16 %v420
      %v503 = vunpack.c.l.b16 %v421
      %v504 = vunpack.c.l.b16 %v422
      %v505 = vunpack.c.l.b16 %v423
      %v506 = vunpack.c.l.b16 %v424
      %v507 = vunpack.c.l.b16 %v425
      %v508 = vunpack.c.l.b16 %v426
      %v509 = vunpack.c.l.b16 %v427
      %v510 = vunpack.c.l.b16 %v428
      %v511 = vunpack.c.l.b16 %v429
      %v512 = vunpack.c.l.b16 %v430
      %v513 = vunpack.c.l.b16 %v431
      %v514 = vunpack.c.l.b16 %v432
      %v515 = vunpack.c.l.b16 %v433
      %v516 = vunpack.c.l.b16 %v434
      %v517 = vpack.c.b16 %v502, %v501
      %v518 = vpack.c.b16 %v504, %v503
      %v519 = vpack.c.b16 %v506, %v505
      %v520 = vpack.c.b16 %v508, %v507
      %v521 = vpack.c.b16 %v510, %v509
      %v522 = vpack.c.b16 %v512, %v511
      %v523 = vpack.c.b16 %v514, %v513
      %v524 = vpack.c.b16 %v516, %v515
      %533 = vmatprep.subr.bf16.mxu0 0
      %534 = vmatpush1.bf16.msra.mxu0 %v517
      %535 = vmatprep.subr.bf16.mxu0 0
      %536 = vmatpush1.bf16.msra.mxu0 %v518
      %537 = vmatprep.subr.bf16.mxu0 0
      %538 = vmatpush1.bf16.msra.mxu0 %v519
      %539 = vmatprep.subr.bf16.mxu0 0
      %540 = vmatpush1.bf16.msra.mxu0 %v520
      %541 = vmatprep.subr.bf16.mxu0 0
      %542 = vmatpush1.bf16.msra.mxu0 %v521
      %543 = vmatprep.subr.bf16.mxu0 0
      %544 = vmatpush1.bf16.msra.mxu0 %v522
      %545 = vmatprep.subr.bf16.mxu0 0
      %546 = vmatpush1.bf16.msra.mxu0 %v523
      %547 = vmatprep.subr.bf16.mxu0 0
      %548 = vmatpush1.bf16.msra.mxu0 %v524
      %549 = vmatprep.subr.bf16.mxu0 0
      %550 = vmatpush1.bf16.msra.mxu0 0
      %551 = vmatprep.subr.bf16.mxu0 0
      %552 = vmatpush1.bf16.msra.mxu0 0
      %553 = vmatprep.subr.bf16.mxu0 0
      %554 = vmatpush1.bf16.msra.mxu0 0
      %555 = vmatprep.subr.bf16.mxu0 0
      %556 = vmatpush1.bf16.msra.mxu0 0
      %557 = vmatprep.subr.bf16.mxu0 0
      %558 = vmatpush1.bf16.msra.mxu0 0
      %559 = vmatprep.subr.bf16.mxu0 0
      %560 = vmatpush1.bf16.msra.mxu0 0
      %561 = vmatprep.subr.bf16.mxu0 0
      %562 = vmatpush1.bf16.msra.mxu0 0
      %563 = vmatprep.subr.bf16.mxu0 0
      %564 = vmatpush1.bf16.msra.mxu0 0
      %565 = vmatprep.mubr.bf16.mxu0 0
      %566 = vmatmul.mubr.bf16.gmra.mrb[0].mxu0 %v477
      %v567 = vpop.f32.mrb[0].mxu0
      %v568 = vadd.f32 %v459, %v567
      %v569 = vpop.f32.mrb[0].mxu0
      %v570 = vpop.f32.mrb[0].mxu0
      %v571 = vadd.f32 %v459, %v570
      %v572 = vpop.f32.mrb[0].mxu0
      %573 = vmatprep.mubr.bf16.mxu0 0
      %574 = vmatmul.mubr.bf16.gmra.mrb[0].mxu0 %v478
      %v575 = vpop.f32.mrb[0].mxu0
      %v576 = vadd.f32 %v459, %v575
      %v577 = vpop.f32.mrb[0].mxu0
      %v578 = vpop.f32.mrb[0].mxu0
      %v579 = vadd.f32 %v459, %v578
      %v580 = vpop.f32.mrb[0].mxu0
      %581 = vmatprep.mubr.bf16.mxu0 0
      %582 = vmatmul.mubr.bf16.gmra.mrb[0].mxu0 %v479
      %v583 = vpop.f32.mrb[0].mxu0
      %v584 = vadd.f32 %v459, %v583
      %v585 = vpop.f32.mrb[0].mxu0
      %v586 = vpop.f32.mrb[0].mxu0
      %v587 = vadd.f32 %v459, %v586
      %v588 = vpop.f32.mrb[0].mxu0
      %589 = vmatprep.mubr.bf16.mxu0 0
      %590 = vmatmul.mubr.bf16.gmra.mrb[0].mxu0 %v480
      %v591 = vpop.f32.mrb[0].mxu0
      %v592 = vadd.f32 %v459, %v591
      %v593 = vpop.f32.mrb[0].mxu0
      %v594 = vpop.f32.mrb[0].mxu0
      %v595 = vadd.f32 %v459, %v594
      %v596 = vpop.f32.mrb[0].mxu0
      %597 = vdwg.mxu0
      %v598 = vmax.f32 %v568, 0.0
      %v599 = vmax.f32 %v571, 0.0
      %v600 = vmax.f32 %v576, 0.0
      %v601 = vmax.f32 %v579, 0.0
      %v602 = vmax.f32 %v584, 0.0
      %v603 = vmax.f32 %v587, 0.0
      %v604 = vmax.f32 %v592, 0.0
      %v605 = vmax.f32 %v595, 0.0
      %v607 = vlaneseq
      %v608 = vshrl.u32 %v607, 7
      %v609 = vsub.s32 0, %v608
      %v610 = vrot.slane %v436, %v609
      %v612 = vmul.f32 %v598, %v610
      %v613 = vmul.f32 %v599, %v610
      %v614 = vmul.f32 %v600, %v610
      %v615 = vmul.f32 %v601, %v610
      %v616 = vmul.f32 %v602, %v610
      %v617 = vmul.f32 %v603, %v610
      %v618 = vmul.f32 %v604, %v610
      %v619 = vmul.f32 %v605, %v610
      %620 = vadd.xlane.f32.xlu0 %v612
      %v621 = vpop.xlane.xlu0 %620
      %622 = vadd.xlane.f32.xlu0 %v613
      %v623 = vpop.xlane.xlu0 %622
      %624 = vadd.xlane.f32.xlu0 %v614
      %v625 = vpop.xlane.xlu0 %624
      %626 = vadd.xlane.f32.xlu0 %v615
      %v627 = vpop.xlane.xlu0 %626
      %628 = vadd.xlane.f32.xlu0 %v616
      %v629 = vpop.xlane.xlu0 %628
      %630 = vadd.xlane.f32.xlu0 %v617
      %v631 = vpop.xlane.xlu0 %630
      %632 = vadd.xlane.f32.xlu0 %v618
      %v633 = vpop.xlane.xlu0 %632
      %634 = vadd.xlane.f32.xlu0 %v619
      %v635 = vpop.xlane.xlu0 %634
      %v636 = vadd.f32 %v621, -0.1214236
      %v637 = vadd.f32 %v623, -0.1214236
      %v638 = vadd.f32 %v625, -0.1214236
      %v639 = vadd.f32 %v627, -0.1214236
      %v640 = vadd.f32 %v629, -0.1214236
      %v641 = vadd.f32 %v631, -0.1214236
      %v642 = vadd.f32 %v633, -0.1214236
      %v643 = vadd.f32 %v635, -0.1214236
      %v644 = vand.u32 2147483647, %v636
      %v645 = vand.u32 2147483647, %v637
      %v646 = vand.u32 2147483647, %v638
      %v647 = vand.u32 2147483647, %v639
      %v648 = vand.u32 2147483647, %v640
      %v649 = vand.u32 2147483647, %v641
      %v650 = vand.u32 2147483647, %v642
      %v651 = vand.u32 2147483647, %v643
      %v652 = vsub.f32 0.0, %v644
      %v653 = vsub.f32 0.0, %v645
      %v654 = vsub.f32 0.0, %v646
      %v655 = vsub.f32 0.0, %v647
      %v656 = vsub.f32 0.0, %v648
      %v657 = vsub.f32 0.0, %v649
      %v658 = vsub.f32 0.0, %v650
      %v659 = vsub.f32 0.0, %v651
      %v660 = vmul.f32 %v652, 1.442695
      %v661 = vpow.pop %v660
      %v662 = vmul.f32 %v653, 1.442695
      %v663 = vpow.pop %v662
      %v664 = vmul.f32 %v654, 1.442695
      %v665 = vpow.pop %v664
      %v666 = vmul.f32 %v655, 1.442695
      %v667 = vpow.pop %v666
      %v668 = vmul.f32 %v656, 1.442695
      %v669 = vpow.pop %v668
      %v670 = vmul.f32 %v657, 1.442695
      %v671 = vpow.pop %v670
      %v672 = vmul.f32 %v658, 1.442695
      %v673 = vpow.pop %v672
      %v674 = vmul.f32 %v659, 1.442695
      %v675 = vpow.pop %v674
      %vm676 = vcmp.ge.f32.partialorder %v636, 0.0
      %vm677 = vcmp.ge.f32.partialorder %v637, 0.0
      %vm678 = vcmp.ge.f32.partialorder %v638, 0.0
      %vm679 = vcmp.ge.f32.partialorder %v639, 0.0
      %vm680 = vcmp.ge.f32.partialorder %v640, 0.0
      %vm681 = vcmp.ge.f32.partialorder %v641, 0.0
      %vm682 = vcmp.ge.f32.partialorder %v642, 0.0
      %vm683 = vcmp.ge.f32.partialorder %v643, 0.0
      %v684 = vsel %vm676, 1.0, %v661
      %v685 = vsel %vm677, 1.0, %v663
      %v686 = vsel %vm678, 1.0, %v665
      %v687 = vsel %vm679, 1.0, %v667
      %v688 = vsel %vm680, 1.0, %v669
      %v689 = vsel %vm681, 1.0, %v671
      %v690 = vsel %vm682, 1.0, %v673
      %v691 = vsel %vm683, 1.0, %v675
      %v692 = vadd.f32 %v661, 1.0
      %v693 = vadd.f32 %v663, 1.0
      %v694 = vadd.f32 %v665, 1.0
      %v695 = vadd.f32 %v667, 1.0
      %v696 = vadd.f32 %v669, 1.0
      %v697 = vadd.f32 %v671, 1.0
      %v698 = vadd.f32 %v673, 1.0
      %v699 = vadd.f32 %v675, 1.0
      %v700 = vrcp.pop %v692
      %v701 = vrcp.pop %v693
      %v702 = vrcp.pop %v694
      %v703 = vrcp.pop %v695
      %v704 = vrcp.pop %v696
      %v705 = vrcp.pop %v697
      %v706 = vrcp.pop %v698
      %v707 = vrcp.pop %v699
      %v708 = vmul.f32 %v684, %v700
      %v709 = vmul.f32 %v685, %v701
      %v710 = vmul.f32 %v686, %v702
      %v711 = vmul.f32 %v687, %v703
      %v712 = vmul.f32 %v688, %v704
      %v713 = vmul.f32 %v689, %v705
      %v714 = vmul.f32 %v690, %v706
      %v715 = vmul.f32 %v691, %v707
      %v717 = vlaneseq
      %v718 = vshrl.u32 %v717, 7
      %v719 = vsub.s32 0, %v718
      %v720 = vrot.slane %v453, %v719
      %v730 = vunpack.c.l.b16 %v403
      %v731 = vunpack.c.l.b16 %v404
      %v732 = vunpack.c.l.b16 %v405
      %v733 = vunpack.c.l.b16 %v406
      %v734 = vunpack.c.l.b16 %v407
      %v735 = vunpack.c.l.b16 %v408
      %v736 = vunpack.c.l.b16 %v409
      %v737 = vunpack.c.l.b16 %v410
      %v738 = vpack.c.b16 %v731, %v730
      %v739 = vpack.c.b16 %v733, %v732
      %v740 = vpack.c.b16 %v735, %v734
      %v741 = vpack.c.b16 %v737, %v736
      %v762 = vunpack.c.l.b16 %v437
      %v763 = vunpack.c.l.b16 %v438
      %v764 = vunpack.c.l.b16 %v439
      %v765 = vunpack.c.l.b16 %v440
      %v766 = vunpack.c.l.b16 %v441
      %v767 = vunpack.c.l.b16 %v442
      %v768 = vunpack.c.l.b16 %v443
      %v769 = vunpack.c.l.b16 %v444
      %v770 = vunpack.c.l.b16 %v445
      %v771 = vunpack.c.l.b16 %v446
      %v772 = vunpack.c.l.b16 %v447
      %v773 = vunpack.c.l.b16 %v448
      %v774 = vunpack.c.l.b16 %v449
      %v775 = vunpack.c.l.b16 %v450
      %v776 = vunpack.c.l.b16 %v451
      %v777 = vunpack.c.l.b16 %v452
      %v778 = vpack.c.b16 %v763, %v762
      %v779 = vpack.c.b16 %v765, %v764
      %v780 = vpack.c.b16 %v767, %v766
      %v781 = vpack.c.b16 %v769, %v768
      %v782 = vpack.c.b16 %v771, %v770
      %v783 = vpack.c.b16 %v773, %v772
      %v784 = vpack.c.b16 %v775, %v774
      %v785 = vpack.c.b16 %v777, %v776
      %794 = vmatprep.subr.bf16.mxu0 0
      %795 = vmatpush1.bf16.msra.mxu0 %v778
      %796 = vmatprep.subr.bf16.mxu0 0
      %797 = vmatpush1.bf16.msra.mxu0 %v779
      %798 = vmatprep.subr.bf16.mxu0 0
      %799 = vmatpush1.bf16.msra.mxu0 %v780
      %800 = vmatprep.subr.bf16.mxu0 0
      %801 = vmatpush1.bf16.msra.mxu0 %v781
      %802 = vmatprep.subr.bf16.mxu0 0
      %803 = vmatpush1.bf16.msra.mxu0 %v782
      %804 = vmatprep.subr.bf16.mxu0 0
      %805 = vmatpush1.bf16.msra.mxu0 %v783
      %806 = vmatprep.subr.bf16.mxu0 0
      %807 = vmatpush1.bf16.msra.mxu0 %v784
      %808 = vmatprep.subr.bf16.mxu0 0
      %809 = vmatpush1.bf16.msra.mxu0 %v785
      %810 = vmatprep.subr.bf16.mxu0 0
      %811 = vmatpush1.bf16.msra.mxu0 0
      %812 = vmatprep.subr.bf16.mxu0 0
      %813 = vmatpush1.bf16.msra.mxu0 0
      %814 = vmatprep.subr.bf16.mxu0 0
      %815 = vmatpush1.bf16.msra.mxu0 0
      %816 = vmatprep.subr.bf16.mxu0 0
      %817 = vmatpush1.bf16.msra.mxu0 0
      %818 = vmatprep.subr.bf16.mxu0 0
      %819 = vmatpush1.bf16.msra.mxu0 0
      %820 = vmatprep.subr.bf16.mxu0 0
      %821 = vmatpush1.bf16.msra.mxu0 0
      %822 = vmatprep.subr.bf16.mxu0 0
      %823 = vmatpush1.bf16.msra.mxu0 0
      %824 = vmatprep.subr.bf16.mxu0 0
      %825 = vmatpush1.bf16.msra.mxu0 0
      %826 = vmatprep.mubr.bf16.mxu0 0
      %827 = vmatmul.mubr.bf16.gmra.mrb[0].mxu0 %v738
      %v828 = vpop.f32.mrb[0].mxu0
      %v829 = vadd.f32 %v720, %v828
      %v830 = vpop.f32.mrb[0].mxu0
      %v831 = vpop.f32.mrb[0].mxu0
      %v832 = vadd.f32 %v720, %v831
      %v833 = vpop.f32.mrb[0].mxu0
      %834 = vmatprep.mubr.bf16.mxu0 0
      %835 = vmatmul.mubr.bf16.gmra.mrb[0].mxu0 %v739
      %v836 = vpop.f32.mrb[0].mxu0
      %v837 = vadd.f32 %v720, %v836
      %v838 = vpop.f32.mrb[0].mxu0
      %v839 = vpop.f32.mrb[0].mxu0
      %v840 = vadd.f32 %v720, %v839
      %v841 = vpop.f32.mrb[0].mxu0
      %842 = vmatprep.mubr.bf16.mxu0 0
      %843 = vmatmul.mubr.bf16.gmra.mrb[0].mxu0 %v740
      %v844 = vpop.f32.mrb[0].mxu0
      %v845 = vadd.f32 %v720, %v844
      %v846 = vpop.f32.mrb[0].mxu0
      %v847 = vpop.f32.mrb[0].mxu0
      %v848 = vadd.f32 %v720, %v847
      %v849 = vpop.f32.mrb[0].mxu0
      %850 = vmatprep.mubr.bf16.mxu0 0
      %851 = vmatmul.mubr.bf16.gmra.mrb[0].mxu0 %v741
      %v852 = vpop.f32.mrb[0].mxu0
      %v853 = vadd.f32 %v720, %v852
      %v854 = vpop.f32.mrb[0].mxu0
      %v855 = vpop.f32.mrb[0].mxu0
      %v856 = vadd.f32 %v720, %v855
      %v857 = vpop.f32.mrb[0].mxu0
      %858 = vdwg.mxu0
      %v859 = vmax.f32 %v829, 0.0
      %v860 = vmax.f32 %v832, 0.0
      %v861 = vmax.f32 %v837, 0.0
      %v862 = vmax.f32 %v840, 0.0
      %v863 = vmax.f32 %v845, 0.0
      %v864 = vmax.f32 %v848, 0.0
      %v865 = vmax.f32 %v853, 0.0
      %v866 = vmax.f32 %v856, 0.0
      %v868 = vlaneseq
      %v869 = vshrl.u32 %v868, 7
      %v870 = vsub.s32 0, %v869
      %v871 = vrot.slane %v454, %v870
      %v873 = vmul.f32 %v859, %v871
      %v874 = vmul.f32 %v860, %v871
      %v875 = vmul.f32 %v861, %v871
      %v876 = vmul.f32 %v862, %v871
      %v877 = vmul.f32 %v863, %v871
      %v878 = vmul.f32 %v864, %v871
      %v879 = vmul.f32 %v865, %v871
      %v880 = vmul.f32 %v866, %v871
      %881 = vadd.xlane.f32.xlu0 %v873
      %v882 = vpop.xlane.xlu0 %881
      %883 = vadd.xlane.f32.xlu0 %v874
      %v884 = vpop.xlane.xlu0 %883
      %885 = vadd.xlane.f32.xlu0 %v875
      %v886 = vpop.xlane.xlu0 %885
      %887 = vadd.xlane.f32.xlu0 %v876
      %v888 = vpop.xlane.xlu0 %887
      %889 = vadd.xlane.f32.xlu0 %v877
      %v890 = vpop.xlane.xlu0 %889
      %891 = vadd.xlane.f32.xlu0 %v878
      %v892 = vpop.xlane.xlu0 %891
      %893 = vadd.xlane.f32.xlu0 %v879
      %v894 = vpop.xlane.xlu0 %893
      %895 = vadd.xlane.f32.xlu0 %v880
      %v896 = vpop.xlane.xlu0 %895
      %v897 = vadd.f32 %v882, -0.1588158
      %v898 = vadd.f32 %v884, -0.1588158
      %v899 = vadd.f32 %v886, -0.1588158
      %v900 = vadd.f32 %v888, -0.1588158
      %v901 = vadd.f32 %v890, -0.1588158
      %v902 = vadd.f32 %v892, -0.1588158
      %v903 = vadd.f32 %v894, -0.1588158
      %v904 = vadd.f32 %v896, -0.1588158
      %v905 = vand.u32 2147483647, %v897
      %v906 = vand.u32 2147483647, %v898
      %v907 = vand.u32 2147483647, %v899
      %v908 = vand.u32 2147483647, %v900
      %v909 = vand.u32 2147483647, %v901
      %v910 = vand.u32 2147483647, %v902
      %v911 = vand.u32 2147483647, %v903
      %v912 = vand.u32 2147483647, %v904
      %v913 = vsub.f32 0.0, %v905
      %v914 = vsub.f32 0.0, %v906
      %v915 = vsub.f32 0.0, %v907
      %v916 = vsub.f32 0.0, %v908
      %v917 = vsub.f32 0.0, %v909
      %v918 = vsub.f32 0.0, %v910
      %v919 = vsub.f32 0.0, %v911
      %v920 = vsub.f32 0.0, %v912
      %v921 = vmul.f32 %v913, 1.442695
      %v922 = vpow.pop %v921
      %v923 = vmul.f32 %v914, 1.442695
      %v924 = vpow.pop %v923
      %v925 = vmul.f32 %v915, 1.442695
      %v926 = vpow.pop %v925
      %v927 = vmul.f32 %v916, 1.442695
      %v928 = vpow.pop %v927
      %v929 = vmul.f32 %v917, 1.442695
      %v930 = vpow.pop %v929
      %v931 = vmul.f32 %v918, 1.442695
      %v932 = vpow.pop %v931
      %v933 = vmul.f32 %v919, 1.442695
      %v934 = vpow.pop %v933
      %v935 = vmul.f32 %v920, 1.442695
      %v936 = vpow.pop %v935
      %vm937 = vcmp.ge.f32.partialorder %v897, 0.0
      %vm938 = vcmp.ge.f32.partialorder %v898, 0.0
      %vm939 = vcmp.ge.f32.partialorder %v899, 0.0
      %vm940 = vcmp.ge.f32.partialorder %v900, 0.0
      %vm941 = vcmp.ge.f32.partialorder %v901, 0.0
      %vm942 = vcmp.ge.f32.partialorder %v902, 0.0
      %vm943 = vcmp.ge.f32.partialorder %v903, 0.0
      %vm944 = vcmp.ge.f32.partialorder %v904, 0.0
      %v945 = vsel %vm937, 1.0, %v922
      %v946 = vsel %vm938, 1.0, %v924
      %v947 = vsel %vm939, 1.0, %v926
      %v948 = vsel %vm940, 1.0, %v928
      %v949 = vsel %vm941, 1.0, %v930
      %v950 = vsel %vm942, 1.0, %v932
      %v951 = vsel %vm943, 1.0, %v934
      %v952 = vsel %vm944, 1.0, %v936
      %v953 = vadd.f32 %v922, 1.0
      %v954 = vadd.f32 %v924, 1.0
      %v955 = vadd.f32 %v926, 1.0
      %v956 = vadd.f32 %v928, 1.0
      %v957 = vadd.f32 %v930, 1.0
      %v958 = vadd.f32 %v932, 1.0
      %v959 = vadd.f32 %v934, 1.0
      %v960 = vadd.f32 %v936, 1.0
      %v961 = vrcp.pop %v953
      %v962 = vrcp.pop %v954
      %v963 = vrcp.pop %v955
      %v964 = vrcp.pop %v956
      %v965 = vrcp.pop %v957
      %v966 = vrcp.pop %v958
      %v967 = vrcp.pop %v959
      %v968 = vrcp.pop %v960
      %v969 = vmul.f32 %v945, %v961
      %v970 = vmul.f32 %v946, %v962
      %v971 = vmul.f32 %v947, %v963
      %v972 = vmul.f32 %v948, %v964
      %v973 = vmul.f32 %v949, %v965
      %v974 = vmul.f32 %v950, %v966
      %v975 = vmul.f32 %v951, %v967
      %v976 = vmul.f32 %v952, %v968
      %v977 = vunpack.c.l.bf16 %v403
      %v978 = vunpack.c.l.bf16 %v404
      %v979 = vunpack.c.l.bf16 %v405
      %v980 = vunpack.c.l.bf16 %v406
      %v981 = vunpack.c.l.bf16 %v407
      %v982 = vunpack.c.l.bf16 %v408
      %v983 = vunpack.c.l.bf16 %v409
      %v984 = vunpack.c.l.bf16 %v410
      %v985 = vmul.f32 %v977, %v708
      %v986 = vmul.f32 %v978, %v709
      %v987 = vmul.f32 %v979, %v710
      %v988 = vmul.f32 %v980, %v711
      %v989 = vmul.f32 %v981, %v712
      %v990 = vmul.f32 %v982, %v713
      %v991 = vmul.f32 %v983, %v714
      %v992 = vmul.f32 %v984, %v715
      %v993 = vunpack.c.l.bf16 %v411
      %v994 = vunpack.c.l.bf16 %v412
      %v995 = vunpack.c.l.bf16 %v413
      %v996 = vunpack.c.l.bf16 %v414
      %v997 = vunpack.c.l.bf16 %v415
      %v998 = vunpack.c.l.bf16 %v416
      %v999 = vunpack.c.l.bf16 %v417
      %v1000 = vunpack.c.l.bf16 %v418
      %v1001 = vmul.f32 %v993, %v969
      %v1002 = vmul.f32 %v994, %v970
      %v1003 = vmul.f32 %v995, %v971
      %v1004 = vmul.f32 %v996, %v972
      %v1005 = vmul.f32 %v997, %v973
      %v1006 = vmul.f32 %v998, %v974
      %v1007 = vmul.f32 %v999, %v975
      %v1008 = vmul.f32 %v1000, %v976
      %p1009 = scmp.eq.s32.totalorder %s26, 0
      // Predicated region
      $region53: #{attention_stage_forward.23} parent=51 // pred_check
        %p1010 = pneg %p1009
      $region54: #{attention_stage_forward.23} parent=51 // pred_check_branch
        %1012 = sbr.rel (%p1010) target = $region56
      $region55: #{attention_stage_forward.23} parent=51 // pred_region
        %1013 = vst [vmem:[%s398] sm:$0x1] 0.0
        %1014 = vst [vmem:[%s401] sm:$0x1] 0.0
      $region56: #{attention_stage_forward.23} parent=51 // pred_fallthru
        _
      %v1015 = vld [vmem:[%s398] sm:$0x1]
      %v1016 = vadd.f32 %v985, %v986
      %v1017 = vadd.f32 %v1016, %v987
      %v1018 = vadd.f32 %v1017, %v988
      %v1019 = vadd.f32 %v1018, %v989
      %v1020 = vadd.f32 %v1019, %v990
      %v1021 = vadd.f32 %v1020, %v991
      %v1022 = vadd.f32 %v1021, %v992
      %v1023 = vrot.slane %v1022, 4
      %v1024 = vadd.f32 %v1022, %v1023
      %v1025 = vrot.slane %v1024, 2
      %v1026 = vadd.f32 %v1024, %v1025
      %v1027 = vrot.slane %v1026, 1
      %v1028 = vadd.f32 %v1026, %v1027
      %v1029 = vadd.f32 %v1015, %v1028
      %1030 = vst [vmem:[%s398] sm:$0x1] %v1029
      %v1031 = vld [vmem:[%s401] sm:$0x1]
      %v1032 = vadd.f32 %v1001, %v1002
      %v1033 = vadd.f32 %v1032, %v1003
      %v1034 = vadd.f32 %v1033, %v1004
      %v1035 = vadd.f32 %v1034, %v1005
      %v1036 = vadd.f32 %v1035, %v1006
      %v1037 = vadd.f32 %v1036, %v1007
      %v1038 = vadd.f32 %v1037, %v1008
      %v1039 = vrot.slane %v1038, 4
      %v1040 = vadd.f32 %v1038, %v1039
      %v1041 = vrot.slane %v1040, 2
      %v1042 = vadd.f32 %v1040, %v1041
      %v1043 = vrot.slane %v1042, 1
      %v1044 = vadd.f32 %v1042, %v1043
      %v1045 = vadd.f32 %v1031, %v1044
      %1046 = vst [vmem:[%s401] sm:$0x1] %v1045
      %p1047 = scmp.lt.s32.totalorder %s25, 3
      %s1048 = scalar_select %p1047, %s25, 3
      %s1049 = scalar_lea.vmem %s8, %s1048
      %p1050 = scmp.lt.s32.totalorder %s25, 3
      %s1051 = scalar_select %p1050, %s25, 3
      %s1052 = scalar_lea.vmem %s9, %s1051
      // Predicated region
      $region57: #{attention_stage_forward.23} parent=51 // pred_check
        %p1053 = pneg %p233
      $region58: #{attention_stage_forward.23} parent=51 // pred_check_branch
        %1055 = sbr.rel (%p1053) target = $region60
      $region59: #{attention_stage_forward.23} parent=51 // pred_region
        _
      $region60: #{attention_stage_forward.23} parent=51 // pred_fallthru
        _
      // Predicated region
      $region61: #{attention_stage_forward.23} parent=51 // pred_check
        %p1056 = pneg %p259
      $region62: #{attention_stage_forward.23} parent=51 // pred_check_branch
        %1058 = sbr.rel (%p1056) target = $region64
      $region63: #{attention_stage_forward.23} parent=51 // pred_region
        _
      $region64: #{attention_stage_forward.23} parent=51 // pred_fallthru
        _
    $region52: #{attention_stage_forward.23} parent=5 // pred_fallthru
      _
    %p1059 = scmp.le.s32.totalorder 2, %s16
    // Predicated region
    $region65: #{attention_stage_forward.23} parent=5 // pred_check
      %p1060 = pneg %p1059
    $region66: #{attention_stage_forward.23} parent=5 // pred_check_branch
      %1062 = sbr.rel (%p1060) target = $region68
    $region67: #{attention_stage_forward.23} parent=5 // pred_region
      %s1063 = ssub.s32 %s16, 2
      // Predicated region
      $region69: #{attention_stage_forward.23} parent=67 // pred_check
        %p1064 = pneg %p239
      $region70: #{attention_stage_forward.23} parent=67 // pred_check_branch
        %1066 = sbr.rel (%p1064) target = $region72
      $region71: #{attention_stage_forward.23} parent=67 // pred_region
        %p1067 = scmp.lt.s32.totalorder %s27, 3
        %s1068 = scalar_select %p1067, %s27, 3
        %s1069 = scalar_lea.vmem %s8, %s1068
      $region72: #{attention_stage_forward.23} parent=67 // pred_fallthru
        _
      // Predicated region
      $region73: #{attention_stage_forward.23} parent=67 // pred_check
        %p1070 = pneg %p265
      $region74: #{attention_stage_forward.23} parent=67 // pred_check_branch
        %1072 = sbr.rel (%p1070) target = $region76
      $region75: #{attention_stage_forward.23} parent=67 // pred_region
        %p1073 = scmp.lt.s32.totalorder %s27, 3
        %s1074 = scalar_select %p1073, %s27, 3
        %s1075 = scalar_lea.vmem %s9, %s1074
      $region76: #{attention_stage_forward.23} parent=67 // pred_fallthru
        _
    $region68: #{attention_stage_forward.23} parent=5 // pred_fallthru
      _
  $region6: #{attention_stage_forward.23} parent=0 // loop_footer
    %s20 = sadd.s32 1, %s16
  $region7: #{attention_stage_forward.23} parent=0 // loop_footer_branch
    %15 = sbr.rel target = $region3
  $region8: #{attention_stage_forward.23} parent=0 // loop_exit
    _

// kernel: attention_stage_forward.24
$region0: #{attention_stage_forward.24}
  #allocation0 [shape = 'u32[]', space=smem, size = 0x4, offset = 0x4, fixed_abs, tag = 'smem constant byte address 0x4 - core index']
  #allocation1 [shape = 'u32[144,128]{1,0:T(1,128)}', space=vmem, size = 0x12000, scoped, tag = 'internal scratch']
  %s0 = inlined_call_operand.vmem [shape: f32[4,128], index: 0, kind: input, shape index: {}]
  %s1 = inlined_call_operand.vmem [shape: f32[4,128], index: 1, kind: input, shape index: {}]
  %s2 = inlined_call_operand.vmem [shape: f32[4,128], index: 2, kind: output, shape index: {0}]
  %s3 = inlined_call_operand.vmem [shape: f32[4,128], index: 3, kind: output, shape index: {1}]
  %4 = xla_tuple %s2, %s3
  %s5 = sld [smem:[#allocation0]]
  $region26: #{attention_stage_forward.24} parent=0
    _
  %s7 = ssub.s32 1, %s5
  %s8 = scalar_select 0, %s7, %s5
  // Predicated region
  $region2: #{attention_stage_forward.24} parent=0 // pred_check
    _
  $region3: #{attention_stage_forward.24} parent=0 // pred_check_branch
    %10 = sbr.rel (0) target = $region5
  $region4: #{attention_stage_forward.24} parent=0 // pred_region
    _
  $region5: #{attention_stage_forward.24} parent=0 // pred_fallthru
    _
  // Predicated region
  $region6: #{attention_stage_forward.24} parent=0 // pred_check
    _
  $region7: #{attention_stage_forward.24} parent=0 // pred_check_branch
    %12 = sbr.rel (0) target = $region9
  $region8: #{attention_stage_forward.24} parent=0 // pred_region
    _
  $region9: #{attention_stage_forward.24} parent=0 // pred_fallthru
    _
  %v13 = vld [vmem:[%s0] sm:$0xf]
  %v14 = vld [vmem:[%s1] sm:$0xf]
  %v15 = vlaneseq
  %v16 = vshrl.u32 %v15, 7
  %v17 = vlaneseq
  %v18 = vand.u32 %v17, 127
  %vm19 = vcmp.eq.s32.totalorder %v16, %v18
  %v20 = vsel %vm19, 1, 0
  %v21 = vcvt.s32.f32 %v20
  %22 = vmatprep.subr.mxu0 0.0
  %23 = vmatpush1.xpose.msra.mxu0 %v14
  %24 = vmatprep.subr.mxu0 0.0
  %25 = vmatpush1.xpose.msra.mxu0 0.0
  %26 = vmatprep.subr.mxu0 0.0
  %27 = vmatpush1.xpose.msra.mxu0 0.0
  %28 = vmatprep.subr.mxu0 0.0
  %29 = vmatpush1.xpose.msra.mxu0 0.0
  %30 = vmatprep.subr.mxu0 0.0
  %31 = vmatpush1.xpose.msra.mxu0 0.0
  %32 = vmatprep.subr.mxu0 0.0
  %33 = vmatpush1.xpose.msra.mxu0 0.0
  %34 = vmatprep.subr.mxu0 0.0
  %35 = vmatpush1.xpose.msra.mxu0 0.0
  %36 = vmatprep.subr.mxu0 0.0
  %37 = vmatpush1.xpose.msra.mxu0 0.0
  %38 = vmatprep.subr.mxu0 0.0
  %39 = vmatpush1.xpose.msra.mxu0 0.0
  %40 = vmatprep.subr.mxu0 0.0
  %41 = vmatpush1.xpose.msra.mxu0 0.0
  %42 = vmatprep.subr.mxu0 0.0
  %43 = vmatpush1.xpose.msra.mxu0 0.0
  %44 = vmatprep.subr.mxu0 0.0
  %45 = vmatpush1.xpose.msra.mxu0 0.0
  %46 = vmatprep.subr.mxu0 0.0
  %47 = vmatpush1.xpose.msra.mxu0 0.0
  %48 = vmatprep.subr.mxu0 0.0
  %49 = vmatpush1.xpose.msra.mxu0 0.0
  %50 = vmatprep.subr.mxu0 0.0
  %51 = vmatpush1.xpose.msra.mxu0 0.0
  %52 = vmatprep.subr.mxu0 0.0
  %53 = vmatpush1.xpose.msra.mxu0 0.0
  %54 = vmatprep.subr.mxu0 0.0
  %55 = vmatpush1.xpose.msra.mxu0 0.0
  %56 = vmatprep.subr.mxu0 0.0
  %57 = vmatpush1.xpose.msra.mxu0 0.0
  %58 = vmatprep.subr.mxu0 0.0
  %59 = vmatpush1.xpose.msra.mxu0 0.0
  %60 = vmatprep.subr.mxu0 0.0
  %61 = vmatpush1.xpose.msra.mxu0 0.0
  %62 = vmatprep.subr.mxu0 0.0
  %63 = vmatpush1.xpose.msra.mxu0 0.0
  %64 = vmatprep.subr.mxu0 0.0
  %65 = vmatpush1.xpose.msra.mxu0 0.0
  %66 = vmatprep.subr.mxu0 0.0
  %67 = vmatpush1.xpose.msra.mxu0 0.0
  %68 = vmatprep.subr.mxu0 0.0
  %69 = vmatpush1.xpose.msra.mxu0 0.0
  %70 = vmatprep.subr.mxu0 0.0
  %71 = vmatpush1.xpose.msra.mxu0 0.0
  %72 = vmatprep.subr.mxu0 0.0
  %73 = vmatpush1.xpose.msra.mxu0 0.0
  %74 = vmatprep.subr.mxu0 0.0
  %75 = vmatpush1.xpose.msra.mxu0 0.0
  %76 = vmatprep.subr.mxu0 0.0
  %77 = vmatpush1.xpose.msra.mxu0 0.0
  %78 = vmatprep.subr.mxu0 0.0
  %79 = vmatpush1.xpose.msra.mxu0 0.0
  %80 = vmatprep.subr.mxu0 0.0
  %81 = vmatpush1.xpose.msra.mxu0 0.0
  %82 = vmatprep.subr.mxu0 0.0
  %83 = vmatpush1.xpose.msra.mxu0 0.0
  %84 = vmatprep.subr.mxu0 0.0
  %85 = vmatpush1.xpose.msra.mxu0 0.0
  %86 = vmatprep.mubr.f32.mxu0 0.0
  %87 = vmatmul.mubr.f32.gmra.mrb[0].mxu0 %v13
  %v88 = vpop.f32.mrb[0].mxu0
  %v89 = vadd.f32 0.0, %v88
  %v90 = vpop.f32.mrb[0].mxu0
  %91 = vdwg.mxu0
  %v92 = vmul.f32 %v89, 0.00012207031
  %vm93 = vcmask 27648
  %v94 = vsel %vm93, %v92, -inf
  %95 = vmax.xlane.f32.xlu0 %v94
  %v96 = vpop.xlane.xlu0 %95
  %v97 = vsub.f32 %v92, %v96
  %v98 = vmul.f32 %v97, 1.442695
  %v99 = vpow.pop %v98
  %v100 = vsel %vm93, %v99, 0.0
  %101 = vadd.xlane.f32.xlu0 %v100
  %v102 = vpop.xlane.xlu0 %101
  %v103 = vrcp.pop %v102
  %v104 = vmul.f32 %v99, %v103
  %vm105 = vcmask 31744
  %v107 = vsel %vm105, %v104, 0
  %vm109 = vcmask 1043456
  %v111 = vsel %vm109, %v21, 0
  %113 = vmatprep.subr.mxu0 0.0
  %114 = vmatpush1.msra.mxu0 %v111
  %115 = vmatprep.subr.mxu0 0.0
  %116 = vmatpush1.msra.mxu0 0.0
  %117 = vmatprep.subr.mxu0 0.0
  %118 = vmatpush1.msra.mxu0 0.0
  %119 = vmatprep.subr.mxu0 0.0
  %120 = vmatpush1.msra.mxu0 0.0
  %121 = vmatprep.subr.mxu0 0.0
  %122 = vmatpush1.msra.mxu0 0.0
  %123 = vmatprep.subr.mxu0 0.0
  %124 = vmatpush1.msra.mxu0 0.0
  %125 = vmatprep.subr.mxu0 0.0
  %126 = vmatpush1.msra.mxu0 0.0
  %127 = vmatprep.subr.mxu0 0.0
  %128 = vmatpush1.msra.mxu0 0.0
  %129 = vmatprep.subr.mxu0 0.0
  %130 = vmatpush1.msra.mxu0 0.0
  %131 = vmatprep.subr.mxu0 0.0
  %132 = vmatpush1.msra.mxu0 0.0
  %133 = vmatprep.subr.mxu0 0.0
  %134 = vmatpush1.msra.mxu0 0.0
  %135 = vmatprep.subr.mxu0 0.0
  %136 = vmatpush1.msra.mxu0 0.0
  %137 = vmatprep.subr.mxu0 0.0
  %138 = vmatpush1.msra.mxu0 0.0
  %139 = vmatprep.subr.mxu0 0.0
  %140 = vmatpush1.msra.mxu0 0.0
  %141 = vmatprep.subr.mxu0 0.0
  %142 = vmatpush1.msra.mxu0 0.0
  %143 = vmatprep.subr.mxu0 0.0
  %144 = vmatpush1.msra.mxu0 0.0
  %145 = vmatprep.subr.mxu0 0.0
  %146 = vmatpush1.msra.mxu0 0.0
  %147 = vmatprep.subr.mxu0 0.0
  %148 = vmatpush1.msra.mxu0 0.0
  %149 = vmatprep.subr.mxu0 0.0
  %150 = vmatpush1.msra.mxu0 0.0
  %151 = vmatprep.subr.mxu0 0.0
  %152 = vmatpush1.msra.mxu0 0.0
  %153 = vmatprep.subr.mxu0 0.0
  %154 = vmatpush1.msra.mxu0 0.0
  %155 = vmatprep.subr.mxu0 0.0
  %156 = vmatpush1.msra.mxu0 0.0
  %157 = vmatprep.subr.mxu0 0.0
  %158 = vmatpush1.msra.mxu0 0.0
  %159 = vmatprep.subr.mxu0 0.0
  %160 = vmatpush1.msra.mxu0 0.0
  %161 = vmatprep.subr.mxu0 0.0
  %162 = vmatpush1.msra.mxu0 0.0
  %163 = vmatprep.subr.mxu0 0.0
  %164 = vmatpush1.msra.mxu0 0.0
  %165 = vmatprep.subr.mxu0 0.0
  %166 = vmatpush1.msra.mxu0 0.0
  %167 = vmatprep.subr.mxu0 0.0
  %168 = vmatpush1.msra.mxu0 0.0
  %169 = vmatprep.subr.mxu0 0.0
  %170 = vmatpush1.msra.mxu0 0.0
  %171 = vmatprep.subr.mxu0 0.0
  %172 = vmatpush1.msra.mxu0 0.0
  %173 = vmatprep.subr.mxu0 0.0
  %174 = vmatpush1.msra.mxu0 0.0
  %175 = vmatprep.subr.mxu0 0.0
  %176 = vmatpush1.msra.mxu0 0.0
  %177 = vmatprep.mubr.f32.mxu0 0.0
  %178 = vmatmul.mubr.f32.gmra.mrb[0].mxu0 %v107
  %v179 = vpop.f32.mrb[0].mxu0
  %v180 = vadd.f32 0.0, %v179
  %v181 = vpop.f32.mrb[0].mxu0
  %182 = vdwg.mxu0
  %183 = vst [vmem:[%s2] sm:$0xf] %v180
  %184 = vmatprep.subr.mxu0 0.0
  %185 = vmatpush1.xpose.msra.mxu0 %v13
  %186 = vmatprep.subr.mxu0 0.0
  %187 = vmatpush1.xpose.msra.mxu0 0.0
  %188 = vmatprep.subr.mxu0 0.0
  %189 = vmatpush1.xpose.msra.mxu0 0.0
  %190 = vmatprep.subr.mxu0 0.0
  %191 = vmatpush1.xpose.msra.mxu0 0.0
  %192 = vmatprep.subr.mxu0 0.0
  %193 = vmatpush1.xpose.msra.mxu0 0.0
  %194 = vmatprep.subr.mxu0 0.0
  %195 = vmatpush1.xpose.msra.mxu0 0.0
  %196 = vmatprep.subr.mxu0 0.0
  %197 = vmatpush1.xpose.msra.mxu0 0.0
  %198 = vmatprep.subr.mxu0 0.0
  %199 = vmatpush1.xpose.msra.mxu0 0.0
  %200 = vmatprep.subr.mxu0 0.0
  %201 = vmatpush1.xpose.msra.mxu0 0.0
  %202 = vmatprep.subr.mxu0 0.0
  %203 = vmatpush1.xpose.msra.mxu0 0.0
  %204 = vmatprep.subr.mxu0 0.0
  %205 = vmatpush1.xpose.msra.mxu0 0.0
  %206 = vmatprep.subr.mxu0 0.0
  %207 = vmatpush1.xpose.msra.mxu0 0.0
  %208 = vmatprep.subr.mxu0 0.0
  %209 = vmatpush1.xpose.msra.mxu0 0.0
  %210 = vmatprep.subr.mxu0 0.0
  %211 = vmatpush1.xpose.msra.mxu0 0.0
  %212 = vmatprep.subr.mxu0 0.0
  %213 = vmatpush1.xpose.msra.mxu0 0.0
  %214 = vmatprep.subr.mxu0 0.0
  %215 = vmatpush1.xpose.msra.mxu0 0.0
  %216 = vmatprep.subr.mxu0 0.0
  %217 = vmatpush1.xpose.msra.mxu0 0.0
  %218 = vmatprep.subr.mxu0 0.0
  %219 = vmatpush1.xpose.msra.mxu0 0.0
  %220 = vmatprep.subr.mxu0 0.0
  %221 = vmatpush1.xpose.msra.mxu0 0.0
  %222 = vmatprep.subr.mxu0 0.0
  %223 = vmatpush1.xpose.msra.mxu0 0.0
  %224 = vmatprep.subr.mxu0 0.0
  %225 = vmatpush1.xpose.msra.mxu0 0.0
  %226 = vmatprep.subr.mxu0 0.0
  %227 = vmatpush1.xpose.msra.mxu0 0.0
  %228 = vmatprep.subr.mxu0 0.0
  %229 = vmatpush1.xpose.msra.mxu0 0.0
  %230 = vmatprep.subr.mxu0 0.0
  %231 = vmatpush1.xpose.msra.mxu0 0.0
  %232 = vmatprep.subr.mxu0 0.0
  %233 = vmatpush1.xpose.msra.mxu0 0.0
  %234 = vmatprep.subr.mxu0 0.0
  %235 = vmatpush1.xpose.msra.mxu0 0.0
  %236 = vmatprep.subr.mxu0 0.0
  %237 = vmatpush1.xpose.msra.mxu0 0.0
  %238 = vmatprep.subr.mxu0 0.0
  %239 = vmatpush1.xpose.msra.mxu0 0.0
  %240 = vmatprep.subr.mxu0 0.0
  %241 = vmatpush1.xpose.msra.mxu0 0.0
  %242 = vmatprep.subr.mxu0 0.0
  %243 = vmatpush1.xpose.msra.mxu0 0.0
  %244 = vmatprep.subr.mxu0 0.0
  %245 = vmatpush1.xpose.msra.mxu0 0.0
  %246 = vmatprep.subr.mxu0 0.0
  %247 = vmatpush1.xpose.msra.mxu0 0.0
  %248 = vmatprep.mubr.f32.mxu0 0.0
  %249 = vmatmul.mubr.f32.gmra.mrb[0].mxu0 %v14
  %v250 = vpop.f32.mrb[0].mxu0
  %v251 = vadd.f32 0.0, %v250
  %v252 = vpop.f32.mrb[0].mxu0
  %253 = vdwg.mxu0
  %v254 = vmul.f32 %v251, 0.00012207031
  %v255 = vsel %vm93, %v254, -inf
  %256 = vmax.xlane.f32.xlu0 %v255
  %v257 = vpop.xlane.xlu0 %256
  %v258 = vsub.f32 %v254, %v257
  %v259 = vmul.f32 %v258, 1.442695
  %v260 = vpow.pop %v259
  %v261 = vsel %vm93, %v260, 0.0
  %262 = vadd.xlane.f32.xlu0 %v261
  %v263 = vpop.xlane.xlu0 %262
  %v264 = vrcp.pop %v263
  %v265 = vmul.f32 %v260, %v264
  %v267 = vsel %vm105, %v265, 0
  %269 = vmatprep.subr.mxu0 0.0
  %270 = vmatpush1.msra.mxu0 %v111
  %271 = vmatprep.subr.mxu0 0.0
  %272 = vmatpush1.msra.mxu0 0.0
  %273 = vmatprep.subr.mxu0 0.0
  %274 = vmatpush1.msra.mxu0 0.0
  %275 = vmatprep.subr.mxu0 0.0
  %276 = vmatpush1.msra.mxu0 0.0
  %277 = vmatprep.subr.mxu0 0.0
  %278 = vmatpush1.msra.mxu0 0.0
  %279 = vmatprep.subr.mxu0 0.0
  %280 = vmatpush1.msra.mxu0 0.0
  %281 = vmatprep.subr.mxu0 0.0
  %282 = vmatpush1.msra.mxu0 0.0
  %283 = vmatprep.subr.mxu0 0.0
  %284 = vmatpush1.msra.mxu0 0.0
  %285 = vmatprep.subr.mxu0 0.0
  %286 = vmatpush1.msra.mxu0 0.0
  %287 = vmatprep.subr.mxu0 0.0
  %288 = vmatpush1.msra.mxu0 0.0
  %289 = vmatprep.subr.mxu0 0.0
  %290 = vmatpush1.msra.mxu0 0.0
  %291 = vmatprep.subr.mxu0 0.0
  %292 = vmatpush1.msra.mxu0 0.0
  %293 = vmatprep.subr.mxu0 0.0
  %294 = vmatpush1.msra.mxu0 0.0
  %295 = vmatprep.subr.mxu0 0.0
  %296 = vmatpush1.msra.mxu0 0.0
  %297 = vmatprep.subr.mxu0 0.0
  %298 = vmatpush1.msra.mxu0 0.0
  %299 = vmatprep.subr.mxu0 0.0
  %300 = vmatpush1.msra.mxu0 0.0
  %301 = vmatprep.subr.mxu0 0.0
  %302 = vmatpush1.msra.mxu0 0.0
  %303 = vmatprep.subr.mxu0 0.0
  %304 = vmatpush1.msra.mxu0 0.0
  %305 = vmatprep.subr.mxu0 0.0
  %306 = vmatpush1.msra.mxu0 0.0
  %307 = vmatprep.subr.mxu0 0.0
  %308 = vmatpush1.msra.mxu0 0.0
  %309 = vmatprep.subr.mxu0 0.0
  %310 = vmatpush1.msra.mxu0 0.0
  %311 = vmatprep.subr.mxu0 0.0
  %312 = vmatpush1.msra.mxu0 0.0
  %313 = vmatprep.subr.mxu0 0.0
  %314 = vmatpush1.msra.mxu0 0.0
  %315 = vmatprep.subr.mxu0 0.0
  %316 = vmatpush1.msra.mxu0 0.0
  %317 = vmatprep.subr.mxu0 0.0
  %318 = vmatpush1.msra.mxu0 0.0
  %319 = vmatprep.subr.mxu0 0.0
  %320 = vmatpush1.msra.mxu0 0.0
  %321 = vmatprep.subr.mxu0 0.0
  %322 = vmatpush1.msra.mxu0 0.0
  %323 = vmatprep.subr.mxu0 0.0
  %324 = vmatpush1.msra.mxu0 0.0
  %325 = vmatprep.subr.mxu0 0.0
  %326 = vmatpush1.msra.mxu0 0.0
  %327 = vmatprep.subr.mxu0 0.0
  %328 = vmatpush1.msra.mxu0 0.0
  %329 = vmatprep.subr.mxu0 0.0
  %330 = vmatpush1.msra.mxu0 0.0
  %331 = vmatprep.subr.mxu0 0.0
  %332 = vmatpush1.msra.mxu0 0.0
  %333 = vmatprep.mubr.f32.mxu0 0.0
  %334 = vmatmul.mubr.f32.gmra.mrb[0].mxu0 %v267
  %v335 = vpop.f32.mrb[0].mxu0
  %v336 = vadd.f32 0.0, %v335
  %v337 = vpop.f32.mrb[0].mxu0
  %338 = vdwg.mxu0
  %339 = vst [vmem:[%s3] sm:$0xf] %v336
  // Predicated region
  $region10: #{attention_stage_forward.24} parent=0 // pred_check
    _
  $region11: #{attention_stage_forward.24} parent=0 // pred_check_branch
    %341 = sbr.rel (0) target = $region13
  $region12: #{attention_stage_forward.24} parent=0 // pred_region
    _
  $region13: #{attention_stage_forward.24} parent=0 // pred_fallthru
    _
  // Predicated region
  $region14: #{attention_stage_forward.24} parent=0 // pred_check
    _
  $region15: #{attention_stage_forward.24} parent=0 // pred_check_branch
    %343 = sbr.rel (0) target = $region17
  $region16: #{attention_stage_forward.24} parent=0 // pred_region
    _
  $region17: #{attention_stage_forward.24} parent=0 // pred_fallthru
    _
  // Predicated region
  $region18: #{attention_stage_forward.24} parent=0 // pred_check
    _
  $region19: #{attention_stage_forward.24} parent=0 // pred_check_branch
    %345 = sbr.rel (0) target = $region21
  $region20: #{attention_stage_forward.24} parent=0 // pred_region
    _
  $region21: #{attention_stage_forward.24} parent=0 // pred_fallthru
    _
  // Predicated region
  $region22: #{attention_stage_forward.24} parent=0 // pred_check
    _
  $region23: #{attention_stage_forward.24} parent=0 // pred_check_branch
    %347 = sbr.rel (0) target = $region25
  $region24: #{attention_stage_forward.24} parent=0 // pred_region
    _
  $region25: #{attention_stage_forward.24} parent=0 // pred_fallthru
    _

// kernel: attention_stage_forward.25
$region0: #{attention_stage_forward.25}
  #allocation0 [shape = 'u32[]', space=smem, size = 0x4, offset = 0x4, fixed_abs, tag = 'smem constant byte address 0x4 - core index']
  #allocation1 [shape = 'u32[144,128]{1,0:T(1,128)}', space=vmem, size = 0x12000, scoped, tag = 'internal scratch']
  %s0 = inlined_call_operand.vmem [shape: bf16[4,64,128], index: 0, kind: input, shape index: {}]
  %s1 = inlined_call_operand.vmem [shape: bf16[4,64,128], index: 1, kind: input, shape index: {}]
  %s2 = inlined_call_operand.vmem [shape: bf16[128,128], index: 2, kind: input, shape index: {}]
  %s3 = inlined_call_operand.vmem [shape: f32[1,128], index: 3, kind: input, shape index: {}]
  %s4 = inlined_call_operand.vmem [shape: f32[1,128], index: 4, kind: input, shape index: {}]
  %s5 = inlined_call_operand.vmem [shape: bf16[128,128], index: 5, kind: input, shape index: {}]
  %s6 = inlined_call_operand.vmem [shape: f32[1,128], index: 6, kind: input, shape index: {}]
  %s7 = inlined_call_operand.vmem [shape: f32[1,128], index: 7, kind: input, shape index: {}]
  %s8 = inlined_call_operand.vmem [shape: f32[4,1,128], index: 8, kind: input, shape index: {}]
  %s9 = inlined_call_operand.vmem [shape: f32[4,1,128], index: 9, kind: input, shape index: {}]
  %s10 = inlined_call_operand.vmem [shape: bf16[4,64,128], index: 10, kind: output, shape index: {0}]
  %s11 = inlined_call_operand.vmem [shape: bf16[4,64,128], index: 11, kind: output, shape index: {1}]
  %12 = xla_tuple %s10, %s11
  %s13 = sld [smem:[#allocation0]]
  $region81: #{attention_stage_forward.25} parent=0
    _
  %s15 = ssub.s32 1, %s13
  %s16 = scalar_select 0, %s15, %s13
  loop: start=0, step=1, limit=6
  $region2: #{attention_stage_forward.25} parent=0 // loop_pre_header
    _
  $region3: #{attention_stage_forward.25} parent=0 // loop_header
    %s18 = sphi 0, %s22
    %p19 = scmp.ge.s32.totalorder %s18, 6
    %s25 = sphi 0, %s37
    %s26 = sphi 0, %s33
    %s27 = sphi 0, %s25
    %s28 = sphi 0, %s26
    %s29 = sphi 0, %s27
    %s30 = sphi 0, %s28
    %s42 = sphi 0, %s44
    %s45 = sphi 0, %s42
    %s46 = sphi 0, %s45
    %s62 = sphi 0, %s46
    %s70 = sphi 0, %s72
    %s73 = sphi 0, %s70
    %s74 = sphi 0, %s73
    %s90 = sphi 0, %s74
    %s94 = sphi 0, %s94
    %s96 = sphi 0, %s94
    %s97 = sphi 0, %s96
    %s111 = sphi 0, %s97
    %s115 = sphi 0, %s115
    %s117 = sphi 0, %s115
    %s118 = sphi 0, %s117
    %s132 = sphi 0, %s118
    %s136 = sphi 0, %s136
    %s138 = sphi 0, %s136
    %s139 = sphi 0, %s138
    %s153 = sphi 0, %s139
    %s157 = sphi 0, %s157
    %s159 = sphi 0, %s157
    %s160 = sphi 0, %s159
    %s174 = sphi 0, %s160
    %s178 = sphi 0, %s178
    %s180 = sphi 0, %s178
    %s181 = sphi 0, %s180
    %s195 = sphi 0, %s181
    %s199 = sphi 0, %s199
    %s201 = sphi 0, %s199
    %s202 = sphi 0, %s201
    %s216 = sphi 0, %s202
    %s222 = sphi 0, %s224
    %s225 = sphi 0, %s222
    %s226 = sphi 0, %s225
    %s242 = sphi 0, %s226
    %s248 = sphi 0, %s250
    %s251 = sphi 0, %s248
    %s252 = sphi 0, %s251
    %s268 = sphi 0, %s252
    %s276 = sphi 0, %s278
    %s279 = sphi 0, %s276
    %s280 = sphi 0, %s279
    %s296 = sphi 0, %s280
    %s304 = sphi 0, %s306
    %s307 = sphi 0, %s304
    %s308 = sphi 0, %s307
    %s324 = sphi 0, %s308
  $region4: #{attention_stage_forward.25} parent=0 // loop_header_branch
    %21 = sbr.rel (%p19) target = $region8
  $region5: #{attention_stage_forward.25} parent=0 // loop_body
    %s23 = ssub.s32 %s18, 1
    %s24 = ssub.s32 %s18, 2
    %s31 = sadd.s32 1, %s26
    %p32 = scmp.ge.s32.totalorder %s31, 1
    %s33 = scalar_select %p32, 0, %s31
    %s34 = sadd.s32 1, %s25
    %s35 = scalar_select %p32, %s34, %s25
    %p36 = scmp.ge.s32.totalorder %s35, 4
    %s37 = scalar_select %p36, 0, %s35
    %s38 = ssub.s32 %s25, %s37
    %s39 = ssub.s32 %s26, %s33
    %s40 = sor.u32 %s38, %s39
    %p41 = scmp.eq.s32.totalorder %s40, 0
    %s43 = sadd.s32 %s42, 1
    %s44 = scalar_select %p41, %s42, %s43
    %p47 = pneg %p41
    %p48 = scmp.eq.s32.totalorder %s18, 3
    %p49 = por %p47, %p48
    %p50 = scmp.ne.s32.totalorder %s42, %s45
    %p51 = scmp.eq.s32.totalorder %s18, 0
    %p52 = por %p50, %p51
    %p53 = scmp.ne.s32.totalorder %s42, %s45
    %p54 = scmp.eq.s32.totalorder %s23, 3
    %p55 = por %p53, %p54
    %p56 = scmp.ne.s32.totalorder %s45, %s46
    %p57 = scmp.eq.s32.totalorder %s23, 0
    %p58 = por %p56, %p57
    %p59 = scmp.ne.s32.totalorder %s45, %s46
    %p60 = scmp.eq.s32.totalorder %s24, 3
    %p61 = por %p59, %p60
    %p63 = scmp.ne.s32.totalorder %s46, %s62
    %p64 = scmp.eq.s32.totalorder %s24, 0
    %p65 = por %p63, %p64
    %s66 = ssub.s32 %s25, %s37
    %s67 = ssub.s32 %s26, %s33
    %s68 = sor.u32 %s66, %s67
    %p69 = scmp.eq.s32.totalorder %s68, 0
    %s71 = sadd.s32 %s70, 1
    %s72 = scalar_select %p69, %s70, %s71
    %p75 = pneg %p69
    %p76 = scmp.eq.s32.totalorder %s18, 3
    %p77 = por %p75, %p76
    %p78 = scmp.ne.s32.totalorder %s70, %s73
    %p79 = scmp.eq.s32.totalorder %s18, 0
    %p80 = por %p78, %p79
    %p81 = scmp.ne.s32.totalorder %s70, %s73
    %p82 = scmp.eq.s32.totalorder %s23, 3
    %p83 = por %p81, %p82
    %p84 = scmp.ne.s32.totalorder %s73, %s74
    %p85 = scmp.eq.s32.totalorder %s23, 0
    %p86 = por %p84, %p85
    %p87 = scmp.ne.s32.totalorder %s73, %s74
    %p88 = scmp.eq.s32.totalorder %s24, 3
    %p89 = por %p87, %p88
    %p91 = scmp.ne.s32.totalorder %s74, %s90
    %p92 = scmp.eq.s32.totalorder %s24, 0
    %p93 = por %p91, %p92
    %s95 = sadd.s32 %s94, 1
    %p98 = scmp.eq.s32.totalorder %s18, 3
    %p99 = scmp.ne.s32.totalorder %s94, %s96
    %p100 = scmp.eq.s32.totalorder %s18, 0
    %p101 = por %p99, %p100
    %p102 = scmp.ne.s32.totalorder %s94, %s96
    %p103 = scmp.eq.s32.totalorder %s23, 3
    %p104 = por %p102, %p103
    %p105 = scmp.ne.s32.totalorder %s96, %s97
    %p106 = scmp.eq.s32.totalorder %s23, 0
    %p107 = por %p105, %p106
    %p108 = scmp.ne.s32.totalorder %s96, %s97
    %p109 = scmp.eq.s32.totalorder %s24, 3
    %p110 = por %p108, %p109
    %p112 = scmp.ne.s32.totalorder %s97, %s111
    %p113 = scmp.eq.s32.totalorder %s24, 0
    %p114 = por %p112, %p113
    %s116 = sadd.s32 %s115, 1
    %p119 = scmp.eq.s32.totalorder %s18, 3
    %p120 = scmp.ne.s32.totalorder %s115, %s117
    %p121 = scmp.eq.s32.totalorder %s18, 0
    %p122 = por %p120, %p121
    %p123 = scmp.ne.s32.totalorder %s115, %s117
    %p124 = scmp.eq.s32.totalorder %s23, 3
    %p125 = por %p123, %p124
    %p126 = scmp.ne.s32.totalorder %s117, %s118
    %p127 = scmp.eq.s32.totalorder %s23, 0
    %p128 = por %p126, %p127
    %p129 = scmp.ne.s32.totalorder %s117, %s118
    %p130 = scmp.eq.s32.totalorder %s24, 3
    %p131 = por %p129, %p130
    %p133 = scmp.ne.s32.totalorder %s118, %s132
    %p134 = scmp.eq.s32.totalorder %s24, 0
    %p135 = por %p133, %p134
    %s137 = sadd.s32 %s136, 1
    %p140 = scmp.eq.s32.totalorder %s18, 3
    %p141 = scmp.ne.s32.totalorder %s136, %s138
    %p142 = scmp.eq.s32.totalorder %s18, 0
    %p143 = por %p141, %p142
    %p144 = scmp.ne.s32.totalorder %s136, %s138
    %p145 = scmp.eq.s32.totalorder %s23, 3
    %p146 = por %p144, %p145
    %p147 = scmp.ne.s32.totalorder %s138, %s139
    %p148 = scmp.eq.s32.totalorder %s23, 0
    %p149 = por %p147, %p148
    %p150 = scmp.ne.s32.totalorder %s138, %s139
    %p151 = scmp.eq.s32.totalorder %s24, 3
    %p152 = por %p150, %p151
    %p154 = scmp.ne.s32.totalorder %s139, %s153
    %p155 = scmp.eq.s32.totalorder %s24, 0
    %p156 = por %p154, %p155
    %s158 = sadd.s32 %s157, 1
    %p161 = scmp.eq.s32.totalorder %s18, 3
    %p162 = scmp.ne.s32.totalorder %s157, %s159
    %p163 = scmp.eq.s32.totalorder %s18, 0
    %p164 = por %p162, %p163
    %p165 = scmp.ne.s32.totalorder %s157, %s159
    %p166 = scmp.eq.s32.totalorder %s23, 3
    %p167 = por %p165, %p166
    %p168 = scmp.ne.s32.totalorder %s159, %s160
    %p169 = scmp.eq.s32.totalorder %s23, 0
    %p170 = por %p168, %p169
    %p171 = scmp.ne.s32.totalorder %s159, %s160
    %p172 = scmp.eq.s32.totalorder %s24, 3
    %p173 = por %p171, %p172
    %p175 = scmp.ne.s32.totalorder %s160, %s174
    %p176 = scmp.eq.s32.totalorder %s24, 0
    %p177 = por %p175, %p176
    %s179 = sadd.s32 %s178, 1
    %p182 = scmp.eq.s32.totalorder %s18, 3
    %p183 = scmp.ne.s32.totalorder %s178, %s180
    %p184 = scmp.eq.s32.totalorder %s18, 0
    %p185 = por %p183, %p184
    %p186 = scmp.ne.s32.totalorder %s178, %s180
    %p187 = scmp.eq.s32.totalorder %s23, 3
    %p188 = por %p186, %p187
    %p189 = scmp.ne.s32.totalorder %s180, %s181
    %p190 = scmp.eq.s32.totalorder %s23, 0
    %p191 = por %p189, %p190
    %p192 = scmp.ne.s32.totalorder %s180, %s181
    %p193 = scmp.eq.s32.totalorder %s24, 3
    %p194 = por %p192, %p193
    %p196 = scmp.ne.s32.totalorder %s181, %s195
    %p197 = scmp.eq.s32.totalorder %s24, 0
    %p198 = por %p196, %p197
    %s200 = sadd.s32 %s199, 1
    %p203 = scmp.eq.s32.totalorder %s18, 3
    %p204 = scmp.ne.s32.totalorder %s199, %s201
    %p205 = scmp.eq.s32.totalorder %s18, 0
    %p206 = por %p204, %p205
    %p207 = scmp.ne.s32.totalorder %s199, %s201
    %p208 = scmp.eq.s32.totalorder %s23, 3
    %p209 = por %p207, %p208
    %p210 = scmp.ne.s32.totalorder %s201, %s202
    %p211 = scmp.eq.s32.totalorder %s23, 0
    %p212 = por %p210, %p211
    %p213 = scmp.ne.s32.totalorder %s201, %s202
    %p214 = scmp.eq.s32.totalorder %s24, 3
    %p215 = por %p213, %p214
    %p217 = scmp.ne.s32.totalorder %s202, %s216
    %p218 = scmp.eq.s32.totalorder %s24, 0
    %p219 = por %p217, %p218
    %s220 = ssub.s32 %s25, %s37
    %p221 = scmp.eq.s32.totalorder %s220, 0
    %s223 = sadd.s32 %s222, 1
    %s224 = scalar_select %p221, %s222, %s223
    %p227 = pneg %p221
    %p228 = scmp.eq.s32.totalorder %s18, 3
    %p229 = por %p227, %p228
    %p230 = scmp.ne.s32.totalorder %s222, %s225
    %p231 = scmp.eq.s32.totalorder %s18, 0
    %p232 = por %p230, %p231
    %p233 = scmp.ne.s32.totalorder %s222, %s225
    %p234 = scmp.eq.s32.totalorder %s23, 3
    %p235 = por %p233, %p234
    %p236 = scmp.ne.s32.totalorder %s225, %s226
    %p237 = scmp.eq.s32.totalorder %s23, 0
    %p238 = por %p236, %p237
    %p239 = scmp.ne.s32.totalorder %s225, %s226
    %p240 = scmp.eq.s32.totalorder %s24, 3
    %p241 = por %p239, %p240
    %p243 = scmp.ne.s32.totalorder %s226, %s242
    %p244 = scmp.eq.s32.totalorder %s24, 0
    %p245 = por %p243, %p244
    %s246 = ssub.s32 %s25, %s37
    %p247 = scmp.eq.s32.totalorder %s246, 0
    %s249 = sadd.s32 %s248, 1
    %s250 = scalar_select %p247, %s248, %s249
    %p253 = pneg %p247
    %p254 = scmp.eq.s32.totalorder %s18, 3
    %p255 = por %p253, %p254
    %p256 = scmp.ne.s32.totalorder %s248, %s251
    %p257 = scmp.eq.s32.totalorder %s18, 0
    %p258 = por %p256, %p257
    %p259 = scmp.ne.s32.totalorder %s248, %s251
    %p260 = scmp.eq.s32.totalorder %s23, 3
    %p261 = por %p259, %p260
    %p262 = scmp.ne.s32.totalorder %s251, %s252
    %p263 = scmp.eq.s32.totalorder %s23, 0
    %p264 = por %p262, %p263
    %p265 = scmp.ne.s32.totalorder %s251, %s252
    %p266 = scmp.eq.s32.totalorder %s24, 3
    %p267 = por %p265, %p266
    %p269 = scmp.ne.s32.totalorder %s252, %s268
    %p270 = scmp.eq.s32.totalorder %s24, 0
    %p271 = por %p269, %p270
    %s272 = ssub.s32 %s25, %s37
    %s273 = ssub.s32 %s26, %s33
    %s274 = sor.u32 %s272, %s273
    %p275 = scmp.eq.s32.totalorder %s274, 0
    %s277 = sadd.s32 %s276, 1
    %s278 = scalar_select %p275, %s276, %s277
    %p281 = pneg %p275
    %p282 = scmp.eq.s32.totalorder %s18, 3
    %p283 = por %p281, %p282
    %p284 = scmp.ne.s32.totalorder %s276, %s279
    %p285 = scmp.eq.s32.totalorder %s18, 0
    %p286 = por %p284, %p285
    %p287 = scmp.ne.s32.totalorder %s276, %s279
    %p288 = scmp.eq.s32.totalorder %s23, 3
    %p289 = por %p287, %p288
    %p290 = scmp.ne.s32.totalorder %s279, %s280
    %p291 = scmp.eq.s32.totalorder %s23, 0
    %p292 = por %p290, %p291
    %p293 = scmp.ne.s32.totalorder %s279, %s280
    %p294 = scmp.eq.s32.totalorder %s24, 3
    %p295 = por %p293, %p294
    %p297 = scmp.ne.s32.totalorder %s280, %s296
    %p298 = scmp.eq.s32.totalorder %s24, 0
    %p299 = por %p297, %p298
    %s300 = ssub.s32 %s25, %s37
    %s301 = ssub.s32 %s26, %s33
    %s302 = sor.u32 %s300, %s301
    %p303 = scmp.eq.s32.totalorder %s302, 0
    %s305 = sadd.s32 %s304, 1
    %s306 = scalar_select %p303, %s304, %s305
    %p309 = pneg %p303
    %p310 = scmp.eq.s32.totalorder %s18, 3
    %p311 = por %p309, %p310
    %p312 = scmp.ne.s32.totalorder %s304, %s307
    %p313 = scmp.eq.s32.totalorder %s18, 0
    %p314 = por %p312, %p313
    %p315 = scmp.ne.s32.totalorder %s304, %s307
    %p316 = scmp.eq.s32.totalorder %s23, 3
    %p317 = por %p315, %p316
    %p318 = scmp.ne.s32.totalorder %s307, %s308
    %p319 = scmp.eq.s32.totalorder %s23, 0
    %p320 = por %p318, %p319
    %p321 = scmp.ne.s32.totalorder %s307, %s308
    %p322 = scmp.eq.s32.totalorder %s24, 3
    %p323 = por %p321, %p322
    %p325 = scmp.ne.s32.totalorder %s308, %s324
    %p326 = scmp.eq.s32.totalorder %s24, 0
    %p327 = por %p325, %p326
    %p328 = scmp.le.s32.totalorder 1, %s18
    %p329 = scmp.lt.s32.totalorder %s18, 5
    %p330 = pnand %p328, %p329
    %p331 = pneg %p330
    // Predicated region
    $region9: #{attention_stage_forward.25} parent=5 // pred_check
      _
    $region10: #{attention_stage_forward.25} parent=5 // pred_check_branch
      %333 = sbr.rel (%p330) target = $region12
    $region11: #{attention_stage_forward.25} parent=5 // pred_region
      %s334 = ssub.s32 %s18, 1
      // Predicated region
      $region13: #{attention_stage_forward.25} parent=11 // pred_check
        %p335 = pneg %p107
      $region14: #{attention_stage_forward.25} parent=11 // pred_check_branch
        %337 = sbr.rel (%p335) target = $region16
      $region15: #{attention_stage_forward.25} parent=11 // pred_region
        _
      $region16: #{attention_stage_forward.25} parent=11 // pred_fallthru
        _
      // Predicated region
      $region17: #{attention_stage_forward.25} parent=11 // pred_check
        %p338 = pneg %p128
      $region18: #{attention_stage_forward.25} parent=11 // pred_check_branch
        %340 = sbr.rel (%p338) target = $region20
      $region19: #{attention_stage_forward.25} parent=11 // pred_region
        _
      $region20: #{attention_stage_forward.25} parent=11 // pred_fallthru
        _
      // Predicated region
      $region21: #{attention_stage_forward.25} parent=11 // pred_check
        %p341 = pneg %p149
      $region22: #{attention_stage_forward.25} parent=11 // pred_check_branch
        %343 = sbr.rel (%p341) target = $region24
      $region23: #{attention_stage_forward.25} parent=11 // pred_region
        _
      $region24: #{attention_stage_forward.25} parent=11 // pred_fallthru
        _
      // Predicated region
      $region25: #{attention_stage_forward.25} parent=11 // pred_check
        %p344 = pneg %p170
      $region26: #{attention_stage_forward.25} parent=11 // pred_check_branch
        %346 = sbr.rel (%p344) target = $region28
      $region27: #{attention_stage_forward.25} parent=11 // pred_region
        _
      $region28: #{attention_stage_forward.25} parent=11 // pred_fallthru
        _
      // Predicated region
      $region29: #{attention_stage_forward.25} parent=11 // pred_check
        %p347 = pneg %p191
      $region30: #{attention_stage_forward.25} parent=11 // pred_check_branch
        %349 = sbr.rel (%p347) target = $region32
      $region31: #{attention_stage_forward.25} parent=11 // pred_region
        _
      $region32: #{attention_stage_forward.25} parent=11 // pred_fallthru
        _
      // Predicated region
      $region33: #{attention_stage_forward.25} parent=11 // pred_check
        %p350 = pneg %p212
      $region34: #{attention_stage_forward.25} parent=11 // pred_check_branch
        %352 = sbr.rel (%p350) target = $region36
      $region35: #{attention_stage_forward.25} parent=11 // pred_region
        _
      $region36: #{attention_stage_forward.25} parent=11 // pred_fallthru
        _
    $region12: #{attention_stage_forward.25} parent=5 // pred_fallthru
      _
    %p353 = scmp.lt.s32.totalorder %s18, 4
    // Predicated region
    $region37: #{attention_stage_forward.25} parent=5 // pred_check
      %p354 = pneg %p353
    $region38: #{attention_stage_forward.25} parent=5 // pred_check_branch
      %356 = sbr.rel (%p354) target = $region40
    $region39: #{attention_stage_forward.25} parent=5 // pred_region
      // Predicated region
      $region41: #{attention_stage_forward.25} parent=39 // pred_check
        %p357 = pneg %p52
      $region42: #{attention_stage_forward.25} parent=39 // pred_check_branch
        %359 = sbr.rel (%p357) target = $region44
      $region43: #{attention_stage_forward.25} parent=39 // pred_region
        %s360 = smul.u32 8, %s26
        %p361 = scmp.lt.s32.totalorder %s25, 3
        %s362 = scalar_select %p361, %s25, 3
        %p363 = scmp.lt.s32.totalorder %s360, 7
        %s364 = scalar_select %p363, %s360, 7
        %s365 = smul.addr %s362, 8
        %s366 = sadd.s32 %s364, %s365
        %s367 = smul.addr %s366, 4
        %s368 = scalar_lea.vmem %s0, %s367
        %s369 = smul.u32 8, %s26
      $region44: #{attention_stage_forward.25} parent=39 // pred_fallthru
        _
      // Predicated region
      $region45: #{attention_stage_forward.25} parent=39 // pred_check
        %p370 = pneg %p80
      $region46: #{attention_stage_forward.25} parent=39 // pred_check_branch
        %372 = sbr.rel (%p370) target = $region48
      $region47: #{attention_stage_forward.25} parent=39 // pred_region
        %s373 = smul.u32 8, %s26
        %p374 = scmp.lt.s32.totalorder %s25, 3
        %s375 = scalar_select %p374, %s25, 3
        %p376 = scmp.lt.s32.totalorder %s373, 7
        %s377 = scalar_select %p376, %s373, 7
        %s378 = smul.addr %s375, 8
        %s379 = sadd.s32 %s377, %s378
        %s380 = smul.addr %s379, 4
        %s381 = scalar_lea.vmem %s1, %s380
        %s382 = smul.u32 8, %s26
      $region48: #{attention_stage_forward.25} parent=39 // pred_fallthru
        _
      // Predicated region
      $region49: #{attention_stage_forward.25} parent=39 // pred_check
        %p383 = pneg %p232
      $region50: #{attention_stage_forward.25} parent=39 // pred_check_branch
        %385 = sbr.rel (%p383) target = $region52
      $region51: #{attention_stage_forward.25} parent=39 // pred_region
        %p386 = scmp.lt.s32.totalorder %s25, 3
        %s387 = scalar_select %p386, %s25, 3
        %s388 = scalar_lea.vmem %s8, %s387
      $region52: #{attention_stage_forward.25} parent=39 // pred_fallthru
        _
      // Predicated region
      $region53: #{attention_stage_forward.25} parent=39 // pred_check
        %p389 = pneg %p258
      $region54: #{attention_stage_forward.25} parent=39 // pred_check_branch
        %391 = sbr.rel (%p389) target = $region56
      $region55: #{attention_stage_forward.25} parent=39 // pred_region
        %p392 = scmp.lt.s32.totalorder %s25, 3
        %s393 = scalar_select %p392, %s25, 3
        %s394 = scalar_lea.vmem %s9, %s393
      $region56: #{attention_stage_forward.25} parent=39 // pred_fallthru
        _
    $region40: #{attention_stage_forward.25} parent=5 // pred_fallthru
      _
    %p395 = scmp.le.s32.totalorder 1, %s18
    %p396 = scmp.lt.s32.totalorder %s18, 5
    %p397 = pnand %p395, %p396
    %p398 = pneg %p397
    // Predicated region
    $region57: #{attention_stage_forward.25} parent=5 // pred_check
      _
    $region58: #{attention_stage_forward.25} parent=5 // pred_check_branch
      %400 = sbr.rel (%p397) target = $region60
    $region59: #{attention_stage_forward.25} parent=5 // pred_region
      %s401 = ssub.s32 %s18, 1
      %s402 = smul.u32 8, %s28
      %p403 = scmp.lt.s32.totalorder %s27, 3
      %s404 = scalar_select %p403, %s27, 3
      %p405 = scmp.lt.s32.totalorder %s402, 7
      %s406 = scalar_select %p405, %s402, 7
      %s407 = smul.addr %s404, 8
      %s408 = sadd.s32 %s406, %s407
      %s409 = smul.addr %s408, 4
      %s410 = scalar_lea.vmem %s0, %s409
      %p411 = pneg %p58
      %p412 = pneg %p55
      %s413 = smul.u32 8, %s28
      %p414 = scmp.lt.s32.totalorder %s27, 3
      %s415 = scalar_select %p414, %s27, 3
      %p416 = scmp.lt.s32.totalorder %s413, 7
      %s417 = scalar_select %p416, %s413, 7
      %s418 = smul.addr %s415, 8
      %s419 = sadd.s32 %s417, %s418
      %s420 = smul.addr %s419, 4
      %s421 = scalar_lea.vmem %s1, %s420
      %p422 = pneg %p86
      %p423 = pneg %p83
      %p424 = pneg %p107
      %p425 = pneg %p104
      %p426 = pneg %p128
      %p427 = pneg %p125
      %p428 = pneg %p149
      %p429 = pneg %p146
      %p430 = pneg %p170
      %p431 = pneg %p167
      %p432 = pneg %p191
      %p433 = pneg %p188
      %p434 = pneg %p212
      %p435 = pneg %p209
      %p436 = scmp.lt.s32.totalorder %s27, 3
      %s437 = scalar_select %p436, %s27, 3
      %s438 = scalar_lea.vmem %s8, %s437
      %p439 = pneg %p238
      %p440 = pneg %p235
      %p441 = scmp.lt.s32.totalorder %s27, 3
      %s442 = scalar_select %p441, %s27, 3
      %s443 = scalar_lea.vmem %s9, %s442
      %p444 = pneg %p264
      %p445 = pneg %p261
      %p446 = pneg %p292
      %p447 = pneg %p289
      %s448 = smul.u32 8, %s28
      %p449 = scmp.lt.s32.totalorder %s27, 3
      %s450 = scalar_select %p449, %s27, 3
      %p451 = scmp.lt.s32.totalorder %s448, 7
      %s452 = scalar_select %p451, %s448, 7
      %s453 = smul.addr %s450, 8
      %s454 = sadd.s32 %s452, %s453
      %s455 = smul.addr %s454, 4
      %s456 = scalar_lea.vmem %s10, %s455
      %p457 = pneg %p320
      %p458 = pneg %p317
      %s459 = smul.u32 8, %s28
      %p460 = scmp.lt.s32.totalorder %s27, 3
      %s461 = scalar_select %p460, %s27, 3
      %p462 = scmp.lt.s32.totalorder %s459, 7
      %s463 = scalar_select %p462, %s459, 7
      %s464 = smul.addr %s461, 8
      %s465 = sadd.s32 %s463, %s464
      %s466 = smul.addr %s465, 4
      %s467 = scalar_lea.vmem %s11, %s466
      %s468 = smul.u32 8, %s28
      %p469 = scmp.lt.s32.totalorder %s27, 3
      %s470 = scalar_select %p469, %s27, 3
      %p471 = scmp.lt.s32.totalorder %s468, 7
      %s472 = scalar_select %p471, %s468, 7
      %s473 = smul.addr %s470, 8
      %s474 = sadd.s32 %s472, %s473
      %s475 = smul.addr %s474, 4
      %s476 = scalar_lea.vmem %s0, %s475
      %s477 = smul.u32 8, %s28
      %s478 = smul.u32 8, %s28
      %p479 = scmp.lt.s32.totalorder %s27, 3
      %s480 = scalar_select %p479, %s27, 3
      %p481 = scmp.lt.s32.totalorder %s478, 7
      %s482 = scalar_select %p481, %s478, 7
      %s483 = smul.addr %s480, 8
      %s484 = sadd.s32 %s482, %s483
      %s485 = smul.addr %s484, 4
      %s486 = scalar_lea.vmem %s1, %s485
      %s487 = smul.u32 8, %s28
      %p488 = scmp.lt.s32.totalorder %s27, 3
      %s489 = scalar_select %p488, %s27, 3
      %s490 = scalar_lea.vmem %s8, %s489
      %p491 = scmp.lt.s32.totalorder %s27, 3
      %s492 = scalar_select %p491, %s27, 3
      %s493 = scalar_lea.vmem %s9, %s492
      %s494 = smul.u32 8, %s28
      %p495 = scmp.lt.s32.totalorder %s27, 3
      %s496 = scalar_select %p495, %s27, 3
      %p497 = scmp.lt.s32.totalorder %s494, 7
      %s498 = scalar_select %p497, %s494, 7
      %s499 = smul.addr %s496, 8
      %s500 = sadd.s32 %s498, %s499
      %s501 = smul.addr %s500, 4
      %s502 = scalar_lea.vmem %s10, %s501
      %s503 = smul.u32 8, %s28
      %s504 = smul.u32 8, %s28
      %p505 = scmp.lt.s32.totalorder %s27, 3
      %s506 = scalar_select %p505, %s27, 3
      %p507 = scmp.lt.s32.totalorder %s504, 7
      %s508 = scalar_select %p507, %s504, 7
      %s509 = smul.addr %s506, 8
      %s510 = sadd.s32 %s508, %s509
      %s511 = smul.addr %s510, 4
      %s512 = scalar_lea.vmem %s11, %s511
      %s513 = smul.u32 8, %s28
      %v515 = vld [vmem:[%s476] sm:$0xf]
      %v516 = vld [vmem:[%s476 + $0x4] sm:$0xf]
      %v517 = vld [vmem:[%s476 + $0x8] sm:$0xf]
      %v518 = vld [vmem:[%s476 + $0xc] sm:$0xf]
      %v519 = vld [vmem:[%s476 + $0x10] sm:$0xf]
      %v520 = vld [vmem:[%s476 + $0x14] sm:$0xf]
      %v521 = vld [vmem:[%s476 + $0x18] sm:$0xf]
      %v522 = vld [vmem:[%s476 + $0x1c] sm:$0xf]
      %v523 = vld [vmem:[%s486] sm:$0xf]
      %v524 = vld [vmem:[%s486 + $0x4] sm:$0xf]
      %v525 = vld [vmem:[%s486 + $0x8] sm:$0xf]
      %v526 = vld [vmem:[%s486 + $0xc] sm:$0xf]
      %v527 = vld [vmem:[%s486 + $0x10] sm:$0xf]
      %v528 = vld [vmem:[%s486 + $0x14] sm:$0xf]
      %v529 = vld [vmem:[%s486 + $0x18] sm:$0xf]
      %v530 = vld [vmem:[%s486 + $0x1c] sm:$0xf]
      %v531 = vld [vmem:[%s2] sm:$0xf]
      %v532 = vld [vmem:[%s2 + $0x4] sm:$0xf]
      %v533 = vld [vmem:[%s2 + $0x8] sm:$0xf]
      %v534 = vld [vmem:[%s2 + $0xc] sm:$0xf]
      %v535 = vld [vmem:[%s2 + $0x10] sm:$0xf]
      %v536 = vld [vmem:[%s2 + $0x14] sm:$0xf]
      %v537 = vld [vmem:[%s2 + $0x18] sm:$0xf]
      %v538 = vld [vmem:[%s2 + $0x1c] sm:$0xf]
      %v539 = vld [vmem:[%s2 + $0x20] sm:$0xf]
      %v540 = vld [vmem:[%s2 + $0x24] sm:$0xf]
      %v541 = vld [vmem:[%s2 + $0x28] sm:$0xf]
      %v542 = vld [vmem:[%s2 + $0x2c] sm:$0xf]
      %v543 = vld [vmem:[%s2 + $0x30] sm:$0xf]
      %v544 = vld [vmem:[%s2 + $0x34] sm:$0xf]
      %v545 = vld [vmem:[%s2 + $0x38] sm:$0xf]
      %v546 = vld [vmem:[%s2 + $0x3c] sm:$0xf]
      %v547 = vld [vmem:[%s3] sm:$0x1]
      %v548 = vld [vmem:[%s4] sm:$0x1]
      %v549 = vld [vmem:[%s5] sm:$0xf]
      %v550 = vld [vmem:[%s5 + $0x4] sm:$0xf]
      %v551 = vld [vmem:[%s5 + $0x8] sm:$0xf]
      %v552 = vld [vmem:[%s5 + $0xc] sm:$0xf]
      %v553 = vld [vmem:[%s5 + $0x10] sm:$0xf]
      %v554 = vld [vmem:[%s5 + $0x14] sm:$0xf]
      %v555 = vld [vmem:[%s5 + $0x18] sm:$0xf]
      %v556 = vld [vmem:[%s5 + $0x1c] sm:$0xf]
      %v557 = vld [vmem:[%s5 + $0x20] sm:$0xf]
      %v558 = vld [vmem:[%s5 + $0x24] sm:$0xf]
      %v559 = vld [vmem:[%s5 + $0x28] sm:$0xf]
      %v560 = vld [vmem:[%s5 + $0x2c] sm:$0xf]
      %v561 = vld [vmem:[%s5 + $0x30] sm:$0xf]
      %v562 = vld [vmem:[%s5 + $0x34] sm:$0xf]
      %v563 = vld [vmem:[%s5 + $0x38] sm:$0xf]
      %v564 = vld [vmem:[%s5 + $0x3c] sm:$0xf]
      %v565 = vld [vmem:[%s6] sm:$0x1]
      %v566 = vld [vmem:[%s7] sm:$0x1]
      %v568 = vlaneseq
      %v569 = vshrl.u32 %v568, 7
      %v570 = vsub.s32 0, %v569
      %v571 = vrot.slane %v547, %v570
      %v581 = vunpack.c.l.b16 %v523
      %v582 = vunpack.c.l.b16 %v524
      %v583 = vunpack.c.l.b16 %v525
      %v584 = vunpack.c.l.b16 %v526
      %v585 = vunpack.c.l.b16 %v527
      %v586 = vunpack.c.l.b16 %v528
      %v587 = vunpack.c.l.b16 %v529
      %v588 = vunpack.c.l.b16 %v530
      %v589 = vpack.c.b16 %v582, %v581
      %v590 = vpack.c.b16 %v584, %v583
      %v591 = vpack.c.b16 %v586, %v585
      %v592 = vpack.c.b16 %v588, %v587
      %v613 = vunpack.c.l.b16 %v531
      %v614 = vunpack.c.l.b16 %v532
      %v615 = vunpack.c.l.b16 %v533
      %v616 = vunpack.c.l.b16 %v534
      %v617 = vunpack.c.l.b16 %v535
      %v618 = vunpack.c.l.b16 %v536
      %v619 = vunpack.c.l.b16 %v537
      %v620 = vunpack.c.l.b16 %v538
      %v621 = vunpack.c.l.b16 %v539
      %v622 = vunpack.c.l.b16 %v540
      %v623 = vunpack.c.l.b16 %v541
      %v624 = vunpack.c.l.b16 %v542
      %v625 = vunpack.c.l.b16 %v543
      %v626 = vunpack.c.l.b16 %v544
      %v627 = vunpack.c.l.b16 %v545
      %v628 = vunpack.c.l.b16 %v546
      %v629 = vpack.c.b16 %v614, %v613
      %v630 = vpack.c.b16 %v616, %v615
      %v631 = vpack.c.b16 %v618, %v617
      %v632 = vpack.c.b16 %v620, %v619
      %v633 = vpack.c.b16 %v622, %v621
      %v634 = vpack.c.b16 %v624, %v623
      %v635 = vpack.c.b16 %v626, %v625
      %v636 = vpack.c.b16 %v628, %v627
      %645 = vmatprep.subr.bf16.mxu0 0
      %646 = vmatpush1.bf16.msra.mxu0 %v629
      %647 = vmatprep.subr.bf16.mxu0 0
      %648 = vmatpush1.bf16.msra.mxu0 %v630
      %649 = vmatprep.subr.bf16.mxu0 0
      %650 = vmatpush1.bf16.msra.mxu0 %v631
      %651 = vmatprep.subr.bf16.mxu0 0
      %652 = vmatpush1.bf16.msra.mxu0 %v632
      %653 = vmatprep.subr.bf16.mxu0 0
      %654 = vmatpush1.bf16.msra.mxu0 %v633
      %655 = vmatprep.subr.bf16.mxu0 0
      %656 = vmatpush1.bf16.msra.mxu0 %v634
      %657 = vmatprep.subr.bf16.mxu0 0
      %658 = vmatpush1.bf16.msra.mxu0 %v635
      %659 = vmatprep.subr.bf16.mxu0 0
      %660 = vmatpush1.bf16.msra.mxu0 %v636
      %661 = vmatprep.subr.bf16.mxu0 0
      %662 = vmatpush1.bf16.msra.mxu0 0
      %663 = vmatprep.subr.bf16.mxu0 0
      %664 = vmatpush1.bf16.msra.mxu0 0
      %665 = vmatprep.subr.bf16.mxu0 0
      %666 = vmatpush1.bf16.msra.mxu0 0
      %667 = vmatprep.subr.bf16.mxu0 0
      %668 = vmatpush1.bf16.msra.mxu0 0
      %669 = vmatprep.subr.bf16.mxu0 0
      %670 = vmatpush1.bf16.msra.mxu0 0
      %671 = vmatprep.subr.bf16.mxu0 0
      %672 = vmatpush1.bf16.msra.mxu0 0
      %673 = vmatprep.subr.bf16.mxu0 0
      %674 = vmatpush1.bf16.msra.mxu0 0
      %675 = vmatprep.subr.bf16.mxu0 0
      %676 = vmatpush1.bf16.msra.mxu0 0
      %677 = vmatprep.mubr.bf16.mxu0 0
      %678 = vmatmul.mubr.bf16.gmra.mrb[0].mxu0 %v589
      %v679 = vpop.f32.mrb[0].mxu0
      %v680 = vadd.f32 %v571, %v679
      %v681 = vpop.f32.mrb[0].mxu0
      %v682 = vpop.f32.mrb[0].mxu0
      %v683 = vadd.f32 %v571, %v682
      %v684 = vpop.f32.mrb[0].mxu0
      %685 = vmatprep.mubr.bf16.mxu0 0
      %686 = vmatmul.mubr.bf16.gmra.mrb[0].mxu0 %v590
      %v687 = vpop.f32.mrb[0].mxu0
      %v688 = vadd.f32 %v571, %v687
      %v689 = vpop.f32.mrb[0].mxu0
      %v690 = vpop.f32.mrb[0].mxu0
      %v691 = vadd.f32 %v571, %v690
      %v692 = vpop.f32.mrb[0].mxu0
      %693 = vmatprep.mubr.bf16.mxu0 0
      %694 = vmatmul.mubr.bf16.gmra.mrb[0].mxu0 %v591
      %v695 = vpop.f32.mrb[0].mxu0
      %v696 = vadd.f32 %v571, %v695
      %v697 = vpop.f32.mrb[0].mxu0
      %v698 = vpop.f32.mrb[0].mxu0
      %v699 = vadd.f32 %v571, %v698
      %v700 = vpop.f32.mrb[0].mxu0
      %701 = vmatprep.mubr.bf16.mxu0 0
      %702 = vmatmul.mubr.bf16.gmra.mrb[0].mxu0 %v592
      %v703 = vpop.f32.mrb[0].mxu0
      %v704 = vadd.f32 %v571, %v703
      %v705 = vpop.f32.mrb[0].mxu0
      %v706 = vpop.f32.mrb[0].mxu0
      %v707 = vadd.f32 %v571, %v706
      %v708 = vpop.f32.mrb[0].mxu0
      %709 = vdwg.mxu0
      %v710 = vmax.f32 %v680, 0.0
      %v711 = vmax.f32 %v683, 0.0
      %v712 = vmax.f32 %v688, 0.0
      %v713 = vmax.f32 %v691, 0.0
      %v714 = vmax.f32 %v696, 0.0
      %v715 = vmax.f32 %v699, 0.0
      %v716 = vmax.f32 %v704, 0.0
      %v717 = vmax.f32 %v707, 0.0
      %v719 = vlaneseq
      %v720 = vshrl.u32 %v719, 7
      %v721 = vsub.s32 0, %v720
      %v722 = vrot.slane %v548, %v721
      %v724 = vmul.f32 %v710, %v722
      %v725 = vmul.f32 %v711, %v722
      %v726 = vmul.f32 %v712, %v722
      %v727 = vmul.f32 %v713, %v722
      %v728 = vmul.f32 %v714, %v722
      %v729 = vmul.f32 %v715, %v722
      %v730 = vmul.f32 %v716, %v722
      %v731 = vmul.f32 %v717, %v722
      %732 = vadd.xlane.f32.xlu0 %v724
      %v733 = vpop.xlane.xlu0 %732
      %734 = vadd.xlane.f32.xlu0 %v725
      %v735 = vpop.xlane.xlu0 %734
      %736 = vadd.xlane.f32.xlu0 %v726
      %v737 = vpop.xlane.xlu0 %736
      %738 = vadd.xlane.f32.xlu0 %v727
      %v739 = vpop.xlane.xlu0 %738
      %740 = vadd.xlane.f32.xlu0 %v728
      %v741 = vpop.xlane.xlu0 %740
      %742 = vadd.xlane.f32.xlu0 %v729
      %v743 = vpop.xlane.xlu0 %742
      %744 = vadd.xlane.f32.xlu0 %v730
      %v745 = vpop.xlane.xlu0 %744
      %746 = vadd.xlane.f32.xlu0 %v731
      %v747 = vpop.xlane.xlu0 %746
      %v748 = vadd.f32 %v733, -0.1214236
      %v749 = vadd.f32 %v735, -0.1214236
      %v750 = vadd.f32 %v737, -0.1214236
      %v751 = vadd.f32 %v739, -0.1214236
      %v752 = vadd.f32 %v741, -0.1214236
      %v753 = vadd.f32 %v743, -0.1214236
      %v754 = vadd.f32 %v745, -0.1214236
      %v755 = vadd.f32 %v747, -0.1214236
      %v756 = vand.u32 2147483647, %v748
      %v757 = vand.u32 2147483647, %v749
      %v758 = vand.u32 2147483647, %v750
      %v759 = vand.u32 2147483647, %v751
      %v760 = vand.u32 2147483647, %v752
      %v761 = vand.u32 2147483647, %v753
      %v762 = vand.u32 2147483647, %v754
      %v763 = vand.u32 2147483647, %v755
      %v764 = vsub.f32 0.0, %v756
      %v765 = vsub.f32 0.0, %v757
      %v766 = vsub.f32 0.0, %v758
      %v767 = vsub.f32 0.0, %v759
      %v768 = vsub.f32 0.0, %v760
      %v769 = vsub.f32 0.0, %v761
      %v770 = vsub.f32 0.0, %v762
      %v771 = vsub.f32 0.0, %v763
      %v772 = vmul.f32 %v764, 1.442695
      %v773 = vpow.pop %v772
      %v774 = vmul.f32 %v765, 1.442695
      %v775 = vpow.pop %v774
      %v776 = vmul.f32 %v766, 1.442695
      %v777 = vpow.pop %v776
      %v778 = vmul.f32 %v767, 1.442695
      %v779 = vpow.pop %v778
      %v780 = vmul.f32 %v768, 1.442695
      %v781 = vpow.pop %v780
      %v782 = vmul.f32 %v769, 1.442695
      %v783 = vpow.pop %v782
      %v784 = vmul.f32 %v770, 1.442695
      %v785 = vpow.pop %v784
      %v786 = vmul.f32 %v771, 1.442695
      %v787 = vpow.pop %v786
      %vm788 = vcmp.ge.f32.partialorder %v748, 0.0
      %vm789 = vcmp.ge.f32.partialorder %v749, 0.0
      %vm790 = vcmp.ge.f32.partialorder %v750, 0.0
      %vm791 = vcmp.ge.f32.partialorder %v751, 0.0
      %vm792 = vcmp.ge.f32.partialorder %v752, 0.0
      %vm793 = vcmp.ge.f32.partialorder %v753, 0.0
      %vm794 = vcmp.ge.f32.partialorder %v754, 0.0
      %vm795 = vcmp.ge.f32.partialorder %v755, 0.0
      %v796 = vsel %vm788, 1.0, %v773
      %v797 = vsel %vm789, 1.0, %v775
      %v798 = vsel %vm790, 1.0, %v777
      %v799 = vsel %vm791, 1.0, %v779
      %v800 = vsel %vm792, 1.0, %v781
      %v801 = vsel %vm793, 1.0, %v783
      %v802 = vsel %vm794, 1.0, %v785
      %v803 = vsel %vm795, 1.0, %v787
      %v804 = vadd.f32 %v773, 1.0
      %v805 = vadd.f32 %v775, 1.0
      %v806 = vadd.f32 %v777, 1.0
      %v807 = vadd.f32 %v779, 1.0
      %v808 = vadd.f32 %v781, 1.0
      %v809 = vadd.f32 %v783, 1.0
      %v810 = vadd.f32 %v785, 1.0
      %v811 = vadd.f32 %v787, 1.0
      %v812 = vrcp.pop %v804
      %v813 = vrcp.pop %v805
      %v814 = vrcp.pop %v806
      %v815 = vrcp.pop %v807
      %v816 = vrcp.pop %v808
      %v817 = vrcp.pop %v809
      %v818 = vrcp.pop %v810
      %v819 = vrcp.pop %v811
      %v820 = vmul.f32 %v796, %v812
      %v821 = vmul.f32 %v797, %v813
      %v822 = vmul.f32 %v798, %v814
      %v823 = vmul.f32 %v799, %v815
      %v824 = vmul.f32 %v800, %v816
      %v825 = vmul.f32 %v801, %v817
      %v826 = vmul.f32 %v802, %v818
      %v827 = vmul.f32 %v803, %v819
      %v829 = vlaneseq
      %v830 = vshrl.u32 %v829, 7
      %v831 = vsub.s32 0, %v830
      %v832 = vrot.slane %v565, %v831
      %v842 = vunpack.c.l.b16 %v515
      %v843 = vunpack.c.l.b16 %v516
      %v844 = vunpack.c.l.b16 %v517
      %v845 = vunpack.c.l.b16 %v518
      %v846 = vunpack.c.l.b16 %v519
      %v847 = vunpack.c.l.b16 %v520
      %v848 = vunpack.c.l.b16 %v521
      %v849 = vunpack.c.l.b16 %v522
      %v850 = vpack.c.b16 %v843, %v842
      %v851 = vpack.c.b16 %v845, %v844
      %v852 = vpack.c.b16 %v847, %v846
      %v853 = vpack.c.b16 %v849, %v848
      %v874 = vunpack.c.l.b16 %v549
      %v875 = vunpack.c.l.b16 %v550
      %v876 = vunpack.c.l.b16 %v551
      %v877 = vunpack.c.l.b16 %v552
      %v878 = vunpack.c.l.b16 %v553
      %v879 = vunpack.c.l.b16 %v554
      %v880 = vunpack.c.l.b16 %v555
      %v881 = vunpack.c.l.b16 %v556
      %v882 = vunpack.c.l.b16 %v557
      %v883 = vunpack.c.l.b16 %v558
      %v884 = vunpack.c.l.b16 %v559
      %v885 = vunpack.c.l.b16 %v560
      %v886 = vunpack.c.l.b16 %v561
      %v887 = vunpack.c.l.b16 %v562
      %v888 = vunpack.c.l.b16 %v563
      %v889 = vunpack.c.l.b16 %v564
      %v890 = vpack.c.b16 %v875, %v874
      %v891 = vpack.c.b16 %v877, %v876
      %v892 = vpack.c.b16 %v879, %v878
      %v893 = vpack.c.b16 %v881, %v880
      %v894 = vpack.c.b16 %v883, %v882
      %v895 = vpack.c.b16 %v885, %v884
      %v896 = vpack.c.b16 %v887, %v886
      %v897 = vpack.c.b16 %v889, %v888
      %906 = vmatprep.subr.bf16.mxu0 0
      %907 = vmatpush1.bf16.msra.mxu0 %v890
      %908 = vmatprep.subr.bf16.mxu0 0
      %909 = vmatpush1.bf16.msra.mxu0 %v891
      %910 = vmatprep.subr.bf16.mxu0 0
      %911 = vmatpush1.bf16.msra.mxu0 %v892
      %912 = vmatprep.subr.bf16.mxu0 0
      %913 = vmatpush1.bf16.msra.mxu0 %v893
      %914 = vmatprep.subr.bf16.mxu0 0
      %915 = vmatpush1.bf16.msra.mxu0 %v894
      %916 = vmatprep.subr.bf16.mxu0 0
      %917 = vmatpush1.bf16.msra.mxu0 %v895
      %918 = vmatprep.subr.bf16.mxu0 0
      %919 = vmatpush1.bf16.msra.mxu0 %v896
      %920 = vmatprep.subr.bf16.mxu0 0
      %921 = vmatpush1.bf16.msra.mxu0 %v897
      %922 = vmatprep.subr.bf16.mxu0 0
      %923 = vmatpush1.bf16.msra.mxu0 0
      %924 = vmatprep.subr.bf16.mxu0 0
      %925 = vmatpush1.bf16.msra.mxu0 0
      %926 = vmatprep.subr.bf16.mxu0 0
      %927 = vmatpush1.bf16.msra.mxu0 0
      %928 = vmatprep.subr.bf16.mxu0 0
      %929 = vmatpush1.bf16.msra.mxu0 0
      %930 = vmatprep.subr.bf16.mxu0 0
      %931 = vmatpush1.bf16.msra.mxu0 0
      %932 = vmatprep.subr.bf16.mxu0 0
      %933 = vmatpush1.bf16.msra.mxu0 0
      %934 = vmatprep.subr.bf16.mxu0 0
      %935 = vmatpush1.bf16.msra.mxu0 0
      %936 = vmatprep.subr.bf16.mxu0 0
      %937 = vmatpush1.bf16.msra.mxu0 0
      %938 = vmatprep.mubr.bf16.mxu0 0
      %939 = vmatmul.mubr.bf16.gmra.mrb[0].mxu0 %v850
      %v940 = vpop.f32.mrb[0].mxu0
      %v941 = vadd.f32 %v832, %v940
      %v942 = vpop.f32.mrb[0].mxu0
      %v943 = vpop.f32.mrb[0].mxu0
      %v944 = vadd.f32 %v832, %v943
      %v945 = vpop.f32.mrb[0].mxu0
      %946 = vmatprep.mubr.bf16.mxu0 0
      %947 = vmatmul.mubr.bf16.gmra.mrb[0].mxu0 %v851
      %v948 = vpop.f32.mrb[0].mxu0
      %v949 = vadd.f32 %v832, %v948
      %v950 = vpop.f32.mrb[0].mxu0
      %v951 = vpop.f32.mrb[0].mxu0
      %v952 = vadd.f32 %v832, %v951
      %v953 = vpop.f32.mrb[0].mxu0
      %954 = vmatprep.mubr.bf16.mxu0 0
      %955 = vmatmul.mubr.bf16.gmra.mrb[0].mxu0 %v852
      %v956 = vpop.f32.mrb[0].mxu0
      %v957 = vadd.f32 %v832, %v956
      %v958 = vpop.f32.mrb[0].mxu0
      %v959 = vpop.f32.mrb[0].mxu0
      %v960 = vadd.f32 %v832, %v959
      %v961 = vpop.f32.mrb[0].mxu0
      %962 = vmatprep.mubr.bf16.mxu0 0
      %963 = vmatmul.mubr.bf16.gmra.mrb[0].mxu0 %v853
      %v964 = vpop.f32.mrb[0].mxu0
      %v965 = vadd.f32 %v832, %v964
      %v966 = vpop.f32.mrb[0].mxu0
      %v967 = vpop.f32.mrb[0].mxu0
      %v968 = vadd.f32 %v832, %v967
      %v969 = vpop.f32.mrb[0].mxu0
      %970 = vdwg.mxu0
      %v971 = vmax.f32 %v941, 0.0
      %v972 = vmax.f32 %v944, 0.0
      %v973 = vmax.f32 %v949, 0.0
      %v974 = vmax.f32 %v952, 0.0
      %v975 = vmax.f32 %v957, 0.0
      %v976 = vmax.f32 %v960, 0.0
      %v977 = vmax.f32 %v965, 0.0
      %v978 = vmax.f32 %v968, 0.0
      %v980 = vlaneseq
      %v981 = vshrl.u32 %v980, 7
      %v982 = vsub.s32 0, %v981
      %v983 = vrot.slane %v566, %v982
      %v985 = vmul.f32 %v971, %v983
      %v986 = vmul.f32 %v972, %v983
      %v987 = vmul.f32 %v973, %v983
      %v988 = vmul.f32 %v974, %v983
      %v989 = vmul.f32 %v975, %v983
      %v990 = vmul.f32 %v976, %v983
      %v991 = vmul.f32 %v977, %v983
      %v992 = vmul.f32 %v978, %v983
      %993 = vadd.xlane.f32.xlu0 %v985
      %v994 = vpop.xlane.xlu0 %993
      %995 = vadd.xlane.f32.xlu0 %v986
      %v996 = vpop.xlane.xlu0 %995
      %997 = vadd.xlane.f32.xlu0 %v987
      %v998 = vpop.xlane.xlu0 %997
      %999 = vadd.xlane.f32.xlu0 %v988
      %v1000 = vpop.xlane.xlu0 %999
      %1001 = vadd.xlane.f32.xlu0 %v989
      %v1002 = vpop.xlane.xlu0 %1001
      %1003 = vadd.xlane.f32.xlu0 %v990
      %v1004 = vpop.xlane.xlu0 %1003
      %1005 = vadd.xlane.f32.xlu0 %v991
      %v1006 = vpop.xlane.xlu0 %1005
      %1007 = vadd.xlane.f32.xlu0 %v992
      %v1008 = vpop.xlane.xlu0 %1007
      %v1009 = vadd.f32 %v994, -0.1588158
      %v1010 = vadd.f32 %v996, -0.1588158
      %v1011 = vadd.f32 %v998, -0.1588158
      %v1012 = vadd.f32 %v1000, -0.1588158
      %v1013 = vadd.f32 %v1002, -0.1588158
      %v1014 = vadd.f32 %v1004, -0.1588158
      %v1015 = vadd.f32 %v1006, -0.1588158
      %v1016 = vadd.f32 %v1008, -0.1588158
      %v1017 = vand.u32 2147483647, %v1009
      %v1018 = vand.u32 2147483647, %v1010
      %v1019 = vand.u32 2147483647, %v1011
      %v1020 = vand.u32 2147483647, %v1012
      %v1021 = vand.u32 2147483647, %v1013
      %v1022 = vand.u32 2147483647, %v1014
      %v1023 = vand.u32 2147483647, %v1015
      %v1024 = vand.u32 2147483647, %v1016
      %v1025 = vsub.f32 0.0, %v1017
      %v1026 = vsub.f32 0.0, %v1018
      %v1027 = vsub.f32 0.0, %v1019
      %v1028 = vsub.f32 0.0, %v1020
      %v1029 = vsub.f32 0.0, %v1021
      %v1030 = vsub.f32 0.0, %v1022
      %v1031 = vsub.f32 0.0, %v1023
      %v1032 = vsub.f32 0.0, %v1024
      %v1033 = vmul.f32 %v1025, 1.442695
      %v1034 = vpow.pop %v1033
      %v1035 = vmul.f32 %v1026, 1.442695
      %v1036 = vpow.pop %v1035
      %v1037 = vmul.f32 %v1027, 1.442695
      %v1038 = vpow.pop %v1037
      %v1039 = vmul.f32 %v1028, 1.442695
      %v1040 = vpow.pop %v1039
      %v1041 = vmul.f32 %v1029, 1.442695
      %v1042 = vpow.pop %v1041
      %v1043 = vmul.f32 %v1030, 1.442695
      %v1044 = vpow.pop %v1043
      %v1045 = vmul.f32 %v1031, 1.442695
      %v1046 = vpow.pop %v1045
      %v1047 = vmul.f32 %v1032, 1.442695
      %v1048 = vpow.pop %v1047
      %vm1049 = vcmp.ge.f32.partialorder %v1009, 0.0
      %vm1050 = vcmp.ge.f32.partialorder %v1010, 0.0
      %vm1051 = vcmp.ge.f32.partialorder %v1011, 0.0
      %vm1052 = vcmp.ge.f32.partialorder %v1012, 0.0
      %vm1053 = vcmp.ge.f32.partialorder %v1013, 0.0
      %vm1054 = vcmp.ge.f32.partialorder %v1014, 0.0
      %vm1055 = vcmp.ge.f32.partialorder %v1015, 0.0
      %vm1056 = vcmp.ge.f32.partialorder %v1016, 0.0
      %v1057 = vsel %vm1049, 1.0, %v1034
      %v1058 = vsel %vm1050, 1.0, %v1036
      %v1059 = vsel %vm1051, 1.0, %v1038
      %v1060 = vsel %vm1052, 1.0, %v1040
      %v1061 = vsel %vm1053, 1.0, %v1042
      %v1062 = vsel %vm1054, 1.0, %v1044
      %v1063 = vsel %vm1055, 1.0, %v1046
      %v1064 = vsel %vm1056, 1.0, %v1048
      %v1065 = vadd.f32 %v1034, 1.0
      %v1066 = vadd.f32 %v1036, 1.0
      %v1067 = vadd.f32 %v1038, 1.0
      %v1068 = vadd.f32 %v1040, 1.0
      %v1069 = vadd.f32 %v1042, 1.0
      %v1070 = vadd.f32 %v1044, 1.0
      %v1071 = vadd.f32 %v1046, 1.0
      %v1072 = vadd.f32 %v1048, 1.0
      %v1073 = vrcp.pop %v1065
      %v1074 = vrcp.pop %v1066
      %v1075 = vrcp.pop %v1067
      %v1076 = vrcp.pop %v1068
      %v1077 = vrcp.pop %v1069
      %v1078 = vrcp.pop %v1070
      %v1079 = vrcp.pop %v1071
      %v1080 = vrcp.pop %v1072
      %v1081 = vmul.f32 %v1057, %v1073
      %v1082 = vmul.f32 %v1058, %v1074
      %v1083 = vmul.f32 %v1059, %v1075
      %v1084 = vmul.f32 %v1060, %v1076
      %v1085 = vmul.f32 %v1061, %v1077
      %v1086 = vmul.f32 %v1062, %v1078
      %v1087 = vmul.f32 %v1063, %v1079
      %v1088 = vmul.f32 %v1064, %v1080
      %v1089 = vld [vmem:[%s490] sm:$0x1]
      %v1090 = vld [vmem:[%s493] sm:$0x1]
      %v1091 = vunpack.c.l.bf16 %v515
      %v1092 = vunpack.c.l.bf16 %v516
      %v1093 = vunpack.c.l.bf16 %v517
      %v1094 = vunpack.c.l.bf16 %v518
      %v1095 = vunpack.c.l.bf16 %v519
      %v1096 = vunpack.c.l.bf16 %v520
      %v1097 = vunpack.c.l.bf16 %v521
      %v1098 = vunpack.c.l.bf16 %v522
      %v1099 = vmul.f32 %v1091, %v820
      %v1100 = vmul.f32 %v1092, %v821
      %v1101 = vmul.f32 %v1093, %v822
      %v1102 = vmul.f32 %v1094, %v823
      %v1103 = vmul.f32 %v1095, %v824
      %v1104 = vmul.f32 %v1096, %v825
      %v1105 = vmul.f32 %v1097, %v826
      %v1106 = vmul.f32 %v1098, %v827
      %v1108 = vlaneseq
      %v1109 = vshrl.u32 %v1108, 7
      %v1110 = vsub.s32 0, %v1109
      %v1111 = vrot.slane %v1089, %v1110
      %v1113 = vmul.f32 %v1099, %v1111
      %v1114 = vmul.f32 %v1100, %v1111
      %v1115 = vmul.f32 %v1101, %v1111
      %v1116 = vmul.f32 %v1102, %v1111
      %v1117 = vmul.f32 %v1103, %v1111
      %v1118 = vmul.f32 %v1104, %v1111
      %v1119 = vmul.f32 %v1105, %v1111
      %v1120 = vmul.f32 %v1106, %v1111
      %v1121 = vpack.c.bf16 %v1114, %v1113
      %v1122 = vpack.c.bf16 %v1116, %v1115
      %v1123 = vpack.c.bf16 %v1118, %v1117
      %v1124 = vpack.c.bf16 %v1120, %v1119
      %v1129 = vunpack.c.l.b16 %v1121
      %v1130 = vunpack.c.h.b16 %v1121
      %v1131 = vunpack.c.l.b16 %v1122
      %v1132 = vunpack.c.h.b16 %v1122
      %v1133 = vunpack.c.l.b16 %v1123
      %v1134 = vunpack.c.h.b16 %v1123
      %v1135 = vunpack.c.l.b16 %v1124
      %v1136 = vunpack.c.h.b16 %v1124
      %v1137 = vpack.c.b16 %v1129, %v1129
      %v1138 = vpack.c.b16 %v1130, %v1130
      %v1139 = vpack.c.b16 %v1131, %v1131
      %v1140 = vpack.c.b16 %v1132, %v1132
      %v1141 = vpack.c.b16 %v1133, %v1133
      %v1142 = vpack.c.b16 %v1134, %v1134
      %v1143 = vpack.c.b16 %v1135, %v1135
      %v1144 = vpack.c.b16 %v1136, %v1136
      %1153 = vst [vmem:[%s502] sm:$0xf] %v1137
      %1154 = vst [vmem:[%s502 + $0x4] sm:$0xf] %v1138
      %1155 = vst [vmem:[%s502 + $0x8] sm:$0xf] %v1139
      %1156 = vst [vmem:[%s502 + $0xc] sm:$0xf] %v1140
      %1157 = vst [vmem:[%s502 + $0x10] sm:$0xf] %v1141
      %1158 = vst [vmem:[%s502 + $0x14] sm:$0xf] %v1142
      %1159 = vst [vmem:[%s502 + $0x18] sm:$0xf] %v1143
      %1160 = vst [vmem:[%s502 + $0x1c] sm:$0xf] %v1144
      %v1161 = vunpack.c.l.bf16 %v523
      %v1162 = vunpack.c.l.bf16 %v524
      %v1163 = vunpack.c.l.bf16 %v525
      %v1164 = vunpack.c.l.bf16 %v526
      %v1165 = vunpack.c.l.bf16 %v527
      %v1166 = vunpack.c.l.bf16 %v528
      %v1167 = vunpack.c.l.bf16 %v529
      %v1168 = vunpack.c.l.bf16 %v530
      %v1169 = vmul.f32 %v1161, %v1081
      %v1170 = vmul.f32 %v1162, %v1082
      %v1171 = vmul.f32 %v1163, %v1083
      %v1172 = vmul.f32 %v1164, %v1084
      %v1173 = vmul.f32 %v1165, %v1085
      %v1174 = vmul.f32 %v1166, %v1086
      %v1175 = vmul.f32 %v1167, %v1087
      %v1176 = vmul.f32 %v1168, %v1088
      %v1178 = vlaneseq
      %v1179 = vshrl.u32 %v1178, 7
      %v1180 = vsub.s32 0, %v1179
      %v1181 = vrot.slane %v1090, %v1180
      %v1183 = vmul.f32 %v1169, %v1181
      %v1184 = vmul.f32 %v1170, %v1181
      %v1185 = vmul.f32 %v1171, %v1181
      %v1186 = vmul.f32 %v1172, %v1181
      %v1187 = vmul.f32 %v1173, %v1181
      %v1188 = vmul.f32 %v1174, %v1181
      %v1189 = vmul.f32 %v1175, %v1181
      %v1190 = vmul.f32 %v1176, %v1181
      %v1191 = vpack.c.bf16 %v1184, %v1183
      %v1192 = vpack.c.bf16 %v1186, %v1185
      %v1193 = vpack.c.bf16 %v1188, %v1187
      %v1194 = vpack.c.bf16 %v1190, %v1189
      %v1199 = vunpack.c.l.b16 %v1191
      %v1200 = vunpack.c.h.b16 %v1191
      %v1201 = vunpack.c.l.b16 %v1192
      %v1202 = vunpack.c.h.b16 %v1192
      %v1203 = vunpack.c.l.b16 %v1193
      %v1204 = vunpack.c.h.b16 %v1193
      %v1205 = vunpack.c.l.b16 %v1194
      %v1206 = vunpack.c.h.b16 %v1194
      %v1207 = vpack.c.b16 %v1199, %v1199
      %v1208 = vpack.c.b16 %v1200, %v1200
      %v1209 = vpack.c.b16 %v1201, %v1201
      %v1210 = vpack.c.b16 %v1202, %v1202
      %v1211 = vpack.c.b16 %v1203, %v1203
      %v1212 = vpack.c.b16 %v1204, %v1204
      %v1213 = vpack.c.b16 %v1205, %v1205
      %v1214 = vpack.c.b16 %v1206, %v1206
      %1223 = vst [vmem:[%s512] sm:$0xf] %v1207
      %1224 = vst [vmem:[%s512 + $0x4] sm:$0xf] %v1208
      %1225 = vst [vmem:[%s512 + $0x8] sm:$0xf] %v1209
      %1226 = vst [vmem:[%s512 + $0xc] sm:$0xf] %v1210
      %1227 = vst [vmem:[%s512 + $0x10] sm:$0xf] %v1211
      %1228 = vst [vmem:[%s512 + $0x14] sm:$0xf] %v1212
      %1229 = vst [vmem:[%s512 + $0x18] sm:$0xf] %v1213
      %1230 = vst [vmem:[%s512 + $0x1c] sm:$0xf] %v1214
      %s1231 = smul.u32 8, %s28
      %p1232 = scmp.lt.s32.totalorder %s27, 3
      %s1233 = scalar_select %p1232, %s27, 3
      %p1234 = scmp.lt.s32.totalorder %s1231, 7
      %s1235 = scalar_select %p1234, %s1231, 7
      %s1236 = smul.addr %s1233, 8
      %s1237 = sadd.s32 %s1235, %s1236
      %s1238 = smul.addr %s1237, 4
      %s1239 = scalar_lea.vmem %s10, %s1238
      %s1240 = smul.u32 8, %s28
      %p1241 = scmp.lt.s32.totalorder %s27, 3
      %s1242 = scalar_select %p1241, %s27, 3
      %p1243 = scmp.lt.s32.totalorder %s1240, 7
      %s1244 = scalar_select %p1243, %s1240, 7
      %s1245 = smul.addr %s1242, 8
      %s1246 = sadd.s32 %s1244, %s1245
      %s1247 = smul.addr %s1246, 4
      %s1248 = scalar_lea.vmem %s11, %s1247
      // Predicated region
      $region61: #{attention_stage_forward.25} parent=59 // pred_check
        %p1249 = pneg %p289
      $region62: #{attention_stage_forward.25} parent=59 // pred_check_branch
        %1251 = sbr.rel (%p1249) target = $region64
      $region63: #{attention_stage_forward.25} parent=59 // pred_region
        %s1252 = smul.u32 8, %s28
      $region64: #{attention_stage_forward.25} parent=59 // pred_fallthru
        _
      // Predicated region
      $region65: #{attention_stage_forward.25} parent=59 // pred_check
        %p1253 = pneg %p317
      $region66: #{attention_stage_forward.25} parent=59 // pred_check_branch
        %1255 = sbr.rel (%p1253) target = $region68
      $region67: #{attention_stage_forward.25} parent=59 // pred_region
        %s1256 = smul.u32 8, %s28
      $region68: #{attention_stage_forward.25} parent=59 // pred_fallthru
        _
    $region60: #{attention_stage_forward.25} parent=5 // pred_fallthru
      _
    %p1257 = scmp.le.s32.totalorder 2, %s18
    // Predicated region
    $region69: #{attention_stage_forward.25} parent=5 // pred_check
      %p1258 = pneg %p1257
    $region70: #{attention_stage_forward.25} parent=5 // pred_check_branch
      %1260 = sbr.rel (%p1258) target = $region72
    $region71: #{attention_stage_forward.25} parent=5 // pred_region
      %s1261 = ssub.s32 %s18, 2
      // Predicated region
      $region73: #{attention_stage_forward.25} parent=71 // pred_check
        %p1262 = pneg %p295
      $region74: #{attention_stage_forward.25} parent=71 // pred_check_branch
        %1264 = sbr.rel (%p1262) target = $region76
      $region75: #{attention_stage_forward.25} parent=71 // pred_region
        %s1265 = smul.u32 8, %s30
        %p1266 = scmp.lt.s32.totalorder %s29, 3
        %s1267 = scalar_select %p1266, %s29, 3
        %p1268 = scmp.lt.s32.totalorder %s1265, 7
        %s1269 = scalar_select %p1268, %s1265, 7
        %s1270 = smul.addr %s1267, 8
        %s1271 = sadd.s32 %s1269, %s1270
        %s1272 = smul.addr %s1271, 4
        %s1273 = scalar_lea.vmem %s10, %s1272
      $region76: #{attention_stage_forward.25} parent=71 // pred_fallthru
        _
      // Predicated region
      $region77: #{attention_stage_forward.25} parent=71 // pred_check
        %p1274 = pneg %p323
      $region78: #{attention_stage_forward.25} parent=71 // pred_check_branch
        %1276 = sbr.rel (%p1274) target = $region80
      $region79: #{attention_stage_forward.25} parent=71 // pred_region
        %s1277 = smul.u32 8, %s30
        %p1278 = scmp.lt.s32.totalorder %s29, 3
        %s1279 = scalar_select %p1278, %s29, 3
        %p1280 = scmp.lt.s32.totalorder %s1277, 7
        %s1281 = scalar_select %p1280, %s1277, 7
        %s1282 = smul.addr %s1279, 8
        %s1283 = sadd.s32 %s1281, %s1282
        %s1284 = smul.addr %s1283, 4
        %s1285 = scalar_lea.vmem %s11, %s1284
      $region80: #{attention_stage_forward.25} parent=71 // pred_fallthru
        _
    $region72: #{attention_stage_forward.25} parent=5 // pred_fallthru
      _
  $region6: #{attention_stage_forward.25} parent=0 // loop_footer
    %s22 = sadd.s32 1, %s18
  $region7: #{attention_stage_forward.25} parent=0 // loop_footer_branch
    %17 = sbr.rel target = $region3
  $region8: #{attention_stage_forward.25} parent=0 // loop_exit
    _

</llo_original>
